<compile_context>
chip_gen: v7x
topology: tpu7x:2x2x1
jax: 0.10.0
libtpu: 0.0.40
codegen_flags: <defaults>
</compile_context>

<pallas_src>
import jax
import jax.numpy as jnp
from jax import lax
from jax.experimental import pallas as pl
from jax.experimental.pallas import tpu as pltpu

NEG_SLOPE = 0.2


def _leaky(x):
    # mul + max (2 VPU ops) instead of cmp + mul + select.
    return jnp.maximum(x, NEG_SLOPE * x)


def _round_up(x, m):
    return (x + m - 1) // m * m


def _make_encoder_kernel(tile_h, h_img, w_img, w_t, c_in, c_mid, c_out):
    """Fused encoder kernel for one (batch, row-tile) grid step.

    x_ref : (1, tile_h+2, w_t, 9*c_in)   bf16  im2col'd input rows (1-row halo)
    w1_ref: (9*c_in, c_mid)              bf16  conv1 taps folded into K
    b1_ref: (1, c_mid)                   f32
    w2_ref: (c_mid, c_mid)               bf16
    b2_ref: (1, c_mid)                   f32
    w3_ref: (3, 3*c_mid, c_out)          bf16  per-dy, dx taps folded into K
    b3_ref: (1, c_out)                   f32
    o_ref : (1, tile_h, w_t, c_out)      f32
    """
    th_h = tile_h + 2                 # h rows needed per tile (1-row halo each side)
    rows1 = th_h * w_t
    rows3 = tile_h * w_t
    k1 = 9 * c_in
    k3 = 3 * c_mid
    need_col_mask = w_t > w_img       # static: only when W was padded

    def kernel(x_ref, w1_ref, b1_ref, w2_ref, b2_ref, w3_ref, b3_ref, o_ref):
        # ---- conv1 (3x3 SAME): ONE matmul, K = 9*Cin ------------------------
        xs = x_ref[0].reshape(rows1, k1)                         # bf16
        h = jnp.dot(xs, w1_ref[...], preferred_element_type=jnp.float32)
        h = _leaky(h + b1_ref[...])                              # (rows1, c_mid) f32

        # ---- conv2 (1x1) ----------------------------------------------------
        h = jnp.dot(h.astype(jnp.bfloat16), w2_ref[...],
                    preferred_element_type=jnp.float32)
        h = _leaky(h + b2_ref[...])
        h = h.reshape(th_h, w_t, c_mid)

        # ---- zero h outside the real image (conv3's SAME padding = zeros of h)
        r0 = pl.program_id(1) * tile_h
        row_g = r0 - 1 + lax.broadcasted_iota(jnp.int32, (th_h, w_t, 1), 0)
        col_g = lax.broadcasted_iota(jnp.int32, (th_h, w_t, 1), 1)
        h = jnp.where((row_g >= 0) & (row_g < h_img), h, 0.0)
        if need_col_mask:                                        # static gate
            h = jnp.where(col_g < w_img, h, 0.0)

        # ---- dx = -1 / +1 neighbours via XLU rolls + edge zeroing -----------
        h_l = pltpu.roll(h, 1, 1)            # h_l[y, x] = h[y, x-1]
        h_r = pltpu.roll(h, w_t - 1, 1)      # h_r[y, x] = h[y, x+1]  (roll by -1)
        if not need_col_mask:                # wrapped col 0 holds real data
            h_l = jnp.where(col_g >= 1, h_l, 0.0)
        h_r = jnp.where(col_g < w_t - 1, h_r, 0.0)
        hcat = jnp.concatenate([h_l.astype(jnp.bfloat16),
                                h.astype(jnp.bfloat16),
                                h_r.astype(jnp.bfloat16)], axis=-1)  # (th_h, w_t, 3*c_mid)

        # ---- conv3 (3x3 SAME): 3 matmuls, K = 3*Cmid ------------------------
        acc = jnp.dot(hcat[0:tile_h].reshape(rows3, k3), w3_ref[0],
                      preferred_element_type=jnp.float32)
        for dy in (1, 2):                    # dy slices are leading-dim (free)
            acc = acc + jnp.dot(hcat[dy:dy + tile_h].reshape(rows3, k3),
                                w3_ref[dy],
                                preferred_element_type=jnp.float32)

        o_ref[0] = (acc + b3_ref[...]).reshape(tile_h, w_t, c_out)

    return kernel


def encoder_forward(x_nhwc, params, *, tile_h=32):
    """x_nhwc: (N, H, W, Cin) float32 -> (N, H, W, Cout) float32."""
    w1, b1, w2, b2, w3, b3 = params   # w1:(3,3,Cin,Cmid) HWIO, w2:(Cmid,Cmid), w3:(3,3,Cmid,Cout)
    N, H, W, Cin = x_nhwc.shape
    Cmid = w1.shape[-1]
    Cout = w3.shape[-1]

    tile_h = max(1, min(tile_h, H))
    T = -(-H // tile_h)                      # row tiles per image
    Hp = T * tile_h                          # rows padded to a tile multiple
    Wt = _round_up(W, 16)                    # sublane-aligned padded width

    # ---- wrapper-side layout glue (plain JAX, cheap: Cin is tiny) -----------
    # im2col of x: fold the 3x3 taps into the channel (contraction) dim.
    xq = jnp.pad(x_nhwc, ((0, 0), (2, Hp - H + 2), (1, Wt - W + 1), (0, 0)))
    taps = [xq[:, dy:dy + Hp + 2, dx:dx + Wt, :]
            for dy in range(3) for dx in range(3)]
    xcol = jnp.concatenate(taps, axis=-1)                        # (N, Hp+2, Wt, 9*Cin)
    # Overlapping row windows (2-row halo) -> clean non-overlapping blocks.
    ridx = (jnp.arange(T) * tile_h)[:, None] + jnp.arange(tile_h + 2)[None, :]
    xwin = xcol[:, ridx].reshape(N * T, tile_h + 2, Wt, 9 * Cin).astype(jnp.bfloat16)

    # bf16 matmul operands (taps folded into K), f32 biases.
    w1p = w1.reshape(9 * Cin, Cmid).astype(jnp.bfloat16)
    w2b = w2.astype(jnp.bfloat16)
    w3p = w3.reshape(3, 3 * Cmid, Cout).astype(jnp.bfloat16)
    b1r = b1.reshape(1, Cmid).astype(jnp.float32)
    b2r = b2.reshape(1, Cmid).astype(jnp.float32)
    b3r = b3.reshape(1, Cout).astype(jnp.float32)

    kernel = _make_encoder_kernel(tile_h, H, W, Wt, Cin, Cmid, Cout)

    out = pl.pallas_call(
        kernel,
        out_shape=jax.ShapeDtypeStruct((N, Hp, Wt, Cout), jnp.float32),
        grid=(N, T),
        in_specs=[
            pl.BlockSpec((1, tile_h + 2, Wt, 9 * Cin), lambda n, t: (n * T + t, 0, 0, 0)),
            pl.BlockSpec((9 * Cin, Cmid), lambda n, t: (0, 0)),
            pl.BlockSpec((1, Cmid), lambda n, t: (0, 0)),
            pl.BlockSpec((Cmid, Cmid), lambda n, t: (0, 0)),
            pl.BlockSpec((1, Cmid), lambda n, t: (0, 0)),
            pl.BlockSpec((3, 3 * Cmid, Cout), lambda n, t: (0, 0, 0)),
            pl.BlockSpec((1, Cout), lambda n, t: (0, 0)),
        ],
        out_specs=pl.BlockSpec((1, tile_h, Wt, Cout), lambda n, t: (n, t, 0, 0)),
        compiler_params=pltpu.CompilerParams(
            dimension_semantics=("parallel", "parallel"),
            vmem_limit_bytes=32 * 1024 * 1024,
        ),
    )(xwin, w1p, b1r, w2b, b2r, w3p, b3r)

    if Hp != H or Wt != W:               # skipped entirely when no spatial padding
        out = out[:, :H, :W, :]
    return out


def ref_forward(x_nhwc, params):
    """Pure-JAX reference mirroring the PyTorch module semantics (NHWC, f32)."""
    w1, b1, w2, b2, w3, b3 = params
    dn = ("NHWC", "HWIO", "NHWC")
    y = lax.conv_general_dilated(x_nhwc, w1, (1, 1), "SAME", dimension_numbers=dn) + b1
    y = _leaky(y)
    w2_hwio = w2.reshape(1, 1, w2.shape[0], w2.shape[1])
    y = lax.conv_general_dilated(y, w2_hwio, (1, 1), "SAME", dimension_numbers=dn) + b2
    y = _leaky(y)
    y = lax.conv_general_dilated(y, w3, (1, 1), "SAME", dimension_numbers=dn) + b3
    return y


def init_params(key, in_ch, out_ch, hidden=128):
    """Deterministic synthetic params with PyTorch Conv2d shape semantics (stored HWIO)."""
    ks = jax.random.split(key, 6)

    def u(k, shape, fan_in):
        bound = 1.0 / jnp.sqrt(jnp.float32(fan_in))
        return jax.random.uniform(k, shape, jnp.float32, -bound, bound)

    w1 = u(ks[0], (3, 3, in_ch, hidden), 9 * in_ch)
    b1 = u(ks[1], (hidden,), 9 * in_ch)
    w2 = u(ks[2], (hidden, hidden), hidden)          # 1x1 conv weight as a matrix
    b2 = u(ks[3], (hidden,), hidden)
    w3 = u(ks[4], (3, 3, hidden, out_ch), 9 * hidden)
    b3 = u(ks[5], (out_ch,), 9 * hidden)
    return (w1, b1, w2, b2, w3, b3)


if __name__ == "__main__":
    key = jax.random.PRNGKey(0)
    kx, kp = jax.random.split(key)

    N, Cin, H, W, Cout = 2, 4, 16, 16, 8
    x_nchw = jax.random.normal(kx, (N, Cin, H, W), jnp.float32)   # PyTorch NCHW input
    x_nhwc = jnp.transpose(x_nchw, (0, 2, 3, 1))                  # kernel layout (NHWC)

    params = init_params(kp, Cin, Cout)

    out = encoder_forward(x_nhwc, params)
    out = jax.block_until_ready(out)
    assert out.shape == (N, H, W, Cout)

    ref = ref_forward(x_nhwc, params)
    if not jnp.allclose(out, ref, rtol=2e-2, atol=2e-2):
        max_err = jnp.max(jnp.abs(out - ref))
        raise AssertionError(f"Pallas output mismatch vs reference (max abs err = {max_err})")

    print("KERNEL_OK")
</pallas_src>

<mosaic_0001>
module attributes {stable_mosaic.version = 11 : i64} {
  func.func @kernel(%arg0: i32, %arg1: i32, %arg2: memref<1x18x16x36xbf16, #tpu.memory_space<vmem>>, %arg3: memref<36x128xbf16, #tpu.memory_space<vmem>>, %arg4: memref<1x128xf32, #tpu.memory_space<vmem>>, %arg5: memref<128x128xbf16, #tpu.memory_space<vmem>>, %arg6: memref<1x128xf32, #tpu.memory_space<vmem>>, %arg7: memref<3x384x8xbf16, #tpu.memory_space<vmem>>, %arg8: memref<1x8xf32, #tpu.memory_space<vmem>>, %arg9: memref<1x16x16x8xf32, #tpu.memory_space<vmem>>) attributes {dimension_semantics = [#tpu.dimension_semantics<parallel>, #tpu.dimension_semantics<parallel>], iteration_bounds = array<i64: 2, 1>, scalar_prefetch = 0 : i64, scratch_operands = 0 : i64, tpu.core_type = #tpu.core_type<tc>, window_params = [{transform_indices = @transform_0, window_bounds = array<i64: 1, 18, 16, 36>}, {pipeline_mode = #tpu.pipeline_mode<synchronous>, transform_indices = @transform_1, window_bounds = array<i64: 36, 128>}, {pipeline_mode = #tpu.pipeline_mode<synchronous>, transform_indices = @transform_2, window_bounds = array<i64: 1, 128>}, {pipeline_mode = #tpu.pipeline_mode<synchronous>, transform_indices = @transform_3, window_bounds = array<i64: 128, 128>}, {pipeline_mode = #tpu.pipeline_mode<synchronous>, transform_indices = @transform_4, window_bounds = array<i64: 1, 128>}, {pipeline_mode = #tpu.pipeline_mode<synchronous>, transform_indices = @transform_5, window_bounds = array<i64: 3, 384, 8>}, {pipeline_mode = #tpu.pipeline_mode<synchronous>, transform_indices = @transform_6, window_bounds = array<i64: 1, 8>}, {transform_indices = @transform_7, window_bounds = array<i64: 1, 16, 16, 8>}]} {
    %c0 = arith.constant 0 : index
    %c0_0 = arith.constant 0 : index
    %c0_1 = arith.constant 0 : index
    %c0_2 = arith.constant 0 : index
    %0 = vector.load %arg2[%c0, %c0_0, %c0_1, %c0_2] : memref<1x18x16x36xbf16, #tpu.memory_space<vmem>>, vector<1x18x16x36xbf16>
    %1 = vector.shape_cast %0 : vector<1x18x16x36xbf16> to vector<18x16x36xbf16>
    %2 = vector.shape_cast %1 : vector<18x16x36xbf16> to vector<288x36xbf16>
    %c0_3 = arith.constant 0 : index
    %c0_4 = arith.constant 0 : index
    %3 = vector.load %arg3[%c0_3, %c0_4] : memref<36x128xbf16, #tpu.memory_space<vmem>>, vector<36x128xbf16>
    %cst = arith.constant dense<0.000000e+00> : vector<288x128xf32>
    %4 = tpu.matmul %2, %3, %cst {dimension_numbers = #tpu.dot_dimension_numbers<[1], [0], [0], [1], [0, 0, 1, 1], [], []>} : vector<288x36xbf16>, vector<36x128xbf16>, vector<288x128xf32> -> vector<288x128xf32>
    %c0_5 = arith.constant 0 : index
    %c0_6 = arith.constant 0 : index
    %5 = vector.load %arg4[%c0_5, %c0_6] : memref<1x128xf32, #tpu.memory_space<vmem>>, vector<1x128xf32>
    %6 = vector.broadcast %5 : vector<1x128xf32> to vector<288x128xf32>
    %7 = arith.addf %4, %6 : vector<288x128xf32>
    %cst_7 = arith.constant 2.000000e-01 : f32
    %8 = vector.broadcast %cst_7 : f32 to vector<288x128xf32>
    %9 = arith.mulf %8, %7 : vector<288x128xf32>
    %10 = arith.maximumf %7, %9 : vector<288x128xf32>
    %11 = arith.truncf %10 : vector<288x128xf32> to vector<288x128xbf16>
    %c0_8 = arith.constant 0 : index
    %c0_9 = arith.constant 0 : index
    %12 = vector.load %arg5[%c0_8, %c0_9] : memref<128x128xbf16, #tpu.memory_space<vmem>>, vector<128x128xbf16>
    %cst_10 = arith.constant dense<0.000000e+00> : vector<288x128xf32>
    %13 = tpu.matmul %11, %12, %cst_10 {dimension_numbers = #tpu.dot_dimension_numbers<[1], [0], [0], [1], [0, 0, 1, 1], [], []>} : vector<288x128xbf16>, vector<128x128xbf16>, vector<288x128xf32> -> vector<288x128xf32>
    %c0_11 = arith.constant 0 : index
    %c0_12 = arith.constant 0 : index
    %14 = vector.load %arg6[%c0_11, %c0_12] : memref<1x128xf32, #tpu.memory_space<vmem>>, vector<1x128xf32>
    %15 = vector.broadcast %14 : vector<1x128xf32> to vector<288x128xf32>
    %16 = arith.addf %13, %15 : vector<288x128xf32>
    %cst_13 = arith.constant 2.000000e-01 : f32
    %17 = vector.broadcast %cst_13 : f32 to vector<288x128xf32>
    %18 = arith.mulf %17, %16 : vector<288x128xf32>
    %19 = arith.maximumf %16, %18 : vector<288x128xf32>
    %20 = vector.shape_cast %19 : vector<288x128xf32> to vector<18x16x128xf32>
    %c16_i32 = arith.constant 16 : i32
    %21 = arith.muli %arg1, %c16_i32 : i32
    %c1_i32 = arith.constant 1 : i32
    %22 = arith.subi %21, %c1_i32 : i32
    %23 = tpu.iota {dimensions = array<i32: 0>} : vector<18x16x1xi32>
    %24 = vector.broadcast %22 : i32 to vector<18x16x1xi32>
    %25 = arith.addi %24, %23 : vector<18x16x1xi32>
    %26 = tpu.iota {dimensions = array<i32: 1>} : vector<18x16x1xi32>
    %c0_i32 = arith.constant 0 : i32
    %27 = vector.broadcast %c0_i32 : i32 to vector<18x16x1xi32>
    %28 = arith.cmpi sge, %25, %27 : vector<18x16x1xi32>
    %c16_i32_14 = arith.constant 16 : i32
    %29 = vector.broadcast %c16_i32_14 : i32 to vector<18x16x1xi32>
    %30 = arith.cmpi slt, %25, %29 : vector<18x16x1xi32>
    %31 = arith.andi %28, %30 : vector<18x16x1xi1>
    %cst_15 = arith.constant 0.000000e+00 : f32
    %32 = vector.shape_cast %31 : vector<18x16x1xi1> to vector<18x16x1xi1>
    %33 = vector.broadcast %32 : vector<18x16x1xi1> to vector<18x16x128xi1>
    %34 = vector.broadcast %cst_15 : f32 to vector<18x16x128xf32>
    %35 = arith.select %33, %20, %34 : vector<18x16x128xi1>, vector<18x16x128xf32>
    %c1_i32_16 = arith.constant 1 : i32
    %36 = tpu.dynamic_rotate %35 by %c1_i32_16 dim 1 : vector<18x16x128xf32>, i32 -> vector<18x16x128xf32>
    %c15_i32 = arith.constant 15 : i32
    %37 = tpu.dynamic_rotate %35 by %c15_i32 dim 1 : vector<18x16x128xf32>, i32 -> vector<18x16x128xf32>
    %c1_i32_17 = arith.constant 1 : i32
    %38 = vector.broadcast %c1_i32_17 : i32 to vector<18x16x1xi32>
    %39 = arith.cmpi sge, %26, %38 : vector<18x16x1xi32>
    %cst_18 = arith.constant 0.000000e+00 : f32
    %40 = vector.shape_cast %39 : vector<18x16x1xi1> to vector<18x16x1xi1>
    %41 = vector.broadcast %40 : vector<18x16x1xi1> to vector<18x16x128xi1>
    %42 = vector.broadcast %cst_18 : f32 to vector<18x16x128xf32>
    %43 = arith.select %41, %36, %42 : vector<18x16x128xi1>, vector<18x16x128xf32>
    %c15_i32_19 = arith.constant 15 : i32
    %44 = vector.broadcast %c15_i32_19 : i32 to vector<18x16x1xi32>
    %45 = arith.cmpi slt, %26, %44 : vector<18x16x1xi32>
    %cst_20 = arith.constant 0.000000e+00 : f32
    %46 = vector.shape_cast %45 : vector<18x16x1xi1> to vector<18x16x1xi1>
    %47 = vector.broadcast %46 : vector<18x16x1xi1> to vector<18x16x128xi1>
    %48 = vector.broadcast %cst_20 : f32 to vector<18x16x128xf32>
    %49 = arith.select %47, %37, %48 : vector<18x16x128xi1>, vector<18x16x128xf32>
    %50 = arith.truncf %43 : vector<18x16x128xf32> to vector<18x16x128xbf16>
    %51 = arith.truncf %35 : vector<18x16x128xf32> to vector<18x16x128xbf16>
    %52 = arith.truncf %49 : vector<18x16x128xf32> to vector<18x16x128xbf16>
    %53 = tpu.concatenate %50, %51, %52 in 2 : vector<18x16x128xbf16>, vector<18x16x128xbf16>, vector<18x16x128xbf16> -> vector<18x16x384xbf16>
    %54 = vector.extract_strided_slice %53 {offsets = [0, 0, 0], sizes = [16, 16, 384], strides = [1, 1, 1]} : vector<18x16x384xbf16> to vector<16x16x384xbf16>
    %55 = vector.shape_cast %54 : vector<16x16x384xbf16> to vector<256x384xbf16>
    %c0_21 = arith.constant 0 : index
    %c0_22 = arith.constant 0 : index
    %c0_23 = arith.constant 0 : index
    %56 = vector.load %arg7[%c0_21, %c0_22, %c0_23] : memref<3x384x8xbf16, #tpu.memory_space<vmem>>, vector<1x384x8xbf16>
    %57 = vector.shape_cast %56 : vector<1x384x8xbf16> to vector<384x8xbf16>
    %cst_24 = arith.constant dense<0.000000e+00> : vector<256x8xf32>
    %58 = tpu.matmul %55, %57, %cst_24 {dimension_numbers = #tpu.dot_dimension_numbers<[1], [0], [0], [1], [0, 0, 1, 1], [], []>} : vector<256x384xbf16>, vector<384x8xbf16>, vector<256x8xf32> -> vector<256x8xf32>
    %59 = vector.extract_strided_slice %53 {offsets = [1, 0, 0], sizes = [16, 16, 384], strides = [1, 1, 1]} : vector<18x16x384xbf16> to vector<16x16x384xbf16>
    %60 = vector.shape_cast %59 : vector<16x16x384xbf16> to vector<256x384xbf16>
    %c1 = arith.constant 1 : index
    %c0_25 = arith.constant 0 : index
    %c0_26 = arith.constant 0 : index
    %61 = vector.load %arg7[%c1, %c0_25, %c0_26] : memref<3x384x8xbf16, #tpu.memory_space<vmem>>, vector<1x384x8xbf16>
    %62 = vector.shape_cast %61 : vector<1x384x8xbf16> to vector<384x8xbf16>
    %cst_27 = arith.constant dense<0.000000e+00> : vector<256x8xf32>
    %63 = tpu.matmul %60, %62, %cst_27 {dimension_numbers = #tpu.dot_dimension_numbers<[1], [0], [0], [1], [0, 0, 1, 1], [], []>} : vector<256x384xbf16>, vector<384x8xbf16>, vector<256x8xf32> -> vector<256x8xf32>
    %64 = arith.addf %58, %63 : vector<256x8xf32>
    %65 = vector.extract_strided_slice %53 {offsets = [2, 0, 0], sizes = [16, 16, 384], strides = [1, 1, 1]} : vector<18x16x384xbf16> to vector<16x16x384xbf16>
    %66 = vector.shape_cast %65 : vector<16x16x384xbf16> to vector<256x384xbf16>
    %c2 = arith.constant 2 : index
    %c0_28 = arith.constant 0 : index
    %c0_29 = arith.constant 0 : index
    %67 = vector.load %arg7[%c2, %c0_28, %c0_29] : memref<3x384x8xbf16, #tpu.memory_space<vmem>>, vector<1x384x8xbf16>
    %68 = vector.shape_cast %67 : vector<1x384x8xbf16> to vector<384x8xbf16>
    %cst_30 = arith.constant dense<0.000000e+00> : vector<256x8xf32>
    %69 = tpu.matmul %66, %68, %cst_30 {dimension_numbers = #tpu.dot_dimension_numbers<[1], [0], [0], [1], [0, 0, 1, 1], [], []>} : vector<256x384xbf16>, vector<384x8xbf16>, vector<256x8xf32> -> vector<256x8xf32>
    %70 = arith.addf %64, %69 : vector<256x8xf32>
    %c0_31 = arith.constant 0 : index
    %c0_32 = arith.constant 0 : index
    %71 = vector.load %arg8[%c0_31, %c0_32] : memref<1x8xf32, #tpu.memory_space<vmem>>, vector<1x8xf32>
    %72 = vector.broadcast %71 : vector<1x8xf32> to vector<256x8xf32>
    %73 = arith.addf %70, %72 : vector<256x8xf32>
    %74 = vector.shape_cast %73 : vector<256x8xf32> to vector<16x16x8xf32>
    %c0_33 = arith.constant 0 : index
    %c0_34 = arith.constant 0 : index
    %c0_35 = arith.constant 0 : index
    %c0_36 = arith.constant 0 : index
    %75 = vector.load %arg9[%c0_33, %c0_34, %c0_35, %c0_36] : memref<1x16x16x8xf32, #tpu.memory_space<vmem>>, vector<1x16x16x8xf32>
    %76 = vector.shape_cast %75 : vector<1x16x16x8xf32> to vector<16x16x8xf32>
    %77 = vector.shape_cast %74 : vector<16x16x8xf32> to vector<1x16x16x8xf32>
    tpu.vector_store %arg9[%c0_33, %c0_34, %c0_35, %c0_36], %77 {strides = array<i32>} : memref<1x16x16x8xf32, #tpu.memory_space<vmem>>, vector<1x16x16x8xf32>,
    return
  }
  func.func @transform_0(%arg0: i32, %arg1: i32) -> (i32, i32, i32, i32) {
    %c1_i32 = arith.constant 1 : i32
    %0 = arith.muli %arg0, %c1_i32 : i32
    %1 = arith.addi %0, %arg1 : i32
    %c0_i32 = arith.constant 0 : i32
    %c0_i32_0 = arith.constant 0 : i32
    %c0_i32_1 = arith.constant 0 : i32
    %c0_i32_2 = arith.constant 0 : i32
    return %1, %c0_i32, %c0_i32_0, %c0_i32_1 : i32, i32, i32, i32
  }
  func.func @transform_1(%arg0: i32, %arg1: i32) -> (i32, i32) {
    %c0_i32 = arith.constant 0 : i32
    %c0_i32_0 = arith.constant 0 : i32
    %c0_i32_1 = arith.constant 0 : i32
    return %c0_i32, %c0_i32_0 : i32, i32
  }
  func.func @transform_2(%arg0: i32, %arg1: i32) -> (i32, i32) {
    %c0_i32 = arith.constant 0 : i32
    %c0_i32_0 = arith.constant 0 : i32
    %c0_i32_1 = arith.constant 0 : i32
    return %c0_i32, %c0_i32_0 : i32, i32
  }
  func.func @transform_3(%arg0: i32, %arg1: i32) -> (i32, i32) {
    %c0_i32 = arith.constant 0 : i32
    %c0_i32_0 = arith.constant 0 : i32
    %c0_i32_1 = arith.constant 0 : i32
    return %c0_i32, %c0_i32_0 : i32, i32
  }
  func.func @transform_4(%arg0: i32, %arg1: i32) -> (i32, i32) {
    %c0_i32 = arith.constant 0 : i32
    %c0_i32_0 = arith.constant 0 : i32
    %c0_i32_1 = arith.constant 0 : i32
    return %c0_i32, %c0_i32_0 : i32, i32
  }
  func.func @transform_5(%arg0: i32, %arg1: i32) -> (i32, i32, i32) {
    %c0_i32 = arith.constant 0 : i32
    %c0_i32_0 = arith.constant 0 : i32
    %c0_i32_1 = arith.constant 0 : i32
    %c0_i32_2 = arith.constant 0 : i32
    return %c0_i32, %c0_i32_0, %c0_i32_1 : i32, i32, i32
  }
  func.func @transform_6(%arg0: i32, %arg1: i32) -> (i32, i32) {
    %c0_i32 = arith.constant 0 : i32
    %c0_i32_0 = arith.constant 0 : i32
    %c0_i32_1 = arith.constant 0 : i32
    return %c0_i32, %c0_i32_0 : i32, i32
  }
  func.func @transform_7(%arg0: i32, %arg1: i32) -> (i32, i32, i32, i32) {
    %c0_i32 = arith.constant 0 : i32
    %c0_i32_0 = arith.constant 0 : i32
    %c0_i32_1 = arith.constant 0 : i32
    return %arg0, %arg1, %c0_i32, %c0_i32_0 : i32, i32, i32, i32
  }
}

</mosaic_0001>

<llo_original>
// kernel: tpu_custom_call.1
$region0: #{tpu_custom_call.1}
  #allocation0 [shape = 'u32[]', space=smem, size = 0x4, offset = 0x4, fixed_abs, tag = 'smem constant byte address 0x4 - core index']
  #allocation1 [shape = 'u32[144,128]{1,0:T(1,128)}', space=vmem, size = 0x12000, scoped, tag = 'internal scratch']
  %s0 = inlined_call_operand.vmem [shape: bf16[2,18,16,36], index: 0, kind: input, shape index: {}]
  %s1 = inlined_call_operand.vmem [shape: bf16[36,128], index: 1, kind: input, shape index: {}]
  %s2 = inlined_call_operand.vmem [shape: f32[1,128], index: 2, kind: input, shape index: {}]
  %s3 = inlined_call_operand.vmem [shape: bf16[128,128], index: 3, kind: input, shape index: {}]
  %s4 = inlined_call_operand.vmem [shape: f32[1,128], index: 4, kind: input, shape index: {}]
  %s5 = inlined_call_operand.vmem [shape: bf16[3,384,8], index: 5, kind: input, shape index: {}]
  %s6 = inlined_call_operand.vmem [shape: f32[1,8], index: 6, kind: input, shape index: {}]
  %s7 = inlined_call_operand.vmem [shape: f32[2,16,16,8], index: 7, kind: output, shape index: {}]
  %s8 = sld [smem:[#allocation0]]
  $region61: #{tpu_custom_call.1} parent=0
    _
  %s10 = ssub.s32 1, %s8
  %s11 = scalar_select 0, %s10, %s8
  loop: start=0, step=1, limit=4
  $region2: #{tpu_custom_call.1} parent=0 // loop_pre_header
    _
  $region3: #{tpu_custom_call.1} parent=0 // loop_header
    %s13 = sphi 0, %s17
    %p14 = scmp.ge.s32.totalorder %s13, 4
    %s20 = sphi 0, %s32
    %s21 = sphi 0, %s28
    %s22 = sphi 0, %s20
    %s23 = sphi 0, %s21
    %s24 = sphi 0, %s22
    %s25 = sphi 0, %s23
    %s37 = sphi 0, %s39
    %s40 = sphi 0, %s37
    %s41 = sphi 0, %s40
    %s57 = sphi 0, %s41
    %s61 = sphi 0, %s61
    %s63 = sphi 0, %s61
    %s64 = sphi 0, %s63
    %s78 = sphi 0, %s64
    %s82 = sphi 0, %s82
    %s84 = sphi 0, %s82
    %s85 = sphi 0, %s84
    %s99 = sphi 0, %s85
    %s103 = sphi 0, %s103
    %s105 = sphi 0, %s103
    %s106 = sphi 0, %s105
    %s120 = sphi 0, %s106
    %s124 = sphi 0, %s124
    %s126 = sphi 0, %s124
    %s127 = sphi 0, %s126
    %s141 = sphi 0, %s127
    %s145 = sphi 0, %s145
    %s147 = sphi 0, %s145
    %s148 = sphi 0, %s147
    %s162 = sphi 0, %s148
    %s166 = sphi 0, %s166
    %s168 = sphi 0, %s166
    %s169 = sphi 0, %s168
    %s183 = sphi 0, %s169
    %s191 = sphi 0, %s193
    %s194 = sphi 0, %s191
    %s195 = sphi 0, %s194
    %s211 = sphi 0, %s195
  $region4: #{tpu_custom_call.1} parent=0 // loop_header_branch
    %16 = sbr.rel (%p14) target = $region8
  $region5: #{tpu_custom_call.1} parent=0 // loop_body
    %s18 = ssub.s32 %s13, 1
    %s19 = ssub.s32 %s13, 2
    %s26 = sadd.s32 1, %s21
    %p27 = scmp.ge.s32.totalorder %s26, 1
    %s28 = scalar_select %p27, 0, %s26
    %s29 = sadd.s32 1, %s20
    %s30 = scalar_select %p27, %s29, %s20
    %p31 = scmp.ge.s32.totalorder %s30, 2
    %s32 = scalar_select %p31, 0, %s30
    %s33 = sadd.s32 %s20, %s21
    %s34 = sadd.s32 %s32, %s28
    %s35 = ssub.s32 %s33, %s34
    %p36 = scmp.eq.s32.totalorder %s35, 0
    %s38 = sadd.s32 %s37, 1
    %s39 = scalar_select %p36, %s37, %s38
    %p42 = pneg %p36
    %p43 = scmp.eq.s32.totalorder %s13, 1
    %p44 = por %p42, %p43
    %p45 = scmp.ne.s32.totalorder %s37, %s40
    %p46 = scmp.eq.s32.totalorder %s13, 0
    %p47 = por %p45, %p46
    %p48 = scmp.ne.s32.totalorder %s37, %s40
    %p49 = scmp.eq.s32.totalorder %s18, 1
    %p50 = por %p48, %p49
    %p51 = scmp.ne.s32.totalorder %s40, %s41
    %p52 = scmp.eq.s32.totalorder %s18, 0
    %p53 = por %p51, %p52
    %p54 = scmp.ne.s32.totalorder %s40, %s41
    %p55 = scmp.eq.s32.totalorder %s19, 1
    %p56 = por %p54, %p55
    %p58 = scmp.ne.s32.totalorder %s41, %s57
    %p59 = scmp.eq.s32.totalorder %s19, 0
    %p60 = por %p58, %p59
    %s62 = sadd.s32 %s61, 1
    %p65 = scmp.eq.s32.totalorder %s13, 1
    %p66 = scmp.ne.s32.totalorder %s61, %s63
    %p67 = scmp.eq.s32.totalorder %s13, 0
    %p68 = por %p66, %p67
    %p69 = scmp.ne.s32.totalorder %s61, %s63
    %p70 = scmp.eq.s32.totalorder %s18, 1
    %p71 = por %p69, %p70
    %p72 = scmp.ne.s32.totalorder %s63, %s64
    %p73 = scmp.eq.s32.totalorder %s18, 0
    %p74 = por %p72, %p73
    %p75 = scmp.ne.s32.totalorder %s63, %s64
    %p76 = scmp.eq.s32.totalorder %s19, 1
    %p77 = por %p75, %p76
    %p79 = scmp.ne.s32.totalorder %s64, %s78
    %p80 = scmp.eq.s32.totalorder %s19, 0
    %p81 = por %p79, %p80
    %s83 = sadd.s32 %s82, 1
    %p86 = scmp.eq.s32.totalorder %s13, 1
    %p87 = scmp.ne.s32.totalorder %s82, %s84
    %p88 = scmp.eq.s32.totalorder %s13, 0
    %p89 = por %p87, %p88
    %p90 = scmp.ne.s32.totalorder %s82, %s84
    %p91 = scmp.eq.s32.totalorder %s18, 1
    %p92 = por %p90, %p91
    %p93 = scmp.ne.s32.totalorder %s84, %s85
    %p94 = scmp.eq.s32.totalorder %s18, 0
    %p95 = por %p93, %p94
    %p96 = scmp.ne.s32.totalorder %s84, %s85
    %p97 = scmp.eq.s32.totalorder %s19, 1
    %p98 = por %p96, %p97
    %p100 = scmp.ne.s32.totalorder %s85, %s99
    %p101 = scmp.eq.s32.totalorder %s19, 0
    %p102 = por %p100, %p101
    %s104 = sadd.s32 %s103, 1
    %p107 = scmp.eq.s32.totalorder %s13, 1
    %p108 = scmp.ne.s32.totalorder %s103, %s105
    %p109 = scmp.eq.s32.totalorder %s13, 0
    %p110 = por %p108, %p109
    %p111 = scmp.ne.s32.totalorder %s103, %s105
    %p112 = scmp.eq.s32.totalorder %s18, 1
    %p113 = por %p111, %p112
    %p114 = scmp.ne.s32.totalorder %s105, %s106
    %p115 = scmp.eq.s32.totalorder %s18, 0
    %p116 = por %p114, %p115
    %p117 = scmp.ne.s32.totalorder %s105, %s106
    %p118 = scmp.eq.s32.totalorder %s19, 1
    %p119 = por %p117, %p118
    %p121 = scmp.ne.s32.totalorder %s106, %s120
    %p122 = scmp.eq.s32.totalorder %s19, 0
    %p123 = por %p121, %p122
    %s125 = sadd.s32 %s124, 1
    %p128 = scmp.eq.s32.totalorder %s13, 1
    %p129 = scmp.ne.s32.totalorder %s124, %s126
    %p130 = scmp.eq.s32.totalorder %s13, 0
    %p131 = por %p129, %p130
    %p132 = scmp.ne.s32.totalorder %s124, %s126
    %p133 = scmp.eq.s32.totalorder %s18, 1
    %p134 = por %p132, %p133
    %p135 = scmp.ne.s32.totalorder %s126, %s127
    %p136 = scmp.eq.s32.totalorder %s18, 0
    %p137 = por %p135, %p136
    %p138 = scmp.ne.s32.totalorder %s126, %s127
    %p139 = scmp.eq.s32.totalorder %s19, 1
    %p140 = por %p138, %p139
    %p142 = scmp.ne.s32.totalorder %s127, %s141
    %p143 = scmp.eq.s32.totalorder %s19, 0
    %p144 = por %p142, %p143
    %s146 = sadd.s32 %s145, 1
    %p149 = scmp.eq.s32.totalorder %s13, 1
    %p150 = scmp.ne.s32.totalorder %s145, %s147
    %p151 = scmp.eq.s32.totalorder %s13, 0
    %p152 = por %p150, %p151
    %p153 = scmp.ne.s32.totalorder %s145, %s147
    %p154 = scmp.eq.s32.totalorder %s18, 1
    %p155 = por %p153, %p154
    %p156 = scmp.ne.s32.totalorder %s147, %s148
    %p157 = scmp.eq.s32.totalorder %s18, 0
    %p158 = por %p156, %p157
    %p159 = scmp.ne.s32.totalorder %s147, %s148
    %p160 = scmp.eq.s32.totalorder %s19, 1
    %p161 = por %p159, %p160
    %p163 = scmp.ne.s32.totalorder %s148, %s162
    %p164 = scmp.eq.s32.totalorder %s19, 0
    %p165 = por %p163, %p164
    %s167 = sadd.s32 %s166, 1
    %p170 = scmp.eq.s32.totalorder %s13, 1
    %p171 = scmp.ne.s32.totalorder %s166, %s168
    %p172 = scmp.eq.s32.totalorder %s13, 0
    %p173 = por %p171, %p172
    %p174 = scmp.ne.s32.totalorder %s166, %s168
    %p175 = scmp.eq.s32.totalorder %s18, 1
    %p176 = por %p174, %p175
    %p177 = scmp.ne.s32.totalorder %s168, %s169
    %p178 = scmp.eq.s32.totalorder %s18, 0
    %p179 = por %p177, %p178
    %p180 = scmp.ne.s32.totalorder %s168, %s169
    %p181 = scmp.eq.s32.totalorder %s19, 1
    %p182 = por %p180, %p181
    %p184 = scmp.ne.s32.totalorder %s169, %s183
    %p185 = scmp.eq.s32.totalorder %s19, 0
    %p186 = por %p184, %p185
    %s187 = ssub.s32 %s20, %s32
    %s188 = ssub.s32 %s21, %s28
    %s189 = sor.u32 %s187, %s188
    %p190 = scmp.eq.s32.totalorder %s189, 0
    %s192 = sadd.s32 %s191, 1
    %s193 = scalar_select %p190, %s191, %s192
    %p196 = pneg %p190
    %p197 = scmp.eq.s32.totalorder %s13, 1
    %p198 = por %p196, %p197
    %p199 = scmp.ne.s32.totalorder %s191, %s194
    %p200 = scmp.eq.s32.totalorder %s13, 0
    %p201 = por %p199, %p200
    %p202 = scmp.ne.s32.totalorder %s191, %s194
    %p203 = scmp.eq.s32.totalorder %s18, 1
    %p204 = por %p202, %p203
    %p205 = scmp.ne.s32.totalorder %s194, %s195
    %p206 = scmp.eq.s32.totalorder %s18, 0
    %p207 = por %p205, %p206
    %p208 = scmp.ne.s32.totalorder %s194, %s195
    %p209 = scmp.eq.s32.totalorder %s19, 1
    %p210 = por %p208, %p209
    %p212 = scmp.ne.s32.totalorder %s195, %s211
    %p213 = scmp.eq.s32.totalorder %s19, 0
    %p214 = por %p212, %p213
    %p215 = scmp.le.s32.totalorder 1, %s13
    %p216 = scmp.lt.s32.totalorder %s13, 3
    %p217 = pnand %p215, %p216
    %p218 = pneg %p217
    // Predicated region
    $region9: #{tpu_custom_call.1} parent=5 // pred_check
      _
    $region10: #{tpu_custom_call.1} parent=5 // pred_check_branch
      %220 = sbr.rel (%p217) target = $region12
    $region11: #{tpu_custom_call.1} parent=5 // pred_region
      %s221 = ssub.s32 %s13, 1
      // Predicated region
      $region13: #{tpu_custom_call.1} parent=11 // pred_check
        %p222 = pneg %p74
      $region14: #{tpu_custom_call.1} parent=11 // pred_check_branch
        %224 = sbr.rel (%p222) target = $region16
      $region15: #{tpu_custom_call.1} parent=11 // pred_region
        _
      $region16: #{tpu_custom_call.1} parent=11 // pred_fallthru
        _
      // Predicated region
      $region17: #{tpu_custom_call.1} parent=11 // pred_check
        %p225 = pneg %p95
      $region18: #{tpu_custom_call.1} parent=11 // pred_check_branch
        %227 = sbr.rel (%p225) target = $region20
      $region19: #{tpu_custom_call.1} parent=11 // pred_region
        _
      $region20: #{tpu_custom_call.1} parent=11 // pred_fallthru
        _
      // Predicated region
      $region21: #{tpu_custom_call.1} parent=11 // pred_check
        %p228 = pneg %p116
      $region22: #{tpu_custom_call.1} parent=11 // pred_check_branch
        %230 = sbr.rel (%p228) target = $region24
      $region23: #{tpu_custom_call.1} parent=11 // pred_region
        _
      $region24: #{tpu_custom_call.1} parent=11 // pred_fallthru
        _
      // Predicated region
      $region25: #{tpu_custom_call.1} parent=11 // pred_check
        %p231 = pneg %p137
      $region26: #{tpu_custom_call.1} parent=11 // pred_check_branch
        %233 = sbr.rel (%p231) target = $region28
      $region27: #{tpu_custom_call.1} parent=11 // pred_region
        _
      $region28: #{tpu_custom_call.1} parent=11 // pred_fallthru
        _
      // Predicated region
      $region29: #{tpu_custom_call.1} parent=11 // pred_check
        %p234 = pneg %p158
      $region30: #{tpu_custom_call.1} parent=11 // pred_check_branch
        %236 = sbr.rel (%p234) target = $region32
      $region31: #{tpu_custom_call.1} parent=11 // pred_region
        _
      $region32: #{tpu_custom_call.1} parent=11 // pred_fallthru
        _
      // Predicated region
      $region33: #{tpu_custom_call.1} parent=11 // pred_check
        %p237 = pneg %p179
      $region34: #{tpu_custom_call.1} parent=11 // pred_check_branch
        %239 = sbr.rel (%p237) target = $region36
      $region35: #{tpu_custom_call.1} parent=11 // pred_region
        _
      $region36: #{tpu_custom_call.1} parent=11 // pred_fallthru
        _
    $region12: #{tpu_custom_call.1} parent=5 // pred_fallthru
      _
    %p240 = scmp.lt.s32.totalorder %s13, 2
    // Predicated region
    $region37: #{tpu_custom_call.1} parent=5 // pred_check
      %p241 = pneg %p240
    $region38: #{tpu_custom_call.1} parent=5 // pred_check_branch
      %243 = sbr.rel (%p241) target = $region40
    $region39: #{tpu_custom_call.1} parent=5 // pred_region
      // Predicated region
      $region41: #{tpu_custom_call.1} parent=39 // pred_check
        %p244 = pneg %p47
      $region42: #{tpu_custom_call.1} parent=39 // pred_check_branch
        %246 = sbr.rel (%p244) target = $region44
      $region43: #{tpu_custom_call.1} parent=39 // pred_region
        %s247 = sadd.s32 %s20, %s21
        %p248 = scmp.lt.s32.totalorder %s247, 1
        %s249 = scalar_select %p248, %s247, 1
        %s250 = smul.addr %s249, 36
        %s251 = smul.addr %s250, 4
        %s252 = scalar_lea.vmem %s0, %s251
        %s253 = sadd.s32 %s20, %s21
      $region44: #{tpu_custom_call.1} parent=39 // pred_fallthru
        _
    $region40: #{tpu_custom_call.1} parent=5 // pred_fallthru
      _
    %p254 = scmp.le.s32.totalorder 1, %s13
    %p255 = scmp.lt.s32.totalorder %s13, 3
    %p256 = pnand %p254, %p255
    %p257 = pneg %p256
    // Predicated region
    $region45: #{tpu_custom_call.1} parent=5 // pred_check
      _
    $region46: #{tpu_custom_call.1} parent=5 // pred_check_branch
      %259 = sbr.rel (%p256) target = $region48
    $region47: #{tpu_custom_call.1} parent=5 // pred_region
      %s260 = ssub.s32 %s13, 1
      %s261 = sadd.s32 %s22, %s23
      %p262 = scmp.lt.s32.totalorder %s261, 1
      %s263 = scalar_select %p262, %s261, 1
      %s264 = smul.addr %s263, 36
      %s265 = smul.addr %s264, 4
      %s266 = scalar_lea.vmem %s0, %s265
      %p267 = pneg %p53
      %p268 = pneg %p50
      %p269 = pneg %p74
      %p270 = pneg %p71
      %p271 = pneg %p95
      %p272 = pneg %p92
      %p273 = pneg %p116
      %p274 = pneg %p113
      %p275 = pneg %p137
      %p276 = pneg %p134
      %p277 = pneg %p158
      %p278 = pneg %p155
      %p279 = pneg %p179
      %p280 = pneg %p176
      %p281 = pneg %p207
      %p282 = pneg %p204
      %s283 = smul.u32 16, %s23
      %p284 = scmp.lt.s32.totalorder %s22, 1
      %s285 = scalar_select %p284, %s22, 1
      %p286 = scmp.lt.s32.totalorder %s283, 15
      %s287 = scalar_select %p286, %s283, 15
      %s288 = smul.addr %s287, 2
      %s289 = smul.addr %s285, 32
      %s290 = sadd.s32 %s288, %s289
      %s291 = smul.addr %s290, 8
      %s292 = scalar_lea.vmem %s7, %s291
      %s293 = sadd.s32 %s22, %s23
      %p294 = scmp.lt.s32.totalorder %s293, 1
      %s295 = scalar_select %p294, %s293, 1
      %s296 = smul.addr %s295, 36
      %s297 = smul.addr %s296, 4
      %s298 = scalar_lea.vmem %s0, %s297
      %s299 = sadd.s32 %s22, %s23
      %s300 = smul.u32 16, %s23
      %p301 = scmp.lt.s32.totalorder %s22, 1
      %s302 = scalar_select %p301, %s22, 1
      %p303 = scmp.lt.s32.totalorder %s300, 15
      %s304 = scalar_select %p303, %s300, 15
      %s305 = smul.addr %s304, 2
      %s306 = smul.addr %s302, 32
      %s307 = sadd.s32 %s305, %s306
      %s308 = smul.addr %s307, 8
      %s309 = scalar_lea.vmem %s7, %s308
      %s310 = smul.u32 16, %s23
      %v312 = vld [vmem:[%s298] sm:$0xf]
      %v313 = vld [vmem:[%s298 + $0x4] sm:$0xf]
      %v314 = vld [vmem:[%s298 + $0x8] sm:$0xf]
      %v315 = vld [vmem:[%s298 + $0xc] sm:$0xf]
      %v316 = vld [vmem:[%s298 + $0x10] sm:$0xf]
      %v317 = vld [vmem:[%s298 + $0x14] sm:$0xf]
      %v318 = vld [vmem:[%s298 + $0x18] sm:$0xf]
      %v319 = vld [vmem:[%s298 + $0x1c] sm:$0xf]
      %v320 = vld [vmem:[%s298 + $0x20] sm:$0xf]
      %v321 = vld [vmem:[%s298 + $0x24] sm:$0xf]
      %v322 = vld [vmem:[%s298 + $0x28] sm:$0xf]
      %v323 = vld [vmem:[%s298 + $0x2c] sm:$0xf]
      %v324 = vld [vmem:[%s298 + $0x30] sm:$0xf]
      %v325 = vld [vmem:[%s298 + $0x34] sm:$0xf]
      %v326 = vld [vmem:[%s298 + $0x38] sm:$0xf]
      %v327 = vld [vmem:[%s298 + $0x3c] sm:$0xf]
      %v328 = vld [vmem:[%s298 + $0x40] sm:$0xf]
      %v329 = vld [vmem:[%s298 + $0x44] sm:$0xf]
      %v330 = vld [vmem:[%s298 + $0x48] sm:$0xf]
      %v331 = vld [vmem:[%s298 + $0x4c] sm:$0xf]
      %v332 = vld [vmem:[%s298 + $0x50] sm:$0xf]
      %v333 = vld [vmem:[%s298 + $0x54] sm:$0xf]
      %v334 = vld [vmem:[%s298 + $0x58] sm:$0xf]
      %v335 = vld [vmem:[%s298 + $0x5c] sm:$0xf]
      %v336 = vld [vmem:[%s298 + $0x60] sm:$0xf]
      %v337 = vld [vmem:[%s298 + $0x64] sm:$0xf]
      %v338 = vld [vmem:[%s298 + $0x68] sm:$0xf]
      %v339 = vld [vmem:[%s298 + $0x6c] sm:$0xf]
      %v340 = vld [vmem:[%s298 + $0x70] sm:$0xf]
      %v341 = vld [vmem:[%s298 + $0x74] sm:$0xf]
      %v342 = vld [vmem:[%s298 + $0x78] sm:$0xf]
      %v343 = vld [vmem:[%s298 + $0x7c] sm:$0xf]
      %v344 = vld [vmem:[%s298 + $0x80] sm:$0xf]
      %v345 = vld [vmem:[%s298 + $0x84] sm:$0xf]
      %v346 = vld [vmem:[%s298 + $0x88] sm:$0xf]
      %v347 = vld [vmem:[%s298 + $0x8c] sm:$0xf]
      %v348 = vld [vmem:[%s1] sm:$0xf]
      %v349 = vld [vmem:[%s1 + $0x4] sm:$0xf]
      %v350 = vld [vmem:[%s1 + $0x8] sm:$0xf]
      %v351 = vld [vmem:[%s1 + $0xc] sm:$0xf]
      %v352 = vld [vmem:[%s1 + $0x10] sm:$0x3]
      %v353 = vld [vmem:[%s2] sm:$0x1]
      %v355 = vlaneseq
      %v356 = vshrl.u32 %v355, 7
      %v357 = vsub.s32 0, %v356
      %v358 = vrot.slane %v353, %v357
      %v396 = vunpack.c.l.b16 %v312
      %v397 = vunpack.c.l.b16 %v313
      %v398 = vunpack.c.l.b16 %v314
      %v399 = vunpack.c.l.b16 %v315
      %v400 = vunpack.c.l.b16 %v316
      %v401 = vunpack.c.l.b16 %v317
      %v402 = vunpack.c.l.b16 %v318
      %v403 = vunpack.c.l.b16 %v319
      %v404 = vunpack.c.l.b16 %v320
      %v405 = vunpack.c.l.b16 %v321
      %v406 = vunpack.c.l.b16 %v322
      %v407 = vunpack.c.l.b16 %v323
      %v408 = vunpack.c.l.b16 %v324
      %v409 = vunpack.c.l.b16 %v325
      %v410 = vunpack.c.l.b16 %v326
      %v411 = vunpack.c.l.b16 %v327
      %v412 = vunpack.c.l.b16 %v328
      %v413 = vunpack.c.l.b16 %v329
      %v414 = vunpack.c.l.b16 %v330
      %v415 = vunpack.c.l.b16 %v331
      %v416 = vunpack.c.l.b16 %v332
      %v417 = vunpack.c.l.b16 %v333
      %v418 = vunpack.c.l.b16 %v334
      %v419 = vunpack.c.l.b16 %v335
      %v420 = vunpack.c.l.b16 %v336
      %v421 = vunpack.c.l.b16 %v337
      %v422 = vunpack.c.l.b16 %v338
      %v423 = vunpack.c.l.b16 %v339
      %v424 = vunpack.c.l.b16 %v340
      %v425 = vunpack.c.l.b16 %v341
      %v426 = vunpack.c.l.b16 %v342
      %v427 = vunpack.c.l.b16 %v343
      %v428 = vunpack.c.l.b16 %v344
      %v429 = vunpack.c.l.b16 %v345
      %v430 = vunpack.c.l.b16 %v346
      %v431 = vunpack.c.l.b16 %v347
      %v432 = vpack.c.b16 %v397, %v396
      %v433 = vpack.c.b16 %v399, %v398
      %v434 = vpack.c.b16 %v401, %v400
      %v435 = vpack.c.b16 %v403, %v402
      %v436 = vpack.c.b16 %v405, %v404
      %v437 = vpack.c.b16 %v407, %v406
      %v438 = vpack.c.b16 %v409, %v408
      %v439 = vpack.c.b16 %v411, %v410
      %v440 = vpack.c.b16 %v413, %v412
      %v441 = vpack.c.b16 %v415, %v414
      %v442 = vpack.c.b16 %v417, %v416
      %v443 = vpack.c.b16 %v419, %v418
      %v444 = vpack.c.b16 %v421, %v420
      %v445 = vpack.c.b16 %v423, %v422
      %v446 = vpack.c.b16 %v425, %v424
      %v447 = vpack.c.b16 %v427, %v426
      %v448 = vpack.c.b16 %v429, %v428
      %v449 = vpack.c.b16 %v431, %v430
      %v455 = vunpack.c.l.b16 %v348
      %v456 = vunpack.c.l.b16 %v349
      %v457 = vunpack.c.l.b16 %v350
      %v458 = vunpack.c.l.b16 %v351
      %v459 = vunpack.c.l.b16 %v352
      %v460 = vpack.c.b16 %v456, %v455
      %v461 = vpack.c.b16 %v458, %v457
      %v462 = vpack.c.b16 %v459, %v459
      %vm465 = vcmask 293888
      %v467 = vsel %vm465, %v432, 0
      %v470 = vsel %vm465, %v433, 0
      %v473 = vsel %vm465, %v434, 0
      %v476 = vsel %vm465, %v435, 0
      %v479 = vsel %vm465, %v436, 0
      %v482 = vsel %vm465, %v437, 0
      %v485 = vsel %vm465, %v438, 0
      %v488 = vsel %vm465, %v439, 0
      %v491 = vsel %vm465, %v440, 0
      %v494 = vsel %vm465, %v441, 0
      %v497 = vsel %vm465, %v442, 0
      %v500 = vsel %vm465, %v443, 0
      %v503 = vsel %vm465, %v444, 0
      %v506 = vsel %vm465, %v445, 0
      %v509 = vsel %vm465, %v446, 0
      %v512 = vsel %vm465, %v447, 0
      %v515 = vsel %vm465, %v448, 0
      %v518 = vsel %vm465, %v449, 0
      %vm520 = vcmask 1041408
      %v522 = vsel %vm520, %v462, 0
      %524 = vmatprep.subr.bf16.mxu0 0
      %525 = vmatpush1.bf16.msra.mxu0 %v460
      %526 = vmatprep.subr.bf16.mxu0 0
      %527 = vmatpush1.bf16.msra.mxu0 %v461
      %528 = vmatprep.subr.bf16.mxu0 0
      %529 = vmatpush1.bf16.msra.mxu0 %v522
      %530 = vmatprep.subr.bf16.mxu0 0
      %531 = vmatpush1.bf16.msra.mxu0 0
      %532 = vmatprep.subr.bf16.mxu0 0
      %533 = vmatpush1.bf16.msra.mxu0 0
      %534 = vmatprep.subr.bf16.mxu0 0
      %535 = vmatpush1.bf16.msra.mxu0 0
      %536 = vmatprep.subr.bf16.mxu0 0
      %537 = vmatpush1.bf16.msra.mxu0 0
      %538 = vmatprep.subr.bf16.mxu0 0
      %539 = vmatpush1.bf16.msra.mxu0 0
      %540 = vmatprep.subr.bf16.mxu0 0
      %541 = vmatpush1.bf16.msra.mxu0 0
      %542 = vmatprep.subr.bf16.mxu0 0
      %543 = vmatpush1.bf16.msra.mxu0 0
      %544 = vmatprep.subr.bf16.mxu0 0
      %545 = vmatpush1.bf16.msra.mxu0 0
      %546 = vmatprep.subr.bf16.mxu0 0
      %547 = vmatpush1.bf16.msra.mxu0 0
      %548 = vmatprep.subr.bf16.mxu0 0
      %549 = vmatpush1.bf16.msra.mxu0 0
      %550 = vmatprep.subr.bf16.mxu0 0
      %551 = vmatpush1.bf16.msra.mxu0 0
      %552 = vmatprep.subr.bf16.mxu0 0
      %553 = vmatpush1.bf16.msra.mxu0 0
      %554 = vmatprep.subr.bf16.mxu0 0
      %555 = vmatpush1.bf16.msra.mxu0 0
      %556 = vmatprep.mubr.bf16.mxu0 0
      %557 = vmatmul.mubr.bf16.gmra.mrb[0].mxu0 %v467
      %v558 = vpop.f32.mrb[0].mxu0
      %v559 = vadd.f32 %v358, %v558
      %v560 = vpop.f32.mrb[0].mxu0
      %v561 = vpop.f32.mrb[0].mxu0
      %v562 = vadd.f32 %v358, %v561
      %v563 = vpop.f32.mrb[0].mxu0
      %564 = vmatprep.mubr.bf16.mxu0 0
      %565 = vmatmul.mubr.bf16.gmra.mrb[0].mxu0 %v470
      %v566 = vpop.f32.mrb[0].mxu0
      %v567 = vadd.f32 %v358, %v566
      %v568 = vpop.f32.mrb[0].mxu0
      %v569 = vpop.f32.mrb[0].mxu0
      %v570 = vadd.f32 %v358, %v569
      %v571 = vpop.f32.mrb[0].mxu0
      %572 = vmatprep.mubr.bf16.mxu0 0
      %573 = vmatmul.mubr.bf16.gmra.mrb[0].mxu0 %v473
      %v574 = vpop.f32.mrb[0].mxu0
      %v575 = vadd.f32 %v358, %v574
      %v576 = vpop.f32.mrb[0].mxu0
      %v577 = vpop.f32.mrb[0].mxu0
      %v578 = vadd.f32 %v358, %v577
      %v579 = vpop.f32.mrb[0].mxu0
      %580 = vmatprep.mubr.bf16.mxu0 0
      %581 = vmatmul.mubr.bf16.gmra.mrb[0].mxu0 %v476
      %v582 = vpop.f32.mrb[0].mxu0
      %v583 = vadd.f32 %v358, %v582
      %v584 = vpop.f32.mrb[0].mxu0
      %v585 = vpop.f32.mrb[0].mxu0
      %v586 = vadd.f32 %v358, %v585
      %v587 = vpop.f32.mrb[0].mxu0
      %588 = vmatprep.mubr.bf16.mxu0 0
      %589 = vmatmul.mubr.bf16.gmra.mrb[0].mxu0 %v479
      %v590 = vpop.f32.mrb[0].mxu0
      %v591 = vadd.f32 %v358, %v590
      %v592 = vpop.f32.mrb[0].mxu0
      %v593 = vpop.f32.mrb[0].mxu0
      %v594 = vadd.f32 %v358, %v593
      %v595 = vpop.f32.mrb[0].mxu0
      %596 = vmatprep.mubr.bf16.mxu0 0
      %597 = vmatmul.mubr.bf16.gmra.mrb[0].mxu0 %v482
      %v598 = vpop.f32.mrb[0].mxu0
      %v599 = vadd.f32 %v358, %v598
      %v600 = vpop.f32.mrb[0].mxu0
      %v601 = vpop.f32.mrb[0].mxu0
      %v602 = vadd.f32 %v358, %v601
      %v603 = vpop.f32.mrb[0].mxu0
      %604 = vmatprep.mubr.bf16.mxu0 0
      %605 = vmatmul.mubr.bf16.gmra.mrb[0].mxu0 %v485
      %v606 = vpop.f32.mrb[0].mxu0
      %v607 = vadd.f32 %v358, %v606
      %v608 = vpop.f32.mrb[0].mxu0
      %v609 = vpop.f32.mrb[0].mxu0
      %v610 = vadd.f32 %v358, %v609
      %v611 = vpop.f32.mrb[0].mxu0
      %612 = vmatprep.mubr.bf16.mxu0 0
      %613 = vmatmul.mubr.bf16.gmra.mrb[0].mxu0 %v488
      %v614 = vpop.f32.mrb[0].mxu0
      %v615 = vadd.f32 %v358, %v614
      %v616 = vpop.f32.mrb[0].mxu0
      %v617 = vpop.f32.mrb[0].mxu0
      %v618 = vadd.f32 %v358, %v617
      %v619 = vpop.f32.mrb[0].mxu0
      %620 = vmatprep.mubr.bf16.mxu0 0
      %621 = vmatmul.mubr.bf16.gmra.mrb[0].mxu0 %v491
      %v622 = vpop.f32.mrb[0].mxu0
      %v623 = vadd.f32 %v358, %v622
      %v624 = vpop.f32.mrb[0].mxu0
      %v625 = vpop.f32.mrb[0].mxu0
      %v626 = vadd.f32 %v358, %v625
      %v627 = vpop.f32.mrb[0].mxu0
      %628 = vmatprep.mubr.bf16.mxu0 0
      %629 = vmatmul.mubr.bf16.gmra.mrb[0].mxu0 %v494
      %v630 = vpop.f32.mrb[0].mxu0
      %v631 = vadd.f32 %v358, %v630
      %v632 = vpop.f32.mrb[0].mxu0
      %v633 = vpop.f32.mrb[0].mxu0
      %v634 = vadd.f32 %v358, %v633
      %v635 = vpop.f32.mrb[0].mxu0
      %636 = vmatprep.mubr.bf16.mxu0 0
      %637 = vmatmul.mubr.bf16.gmra.mrb[0].mxu0 %v497
      %v638 = vpop.f32.mrb[0].mxu0
      %v639 = vadd.f32 %v358, %v638
      %v640 = vpop.f32.mrb[0].mxu0
      %v641 = vpop.f32.mrb[0].mxu0
      %v642 = vadd.f32 %v358, %v641
      %v643 = vpop.f32.mrb[0].mxu0
      %644 = vmatprep.mubr.bf16.mxu0 0
      %645 = vmatmul.mubr.bf16.gmra.mrb[0].mxu0 %v500
      %v646 = vpop.f32.mrb[0].mxu0
      %v647 = vadd.f32 %v358, %v646
      %v648 = vpop.f32.mrb[0].mxu0
      %v649 = vpop.f32.mrb[0].mxu0
      %v650 = vadd.f32 %v358, %v649
      %v651 = vpop.f32.mrb[0].mxu0
      %652 = vmatprep.mubr.bf16.mxu0 0
      %653 = vmatmul.mubr.bf16.gmra.mrb[0].mxu0 %v503
      %v654 = vpop.f32.mrb[0].mxu0
      %v655 = vadd.f32 %v358, %v654
      %v656 = vpop.f32.mrb[0].mxu0
      %v657 = vpop.f32.mrb[0].mxu0
      %v658 = vadd.f32 %v358, %v657
      %v659 = vpop.f32.mrb[0].mxu0
      %660 = vmatprep.mubr.bf16.mxu0 0
      %661 = vmatmul.mubr.bf16.gmra.mrb[0].mxu0 %v506
      %v662 = vpop.f32.mrb[0].mxu0
      %v663 = vadd.f32 %v358, %v662
      %v664 = vpop.f32.mrb[0].mxu0
      %v665 = vpop.f32.mrb[0].mxu0
      %v666 = vadd.f32 %v358, %v665
      %v667 = vpop.f32.mrb[0].mxu0
      %668 = vmatprep.mubr.bf16.mxu0 0
      %669 = vmatmul.mubr.bf16.gmra.mrb[0].mxu0 %v509
      %v670 = vpop.f32.mrb[0].mxu0
      %v671 = vadd.f32 %v358, %v670
      %v672 = vpop.f32.mrb[0].mxu0
      %v673 = vpop.f32.mrb[0].mxu0
      %v674 = vadd.f32 %v358, %v673
      %v675 = vpop.f32.mrb[0].mxu0
      %676 = vmatprep.mubr.bf16.mxu0 0
      %677 = vmatmul.mubr.bf16.gmra.mrb[0].mxu0 %v512
      %v678 = vpop.f32.mrb[0].mxu0
      %v679 = vadd.f32 %v358, %v678
      %v680 = vpop.f32.mrb[0].mxu0
      %v681 = vpop.f32.mrb[0].mxu0
      %v682 = vadd.f32 %v358, %v681
      %v683 = vpop.f32.mrb[0].mxu0
      %684 = vmatprep.mubr.bf16.mxu0 0
      %685 = vmatmul.mubr.bf16.gmra.mrb[0].mxu0 %v515
      %v686 = vpop.f32.mrb[0].mxu0
      %v687 = vadd.f32 %v358, %v686
      %v688 = vpop.f32.mrb[0].mxu0
      %v689 = vpop.f32.mrb[0].mxu0
      %v690 = vadd.f32 %v358, %v689
      %v691 = vpop.f32.mrb[0].mxu0
      %692 = vmatprep.mubr.bf16.mxu0 0
      %693 = vmatmul.mubr.bf16.gmra.mrb[0].mxu0 %v518
      %v694 = vpop.f32.mrb[0].mxu0
      %v695 = vadd.f32 %v358, %v694
      %v696 = vpop.f32.mrb[0].mxu0
      %v697 = vpop.f32.mrb[0].mxu0
      %v698 = vadd.f32 %v358, %v697
      %v699 = vpop.f32.mrb[0].mxu0
      %700 = vdwg.mxu0
      %v701 = vmul.f32 %v559, 0.2
      %v702 = vmul.f32 %v562, 0.2
      %v703 = vmul.f32 %v567, 0.2
      %v704 = vmul.f32 %v570, 0.2
      %v705 = vmul.f32 %v575, 0.2
      %v706 = vmul.f32 %v578, 0.2
      %v707 = vmul.f32 %v583, 0.2
      %v708 = vmul.f32 %v586, 0.2
      %v709 = vmul.f32 %v591, 0.2
      %v710 = vmul.f32 %v594, 0.2
      %v711 = vmul.f32 %v599, 0.2
      %v712 = vmul.f32 %v602, 0.2
      %v713 = vmul.f32 %v607, 0.2
      %v714 = vmul.f32 %v610, 0.2
      %v715 = vmul.f32 %v615, 0.2
      %v716 = vmul.f32 %v618, 0.2
      %v717 = vmul.f32 %v623, 0.2
      %v718 = vmul.f32 %v626, 0.2
      %v719 = vmul.f32 %v631, 0.2
      %v720 = vmul.f32 %v634, 0.2
      %v721 = vmul.f32 %v639, 0.2
      %v722 = vmul.f32 %v642, 0.2
      %v723 = vmul.f32 %v647, 0.2
      %v724 = vmul.f32 %v650, 0.2
      %v725 = vmul.f32 %v655, 0.2
      %v726 = vmul.f32 %v658, 0.2
      %v727 = vmul.f32 %v663, 0.2
      %v728 = vmul.f32 %v666, 0.2
      %v729 = vmul.f32 %v671, 0.2
      %v730 = vmul.f32 %v674, 0.2
      %v731 = vmul.f32 %v679, 0.2
      %v732 = vmul.f32 %v682, 0.2
      %v733 = vmul.f32 %v687, 0.2
      %v734 = vmul.f32 %v690, 0.2
      %v735 = vmul.f32 %v695, 0.2
      %v736 = vmul.f32 %v698, 0.2
      %v737 = vmax.f32 %v559, %v701
      %v738 = vmax.f32 %v562, %v702
      %v739 = vmax.f32 %v567, %v703
      %v740 = vmax.f32 %v570, %v704
      %v741 = vmax.f32 %v575, %v705
      %v742 = vmax.f32 %v578, %v706
      %v743 = vmax.f32 %v583, %v707
      %v744 = vmax.f32 %v586, %v708
      %v745 = vmax.f32 %v591, %v709
      %v746 = vmax.f32 %v594, %v710
      %v747 = vmax.f32 %v599, %v711
      %v748 = vmax.f32 %v602, %v712
      %v749 = vmax.f32 %v607, %v713
      %v750 = vmax.f32 %v610, %v714
      %v751 = vmax.f32 %v615, %v715
      %v752 = vmax.f32 %v618, %v716
      %v753 = vmax.f32 %v623, %v717
      %v754 = vmax.f32 %v626, %v718
      %v755 = vmax.f32 %v631, %v719
      %v756 = vmax.f32 %v634, %v720
      %v757 = vmax.f32 %v639, %v721
      %v758 = vmax.f32 %v642, %v722
      %v759 = vmax.f32 %v647, %v723
      %v760 = vmax.f32 %v650, %v724
      %v761 = vmax.f32 %v655, %v725
      %v762 = vmax.f32 %v658, %v726
      %v763 = vmax.f32 %v663, %v727
      %v764 = vmax.f32 %v666, %v728
      %v765 = vmax.f32 %v671, %v729
      %v766 = vmax.f32 %v674, %v730
      %v767 = vmax.f32 %v679, %v731
      %v768 = vmax.f32 %v682, %v732
      %v769 = vmax.f32 %v687, %v733
      %v770 = vmax.f32 %v690, %v734
      %v771 = vmax.f32 %v695, %v735
      %v772 = vmax.f32 %v698, %v736
      %v773 = vpack.c.bf16 %v738, %v737
      %v774 = vpack.c.bf16 %v740, %v739
      %v775 = vpack.c.bf16 %v742, %v741
      %v776 = vpack.c.bf16 %v744, %v743
      %v777 = vpack.c.bf16 %v746, %v745
      %v778 = vpack.c.bf16 %v748, %v747
      %v779 = vpack.c.bf16 %v750, %v749
      %v780 = vpack.c.bf16 %v752, %v751
      %v781 = vpack.c.bf16 %v754, %v753
      %v782 = vpack.c.bf16 %v756, %v755
      %v783 = vpack.c.bf16 %v758, %v757
      %v784 = vpack.c.bf16 %v760, %v759
      %v785 = vpack.c.bf16 %v762, %v761
      %v786 = vpack.c.bf16 %v764, %v763
      %v787 = vpack.c.bf16 %v766, %v765
      %v788 = vpack.c.bf16 %v768, %v767
      %v789 = vpack.c.bf16 %v770, %v769
      %v790 = vpack.c.bf16 %v772, %v771
      %v791 = vld [vmem:[%s3] sm:$0xf]
      %v792 = vld [vmem:[%s3 + $0x4] sm:$0xf]
      %v793 = vld [vmem:[%s3 + $0x8] sm:$0xf]
      %v794 = vld [vmem:[%s3 + $0xc] sm:$0xf]
      %v795 = vld [vmem:[%s3 + $0x10] sm:$0xf]
      %v796 = vld [vmem:[%s3 + $0x14] sm:$0xf]
      %v797 = vld [vmem:[%s3 + $0x18] sm:$0xf]
      %v798 = vld [vmem:[%s3 + $0x1c] sm:$0xf]
      %v799 = vld [vmem:[%s3 + $0x20] sm:$0xf]
      %v800 = vld [vmem:[%s3 + $0x24] sm:$0xf]
      %v801 = vld [vmem:[%s3 + $0x28] sm:$0xf]
      %v802 = vld [vmem:[%s3 + $0x2c] sm:$0xf]
      %v803 = vld [vmem:[%s3 + $0x30] sm:$0xf]
      %v804 = vld [vmem:[%s3 + $0x34] sm:$0xf]
      %v805 = vld [vmem:[%s3 + $0x38] sm:$0xf]
      %v806 = vld [vmem:[%s3 + $0x3c] sm:$0xf]
      %v807 = vld [vmem:[%s4] sm:$0x1]
      %v809 = vlaneseq
      %v810 = vshrl.u32 %v809, 7
      %v811 = vsub.s32 0, %v810
      %v812 = vrot.slane %v807, %v811
      %v830 = vunpack.c.l.b16 %v791
      %v831 = vunpack.c.l.b16 %v792
      %v832 = vunpack.c.l.b16 %v793
      %v833 = vunpack.c.l.b16 %v794
      %v834 = vunpack.c.l.b16 %v795
      %v835 = vunpack.c.l.b16 %v796
      %v836 = vunpack.c.l.b16 %v797
      %v837 = vunpack.c.l.b16 %v798
      %v838 = vunpack.c.l.b16 %v799
      %v839 = vunpack.c.l.b16 %v800
      %v840 = vunpack.c.l.b16 %v801
      %v841 = vunpack.c.l.b16 %v802
      %v842 = vunpack.c.l.b16 %v803
      %v843 = vunpack.c.l.b16 %v804
      %v844 = vunpack.c.l.b16 %v805
      %v845 = vunpack.c.l.b16 %v806
      %v846 = vpack.c.b16 %v831, %v830
      %v847 = vpack.c.b16 %v833, %v832
      %v848 = vpack.c.b16 %v835, %v834
      %v849 = vpack.c.b16 %v837, %v836
      %v850 = vpack.c.b16 %v839, %v838
      %v851 = vpack.c.b16 %v841, %v840
      %v852 = vpack.c.b16 %v843, %v842
      %v853 = vpack.c.b16 %v845, %v844
      %862 = vmatprep.subr.bf16.mxu0 0
      %863 = vmatpush1.bf16.msra.mxu0 %v846
      %864 = vmatprep.subr.bf16.mxu0 0
      %865 = vmatpush1.bf16.msra.mxu0 %v847
      %866 = vmatprep.subr.bf16.mxu0 0
      %867 = vmatpush1.bf16.msra.mxu0 %v848
      %868 = vmatprep.subr.bf16.mxu0 0
      %869 = vmatpush1.bf16.msra.mxu0 %v849
      %870 = vmatprep.subr.bf16.mxu0 0
      %871 = vmatpush1.bf16.msra.mxu0 %v850
      %872 = vmatprep.subr.bf16.mxu0 0
      %873 = vmatpush1.bf16.msra.mxu0 %v851
      %874 = vmatprep.subr.bf16.mxu0 0
      %875 = vmatpush1.bf16.msra.mxu0 %v852
      %876 = vmatprep.subr.bf16.mxu0 0
      %877 = vmatpush1.bf16.msra.mxu0 %v853
      %878 = vmatprep.subr.bf16.mxu0 0
      %879 = vmatpush1.bf16.msra.mxu0 0
      %880 = vmatprep.subr.bf16.mxu0 0
      %881 = vmatpush1.bf16.msra.mxu0 0
      %882 = vmatprep.subr.bf16.mxu0 0
      %883 = vmatpush1.bf16.msra.mxu0 0
      %884 = vmatprep.subr.bf16.mxu0 0
      %885 = vmatpush1.bf16.msra.mxu0 0
      %886 = vmatprep.subr.bf16.mxu0 0
      %887 = vmatpush1.bf16.msra.mxu0 0
      %888 = vmatprep.subr.bf16.mxu0 0
      %889 = vmatpush1.bf16.msra.mxu0 0
      %890 = vmatprep.subr.bf16.mxu0 0
      %891 = vmatpush1.bf16.msra.mxu0 0
      %892 = vmatprep.subr.bf16.mxu0 0
      %893 = vmatpush1.bf16.msra.mxu0 0
      %894 = vmatprep.mubr.bf16.mxu0 0
      %895 = vmatmul.mubr.bf16.gmra.mrb[0].mxu0 %v773
      %v896 = vpop.f32.mrb[0].mxu0
      %v897 = vadd.f32 %v812, %v896
      %v898 = vpop.f32.mrb[0].mxu0
      %v899 = vpop.f32.mrb[0].mxu0
      %v900 = vadd.f32 %v812, %v899
      %v901 = vpop.f32.mrb[0].mxu0
      %902 = vmatprep.mubr.bf16.mxu0 0
      %903 = vmatmul.mubr.bf16.gmra.mrb[0].mxu0 %v774
      %v904 = vpop.f32.mrb[0].mxu0
      %v905 = vadd.f32 %v812, %v904
      %v906 = vpop.f32.mrb[0].mxu0
      %v907 = vpop.f32.mrb[0].mxu0
      %v908 = vadd.f32 %v812, %v907
      %v909 = vpop.f32.mrb[0].mxu0
      %910 = vmatprep.mubr.bf16.mxu0 0
      %911 = vmatmul.mubr.bf16.gmra.mrb[0].mxu0 %v775
      %v912 = vpop.f32.mrb[0].mxu0
      %v913 = vadd.f32 %v812, %v912
      %v914 = vpop.f32.mrb[0].mxu0
      %v915 = vpop.f32.mrb[0].mxu0
      %v916 = vadd.f32 %v812, %v915
      %v917 = vpop.f32.mrb[0].mxu0
      %918 = vmatprep.mubr.bf16.mxu0 0
      %919 = vmatmul.mubr.bf16.gmra.mrb[0].mxu0 %v776
      %v920 = vpop.f32.mrb[0].mxu0
      %v921 = vadd.f32 %v812, %v920
      %v922 = vpop.f32.mrb[0].mxu0
      %v923 = vpop.f32.mrb[0].mxu0
      %v924 = vadd.f32 %v812, %v923
      %v925 = vpop.f32.mrb[0].mxu0
      %926 = vmatprep.mubr.bf16.mxu0 0
      %927 = vmatmul.mubr.bf16.gmra.mrb[0].mxu0 %v777
      %v928 = vpop.f32.mrb[0].mxu0
      %v929 = vadd.f32 %v812, %v928
      %v930 = vpop.f32.mrb[0].mxu0
      %v931 = vpop.f32.mrb[0].mxu0
      %v932 = vadd.f32 %v812, %v931
      %v933 = vpop.f32.mrb[0].mxu0
      %934 = vmatprep.mubr.bf16.mxu0 0
      %935 = vmatmul.mubr.bf16.gmra.mrb[0].mxu0 %v778
      %v936 = vpop.f32.mrb[0].mxu0
      %v937 = vadd.f32 %v812, %v936
      %v938 = vpop.f32.mrb[0].mxu0
      %v939 = vpop.f32.mrb[0].mxu0
      %v940 = vadd.f32 %v812, %v939
      %v941 = vpop.f32.mrb[0].mxu0
      %942 = vmatprep.mubr.bf16.mxu0 0
      %943 = vmatmul.mubr.bf16.gmra.mrb[0].mxu0 %v779
      %v944 = vpop.f32.mrb[0].mxu0
      %v945 = vadd.f32 %v812, %v944
      %v946 = vpop.f32.mrb[0].mxu0
      %v947 = vpop.f32.mrb[0].mxu0
      %v948 = vadd.f32 %v812, %v947
      %v949 = vpop.f32.mrb[0].mxu0
      %950 = vmatprep.mubr.bf16.mxu0 0
      %951 = vmatmul.mubr.bf16.gmra.mrb[0].mxu0 %v780
      %v952 = vpop.f32.mrb[0].mxu0
      %v953 = vadd.f32 %v812, %v952
      %v954 = vpop.f32.mrb[0].mxu0
      %v955 = vpop.f32.mrb[0].mxu0
      %v956 = vadd.f32 %v812, %v955
      %v957 = vpop.f32.mrb[0].mxu0
      %958 = vmatprep.mubr.bf16.mxu0 0
      %959 = vmatmul.mubr.bf16.gmra.mrb[0].mxu0 %v781
      %v960 = vpop.f32.mrb[0].mxu0
      %v961 = vadd.f32 %v812, %v960
      %v962 = vpop.f32.mrb[0].mxu0
      %v963 = vpop.f32.mrb[0].mxu0
      %v964 = vadd.f32 %v812, %v963
      %v965 = vpop.f32.mrb[0].mxu0
      %966 = vmatprep.mubr.bf16.mxu0 0
      %967 = vmatmul.mubr.bf16.gmra.mrb[0].mxu0 %v782
      %v968 = vpop.f32.mrb[0].mxu0
      %v969 = vadd.f32 %v812, %v968
      %v970 = vpop.f32.mrb[0].mxu0
      %v971 = vpop.f32.mrb[0].mxu0
      %v972 = vadd.f32 %v812, %v971
      %v973 = vpop.f32.mrb[0].mxu0
      %974 = vmatprep.mubr.bf16.mxu0 0
      %975 = vmatmul.mubr.bf16.gmra.mrb[0].mxu0 %v783
      %v976 = vpop.f32.mrb[0].mxu0
      %v977 = vadd.f32 %v812, %v976
      %v978 = vpop.f32.mrb[0].mxu0
      %v979 = vpop.f32.mrb[0].mxu0
      %v980 = vadd.f32 %v812, %v979
      %v981 = vpop.f32.mrb[0].mxu0
      %982 = vmatprep.mubr.bf16.mxu0 0
      %983 = vmatmul.mubr.bf16.gmra.mrb[0].mxu0 %v784
      %v984 = vpop.f32.mrb[0].mxu0
      %v985 = vadd.f32 %v812, %v984
      %v986 = vpop.f32.mrb[0].mxu0
      %v987 = vpop.f32.mrb[0].mxu0
      %v988 = vadd.f32 %v812, %v987
      %v989 = vpop.f32.mrb[0].mxu0
      %990 = vmatprep.mubr.bf16.mxu0 0
      %991 = vmatmul.mubr.bf16.gmra.mrb[0].mxu0 %v785
      %v992 = vpop.f32.mrb[0].mxu0
      %v993 = vadd.f32 %v812, %v992
      %v994 = vpop.f32.mrb[0].mxu0
      %v995 = vpop.f32.mrb[0].mxu0
      %v996 = vadd.f32 %v812, %v995
      %v997 = vpop.f32.mrb[0].mxu0
      %998 = vmatprep.mubr.bf16.mxu0 0
      %999 = vmatmul.mubr.bf16.gmra.mrb[0].mxu0 %v786
      %v1000 = vpop.f32.mrb[0].mxu0
      %v1001 = vadd.f32 %v812, %v1000
      %v1002 = vpop.f32.mrb[0].mxu0
      %v1003 = vpop.f32.mrb[0].mxu0
      %v1004 = vadd.f32 %v812, %v1003
      %v1005 = vpop.f32.mrb[0].mxu0
      %1006 = vmatprep.mubr.bf16.mxu0 0
      %1007 = vmatmul.mubr.bf16.gmra.mrb[0].mxu0 %v787
      %v1008 = vpop.f32.mrb[0].mxu0
      %v1009 = vadd.f32 %v812, %v1008
      %v1010 = vpop.f32.mrb[0].mxu0
      %v1011 = vpop.f32.mrb[0].mxu0
      %v1012 = vadd.f32 %v812, %v1011
      %v1013 = vpop.f32.mrb[0].mxu0
      %1014 = vmatprep.mubr.bf16.mxu0 0
      %1015 = vmatmul.mubr.bf16.gmra.mrb[0].mxu0 %v788
      %v1016 = vpop.f32.mrb[0].mxu0
      %v1017 = vadd.f32 %v812, %v1016
      %v1018 = vpop.f32.mrb[0].mxu0
      %v1019 = vpop.f32.mrb[0].mxu0
      %v1020 = vadd.f32 %v812, %v1019
      %v1021 = vpop.f32.mrb[0].mxu0
      %1022 = vmatprep.mubr.bf16.mxu0 0
      %1023 = vmatmul.mubr.bf16.gmra.mrb[0].mxu0 %v789
      %v1024 = vpop.f32.mrb[0].mxu0
      %v1025 = vadd.f32 %v812, %v1024
      %v1026 = vpop.f32.mrb[0].mxu0
      %v1027 = vpop.f32.mrb[0].mxu0
      %v1028 = vadd.f32 %v812, %v1027
      %v1029 = vpop.f32.mrb[0].mxu0
      %1030 = vmatprep.mubr.bf16.mxu0 0
      %1031 = vmatmul.mubr.bf16.gmra.mrb[0].mxu0 %v790
      %v1032 = vpop.f32.mrb[0].mxu0
      %v1033 = vadd.f32 %v812, %v1032
      %v1034 = vpop.f32.mrb[0].mxu0
      %v1035 = vpop.f32.mrb[0].mxu0
      %v1036 = vadd.f32 %v812, %v1035
      %v1037 = vpop.f32.mrb[0].mxu0
      %1038 = vdwg.mxu0
      %v1039 = vmul.f32 %v897, 0.2
      %v1040 = vmul.f32 %v900, 0.2
      %v1041 = vmul.f32 %v905, 0.2
      %v1042 = vmul.f32 %v908, 0.2
      %v1043 = vmul.f32 %v913, 0.2
      %v1044 = vmul.f32 %v916, 0.2
      %v1045 = vmul.f32 %v921, 0.2
      %v1046 = vmul.f32 %v924, 0.2
      %v1047 = vmul.f32 %v929, 0.2
      %v1048 = vmul.f32 %v932, 0.2
      %v1049 = vmul.f32 %v937, 0.2
      %v1050 = vmul.f32 %v940, 0.2
      %v1051 = vmul.f32 %v945, 0.2
      %v1052 = vmul.f32 %v948, 0.2
      %v1053 = vmul.f32 %v953, 0.2
      %v1054 = vmul.f32 %v956, 0.2
      %v1055 = vmul.f32 %v961, 0.2
      %v1056 = vmul.f32 %v964, 0.2
      %v1057 = vmul.f32 %v969, 0.2
      %v1058 = vmul.f32 %v972, 0.2
      %v1059 = vmul.f32 %v977, 0.2
      %v1060 = vmul.f32 %v980, 0.2
      %v1061 = vmul.f32 %v985, 0.2
      %v1062 = vmul.f32 %v988, 0.2
      %v1063 = vmul.f32 %v993, 0.2
      %v1064 = vmul.f32 %v996, 0.2
      %v1065 = vmul.f32 %v1001, 0.2
      %v1066 = vmul.f32 %v1004, 0.2
      %v1067 = vmul.f32 %v1009, 0.2
      %v1068 = vmul.f32 %v1012, 0.2
      %v1069 = vmul.f32 %v1017, 0.2
      %v1070 = vmul.f32 %v1020, 0.2
      %v1071 = vmul.f32 %v1025, 0.2
      %v1072 = vmul.f32 %v1028, 0.2
      %v1073 = vmul.f32 %v1033, 0.2
      %v1074 = vmul.f32 %v1036, 0.2
      %v1075 = vmax.f32 %v897, %v1039
      %v1076 = vmax.f32 %v900, %v1040
      %v1077 = vmax.f32 %v905, %v1041
      %v1078 = vmax.f32 %v908, %v1042
      %v1079 = vmax.f32 %v913, %v1043
      %v1080 = vmax.f32 %v916, %v1044
      %v1081 = vmax.f32 %v921, %v1045
      %v1082 = vmax.f32 %v924, %v1046
      %v1083 = vmax.f32 %v929, %v1047
      %v1084 = vmax.f32 %v932, %v1048
      %v1085 = vmax.f32 %v937, %v1049
      %v1086 = vmax.f32 %v940, %v1050
      %v1087 = vmax.f32 %v945, %v1051
      %v1088 = vmax.f32 %v948, %v1052
      %v1089 = vmax.f32 %v953, %v1053
      %v1090 = vmax.f32 %v956, %v1054
      %v1091 = vmax.f32 %v961, %v1055
      %v1092 = vmax.f32 %v964, %v1056
      %v1093 = vmax.f32 %v969, %v1057
      %v1094 = vmax.f32 %v972, %v1058
      %v1095 = vmax.f32 %v977, %v1059
      %v1096 = vmax.f32 %v980, %v1060
      %v1097 = vmax.f32 %v985, %v1061
      %v1098 = vmax.f32 %v988, %v1062
      %v1099 = vmax.f32 %v993, %v1063
      %v1100 = vmax.f32 %v996, %v1064
      %v1101 = vmax.f32 %v1001, %v1065
      %v1102 = vmax.f32 %v1004, %v1066
      %v1103 = vmax.f32 %v1009, %v1067
      %v1104 = vmax.f32 %v1012, %v1068
      %v1105 = vmax.f32 %v1017, %v1069
      %v1106 = vmax.f32 %v1020, %v1070
      %v1107 = vmax.f32 %v1025, %v1071
      %v1108 = vmax.f32 %v1028, %v1072
      %v1109 = vmax.f32 %v1033, %v1073
      %v1110 = vmax.f32 %v1036, %v1074
      %s1111 = smul.u32 %s23, 16
      %s1112 = ssub.s32 %s1111, 1
      %v1113 = vstv %s1112
      %v1114 = vadd.s32 %v1113, 1
      %v1115 = vadd.s32 %v1113, 2
      %v1116 = vadd.s32 %v1113, 3
      %v1117 = vadd.s32 %v1113, 4
      %v1118 = vadd.s32 %v1113, 5
      %v1119 = vadd.s32 %v1113, 6
      %v1120 = vadd.s32 %v1113, 7
      %v1121 = vadd.s32 %v1113, 8
      %v1122 = vadd.s32 %v1113, 9
      %v1123 = vadd.s32 %v1113, 10
      %v1124 = vadd.s32 %v1113, 11
      %v1125 = vadd.s32 %v1113, 12
      %v1126 = vadd.s32 %v1113, 13
      %v1127 = vadd.s32 %v1113, 14
      %v1128 = vadd.s32 %v1113, 15
      %v1129 = vadd.s32 %v1113, 16
      %v1130 = vadd.s32 %v1113, 17
      %v1131 = vlaneseq
      %v1132 = vshrl.u32 %v1131, 7
      %v1133 = vadd.s32 %v1132, 8
      %vm1134 = vcmp.ge.s32.totalorder %v1113, 0
      %vm1135 = vcmp.ge.s32.totalorder %v1114, 0
      %vm1136 = vcmp.ge.s32.totalorder %v1115, 0
      %vm1137 = vcmp.ge.s32.totalorder %v1116, 0
      %vm1138 = vcmp.ge.s32.totalorder %v1117, 0
      %vm1139 = vcmp.ge.s32.totalorder %v1118, 0
      %vm1140 = vcmp.ge.s32.totalorder %v1119, 0
      %vm1141 = vcmp.ge.s32.totalorder %v1120, 0
      %vm1142 = vcmp.ge.s32.totalorder %v1121, 0
      %vm1143 = vcmp.ge.s32.totalorder %v1122, 0
      %vm1144 = vcmp.ge.s32.totalorder %v1123, 0
      %vm1145 = vcmp.ge.s32.totalorder %v1124, 0
      %vm1146 = vcmp.ge.s32.totalorder %v1125, 0
      %vm1147 = vcmp.ge.s32.totalorder %v1126, 0
      %vm1148 = vcmp.ge.s32.totalorder %v1127, 0
      %vm1149 = vcmp.ge.s32.totalorder %v1128, 0
      %vm1150 = vcmp.ge.s32.totalorder %v1129, 0
      %vm1151 = vcmp.ge.s32.totalorder %v1130, 0
      %vm1152 = vcmp.lt.s32.totalorder %v1113, 16
      %vm1153 = vcmp.lt.s32.totalorder %v1114, 16
      %vm1154 = vcmp.lt.s32.totalorder %v1115, 16
      %vm1155 = vcmp.lt.s32.totalorder %v1116, 16
      %vm1156 = vcmp.lt.s32.totalorder %v1117, 16
      %vm1157 = vcmp.lt.s32.totalorder %v1118, 16
      %vm1158 = vcmp.lt.s32.totalorder %v1119, 16
      %vm1159 = vcmp.lt.s32.totalorder %v1120, 16
      %vm1160 = vcmp.lt.s32.totalorder %v1121, 16
      %vm1161 = vcmp.lt.s32.totalorder %v1122, 16
      %vm1162 = vcmp.lt.s32.totalorder %v1123, 16
      %vm1163 = vcmp.lt.s32.totalorder %v1124, 16
      %vm1164 = vcmp.lt.s32.totalorder %v1125, 16
      %vm1165 = vcmp.lt.s32.totalorder %v1126, 16
      %vm1166 = vcmp.lt.s32.totalorder %v1127, 16
      %vm1167 = vcmp.lt.s32.totalorder %v1128, 16
      %vm1168 = vcmp.lt.s32.totalorder %v1129, 16
      %vm1169 = vcmp.lt.s32.totalorder %v1130, 16
      %vm1170 = vmand %vm1134, %vm1152
      %vm1171 = vmand %vm1135, %vm1153
      %vm1172 = vmand %vm1136, %vm1154
      %vm1173 = vmand %vm1137, %vm1155
      %vm1174 = vmand %vm1138, %vm1156
      %vm1175 = vmand %vm1139, %vm1157
      %vm1176 = vmand %vm1140, %vm1158
      %vm1177 = vmand %vm1141, %vm1159
      %vm1178 = vmand %vm1142, %vm1160
      %vm1179 = vmand %vm1143, %vm1161
      %vm1180 = vmand %vm1144, %vm1162
      %vm1181 = vmand %vm1145, %vm1163
      %vm1182 = vmand %vm1146, %vm1164
      %vm1183 = vmand %vm1147, %vm1165
      %vm1184 = vmand %vm1148, %vm1166
      %vm1185 = vmand %vm1149, %vm1167
      %vm1186 = vmand %vm1150, %vm1168
      %vm1187 = vmand %vm1151, %vm1169
      %v1188 = vsel %vm1170, 1, 0
      %v1189 = vsel %vm1171, 1, 0
      %v1190 = vsel %vm1172, 1, 0
      %v1191 = vsel %vm1173, 1, 0
      %v1192 = vsel %vm1174, 1, 0
      %v1193 = vsel %vm1175, 1, 0
      %v1194 = vsel %vm1176, 1, 0
      %v1195 = vsel %vm1177, 1, 0
      %v1196 = vsel %vm1178, 1, 0
      %v1197 = vsel %vm1179, 1, 0
      %v1198 = vsel %vm1180, 1, 0
      %v1199 = vsel %vm1181, 1, 0
      %v1200 = vsel %vm1182, 1, 0
      %v1201 = vsel %vm1183, 1, 0
      %v1202 = vsel %vm1184, 1, 0
      %v1203 = vsel %vm1185, 1, 0
      %v1204 = vsel %vm1186, 1, 0
      %v1205 = vsel %vm1187, 1, 0
      %vm1206 = vcmp.eq.s32.totalorder %v1188, 1
      %vm1207 = vcmp.eq.s32.totalorder %v1189, 1
      %vm1208 = vcmp.eq.s32.totalorder %v1190, 1
      %vm1209 = vcmp.eq.s32.totalorder %v1191, 1
      %vm1210 = vcmp.eq.s32.totalorder %v1192, 1
      %vm1211 = vcmp.eq.s32.totalorder %v1193, 1
      %vm1212 = vcmp.eq.s32.totalorder %v1194, 1
      %vm1213 = vcmp.eq.s32.totalorder %v1195, 1
      %vm1214 = vcmp.eq.s32.totalorder %v1196, 1
      %vm1215 = vcmp.eq.s32.totalorder %v1197, 1
      %vm1216 = vcmp.eq.s32.totalorder %v1198, 1
      %vm1217 = vcmp.eq.s32.totalorder %v1199, 1
      %vm1218 = vcmp.eq.s32.totalorder %v1200, 1
      %vm1219 = vcmp.eq.s32.totalorder %v1201, 1
      %vm1220 = vcmp.eq.s32.totalorder %v1202, 1
      %vm1221 = vcmp.eq.s32.totalorder %v1203, 1
      %vm1222 = vcmp.eq.s32.totalorder %v1204, 1
      %vm1223 = vcmp.eq.s32.totalorder %v1205, 1
      %v1224 = vsel %vm1206, %v1075, 0.0
      %v1225 = vsel %vm1206, %v1076, 0.0
      %v1226 = vsel %vm1207, %v1077, 0.0
      %v1227 = vsel %vm1207, %v1078, 0.0
      %v1228 = vsel %vm1208, %v1079, 0.0
      %v1229 = vsel %vm1208, %v1080, 0.0
      %v1230 = vsel %vm1209, %v1081, 0.0
      %v1231 = vsel %vm1209, %v1082, 0.0
      %v1232 = vsel %vm1210, %v1083, 0.0
      %v1233 = vsel %vm1210, %v1084, 0.0
      %v1234 = vsel %vm1211, %v1085, 0.0
      %v1235 = vsel %vm1211, %v1086, 0.0
      %v1236 = vsel %vm1212, %v1087, 0.0
      %v1237 = vsel %vm1212, %v1088, 0.0
      %v1238 = vsel %vm1213, %v1089, 0.0
      %v1239 = vsel %vm1213, %v1090, 0.0
      %v1240 = vsel %vm1214, %v1091, 0.0
      %v1241 = vsel %vm1214, %v1092, 0.0
      %v1242 = vsel %vm1215, %v1093, 0.0
      %v1243 = vsel %vm1215, %v1094, 0.0
      %v1244 = vsel %vm1216, %v1095, 0.0
      %v1245 = vsel %vm1216, %v1096, 0.0
      %v1246 = vsel %vm1217, %v1097, 0.0
      %v1247 = vsel %vm1217, %v1098, 0.0
      %v1248 = vsel %vm1218, %v1099, 0.0
      %v1249 = vsel %vm1218, %v1100, 0.0
      %v1250 = vsel %vm1219, %v1101, 0.0
      %v1251 = vsel %vm1219, %v1102, 0.0
      %v1252 = vsel %vm1220, %v1103, 0.0
      %v1253 = vsel %vm1220, %v1104, 0.0
      %v1254 = vsel %vm1221, %v1105, 0.0
      %v1255 = vsel %vm1221, %v1106, 0.0
      %v1256 = vsel %vm1222, %v1107, 0.0
      %v1257 = vsel %vm1222, %v1108, 0.0
      %v1258 = vsel %vm1223, %v1109, 0.0
      %v1259 = vsel %vm1223, %v1110, 0.0
      %v1260 = vrot.slane %v1224, 7
      %v1261 = vrot.slane %v1226, 7
      %v1262 = vrot.slane %v1228, 7
      %v1263 = vrot.slane %v1230, 7
      %v1264 = vrot.slane %v1232, 7
      %v1265 = vrot.slane %v1234, 7
      %v1266 = vrot.slane %v1236, 7
      %v1267 = vrot.slane %v1238, 7
      %v1268 = vrot.slane %v1240, 7
      %v1269 = vrot.slane %v1242, 7
      %v1270 = vrot.slane %v1244, 7
      %v1271 = vrot.slane %v1246, 7
      %v1272 = vrot.slane %v1248, 7
      %v1273 = vrot.slane %v1250, 7
      %v1274 = vrot.slane %v1252, 7
      %v1275 = vrot.slane %v1254, 7
      %v1276 = vrot.slane %v1256, 7
      %v1277 = vrot.slane %v1258, 7
      %v1278 = vrot.slane %v1225, 7
      %v1279 = vrot.slane %v1227, 7
      %v1280 = vrot.slane %v1229, 7
      %v1281 = vrot.slane %v1231, 7
      %v1282 = vrot.slane %v1233, 7
      %v1283 = vrot.slane %v1235, 7
      %v1284 = vrot.slane %v1237, 7
      %v1285 = vrot.slane %v1239, 7
      %v1286 = vrot.slane %v1241, 7
      %v1287 = vrot.slane %v1243, 7
      %v1288 = vrot.slane %v1245, 7
      %v1289 = vrot.slane %v1247, 7
      %v1290 = vrot.slane %v1249, 7
      %v1291 = vrot.slane %v1251, 7
      %v1292 = vrot.slane %v1253, 7
      %v1293 = vrot.slane %v1255, 7
      %v1294 = vrot.slane %v1257, 7
      %v1295 = vrot.slane %v1259, 7
      %vm1296 = vcmp.lt.s32.totalorder %v1132, 1
      %v1297 = vsel %vm1296, %v1260, %v1278
      %v1298 = vsel %vm1296, %v1261, %v1279
      %v1299 = vsel %vm1296, %v1262, %v1280
      %v1300 = vsel %vm1296, %v1263, %v1281
      %v1301 = vsel %vm1296, %v1264, %v1282
      %v1302 = vsel %vm1296, %v1265, %v1283
      %v1303 = vsel %vm1296, %v1266, %v1284
      %v1304 = vsel %vm1296, %v1267, %v1285
      %v1305 = vsel %vm1296, %v1268, %v1286
      %v1306 = vsel %vm1296, %v1269, %v1287
      %v1307 = vsel %vm1296, %v1270, %v1288
      %v1308 = vsel %vm1296, %v1271, %v1289
      %v1309 = vsel %vm1296, %v1272, %v1290
      %v1310 = vsel %vm1296, %v1273, %v1291
      %v1311 = vsel %vm1296, %v1274, %v1292
      %v1312 = vsel %vm1296, %v1275, %v1293
      %v1313 = vsel %vm1296, %v1276, %v1294
      %v1314 = vsel %vm1296, %v1277, %v1295
      %v1315 = vsel %vm1296, %v1278, %v1260
      %v1316 = vsel %vm1296, %v1279, %v1261
      %v1317 = vsel %vm1296, %v1280, %v1262
      %v1318 = vsel %vm1296, %v1281, %v1263
      %v1319 = vsel %vm1296, %v1282, %v1264
      %v1320 = vsel %vm1296, %v1283, %v1265
      %v1321 = vsel %vm1296, %v1284, %v1266
      %v1322 = vsel %vm1296, %v1285, %v1267
      %v1323 = vsel %vm1296, %v1286, %v1268
      %v1324 = vsel %vm1296, %v1287, %v1269
      %v1325 = vsel %vm1296, %v1288, %v1270
      %v1326 = vsel %vm1296, %v1289, %v1271
      %v1327 = vsel %vm1296, %v1290, %v1272
      %v1328 = vsel %vm1296, %v1291, %v1273
      %v1329 = vsel %vm1296, %v1292, %v1274
      %v1330 = vsel %vm1296, %v1293, %v1275
      %v1331 = vsel %vm1296, %v1294, %v1276
      %v1332 = vsel %vm1296, %v1295, %v1277
      %v1333 = vrot.slane %v1224, 1
      %v1334 = vrot.slane %v1226, 1
      %v1335 = vrot.slane %v1228, 1
      %v1336 = vrot.slane %v1230, 1
      %v1337 = vrot.slane %v1232, 1
      %v1338 = vrot.slane %v1234, 1
      %v1339 = vrot.slane %v1236, 1
      %v1340 = vrot.slane %v1238, 1
      %v1341 = vrot.slane %v1240, 1
      %v1342 = vrot.slane %v1242, 1
      %v1343 = vrot.slane %v1244, 1
      %v1344 = vrot.slane %v1246, 1
      %v1345 = vrot.slane %v1248, 1
      %v1346 = vrot.slane %v1250, 1
      %v1347 = vrot.slane %v1252, 1
      %v1348 = vrot.slane %v1254, 1
      %v1349 = vrot.slane %v1256, 1
      %v1350 = vrot.slane %v1258, 1
      %v1351 = vrot.slane %v1225, 1
      %v1352 = vrot.slane %v1227, 1
      %v1353 = vrot.slane %v1229, 1
      %v1354 = vrot.slane %v1231, 1
      %v1355 = vrot.slane %v1233, 1
      %v1356 = vrot.slane %v1235, 1
      %v1357 = vrot.slane %v1237, 1
      %v1358 = vrot.slane %v1239, 1
      %v1359 = vrot.slane %v1241, 1
      %v1360 = vrot.slane %v1243, 1
      %v1361 = vrot.slane %v1245, 1
      %v1362 = vrot.slane %v1247, 1
      %v1363 = vrot.slane %v1249, 1
      %v1364 = vrot.slane %v1251, 1
      %v1365 = vrot.slane %v1253, 1
      %v1366 = vrot.slane %v1255, 1
      %v1367 = vrot.slane %v1257, 1
      %v1368 = vrot.slane %v1259, 1
      %vm1369 = vcmp.lt.s32.totalorder %v1132, 7
      %v1370 = vsel %vm1369, %v1333, %v1351
      %v1371 = vsel %vm1369, %v1334, %v1352
      %v1372 = vsel %vm1369, %v1335, %v1353
      %v1373 = vsel %vm1369, %v1336, %v1354
      %v1374 = vsel %vm1369, %v1337, %v1355
      %v1375 = vsel %vm1369, %v1338, %v1356
      %v1376 = vsel %vm1369, %v1339, %v1357
      %v1377 = vsel %vm1369, %v1340, %v1358
      %v1378 = vsel %vm1369, %v1341, %v1359
      %v1379 = vsel %vm1369, %v1342, %v1360
      %v1380 = vsel %vm1369, %v1343, %v1361
      %v1381 = vsel %vm1369, %v1344, %v1362
      %v1382 = vsel %vm1369, %v1345, %v1363
      %v1383 = vsel %vm1369, %v1346, %v1364
      %v1384 = vsel %vm1369, %v1347, %v1365
      %v1385 = vsel %vm1369, %v1348, %v1366
      %v1386 = vsel %vm1369, %v1349, %v1367
      %v1387 = vsel %vm1369, %v1350, %v1368
      %v1388 = vsel %vm1369, %v1351, %v1333
      %v1389 = vsel %vm1369, %v1352, %v1334
      %v1390 = vsel %vm1369, %v1353, %v1335
      %v1391 = vsel %vm1369, %v1354, %v1336
      %v1392 = vsel %vm1369, %v1355, %v1337
      %v1393 = vsel %vm1369, %v1356, %v1338
      %v1394 = vsel %vm1369, %v1357, %v1339
      %v1395 = vsel %vm1369, %v1358, %v1340
      %v1396 = vsel %vm1369, %v1359, %v1341
      %v1397 = vsel %vm1369, %v1360, %v1342
      %v1398 = vsel %vm1369, %v1361, %v1343
      %v1399 = vsel %vm1369, %v1362, %v1344
      %v1400 = vsel %vm1369, %v1363, %v1345
      %v1401 = vsel %vm1369, %v1364, %v1346
      %v1402 = vsel %vm1369, %v1365, %v1347
      %v1403 = vsel %vm1369, %v1366, %v1348
      %v1404 = vsel %vm1369, %v1367, %v1349
      %v1405 = vsel %vm1369, %v1368, %v1350
      %vm1406 = vcmp.ge.s32.totalorder %v1132, 1
      %vm1407 = vcmp.ge.s32.totalorder %v1133, 1
      %v1408 = vsel %vm1406, 1, 0
      %v1409 = vsel %vm1407, 1, 0
      %vm1410 = vcmp.eq.s32.totalorder %v1408, 1
      %vm1411 = vcmp.eq.s32.totalorder %v1409, 1
      %v1412 = vsel %vm1410, %v1315, 0.0
      %v1413 = vsel %vm1411, %v1297, 0.0
      %v1414 = vsel %vm1410, %v1316, 0.0
      %v1415 = vsel %vm1411, %v1298, 0.0
      %v1416 = vsel %vm1410, %v1317, 0.0
      %v1417 = vsel %vm1411, %v1299, 0.0
      %v1418 = vsel %vm1410, %v1318, 0.0
      %v1419 = vsel %vm1411, %v1300, 0.0
      %v1420 = vsel %vm1410, %v1319, 0.0
      %v1421 = vsel %vm1411, %v1301, 0.0
      %v1422 = vsel %vm1410, %v1320, 0.0
      %v1423 = vsel %vm1411, %v1302, 0.0
      %v1424 = vsel %vm1410, %v1321, 0.0
      %v1425 = vsel %vm1411, %v1303, 0.0
      %v1426 = vsel %vm1410, %v1322, 0.0
      %v1427 = vsel %vm1411, %v1304, 0.0
      %v1428 = vsel %vm1410, %v1323, 0.0
      %v1429 = vsel %vm1411, %v1305, 0.0
      %v1430 = vsel %vm1410, %v1324, 0.0
      %v1431 = vsel %vm1411, %v1306, 0.0
      %v1432 = vsel %vm1410, %v1325, 0.0
      %v1433 = vsel %vm1411, %v1307, 0.0
      %v1434 = vsel %vm1410, %v1326, 0.0
      %v1435 = vsel %vm1411, %v1308, 0.0
      %v1436 = vsel %vm1410, %v1327, 0.0
      %v1437 = vsel %vm1411, %v1309, 0.0
      %v1438 = vsel %vm1410, %v1328, 0.0
      %v1439 = vsel %vm1411, %v1310, 0.0
      %v1440 = vsel %vm1410, %v1329, 0.0
      %v1441 = vsel %vm1411, %v1311, 0.0
      %v1442 = vsel %vm1410, %v1330, 0.0
      %v1443 = vsel %vm1411, %v1312, 0.0
      %v1444 = vsel %vm1410, %v1331, 0.0
      %v1445 = vsel %vm1411, %v1313, 0.0
      %v1446 = vsel %vm1410, %v1332, 0.0
      %v1447 = vsel %vm1411, %v1314, 0.0
      %vm1448 = vcmp.lt.s32.totalorder %v1132, 15
      %vm1449 = vcmp.lt.s32.totalorder %v1133, 15
      %v1450 = vsel %vm1448, 1, 0
      %v1451 = vsel %vm1449, 1, 0
      %vm1452 = vcmp.eq.s32.totalorder %v1450, 1
      %vm1453 = vcmp.eq.s32.totalorder %v1451, 1
      %v1454 = vsel %vm1452, %v1370, 0.0
      %v1455 = vsel %vm1453, %v1388, 0.0
      %v1456 = vsel %vm1452, %v1371, 0.0
      %v1457 = vsel %vm1453, %v1389, 0.0
      %v1458 = vsel %vm1452, %v1372, 0.0
      %v1459 = vsel %vm1453, %v1390, 0.0
      %v1460 = vsel %vm1452, %v1373, 0.0
      %v1461 = vsel %vm1453, %v1391, 0.0
      %v1462 = vsel %vm1452, %v1374, 0.0
      %v1463 = vsel %vm1453, %v1392, 0.0
      %v1464 = vsel %vm1452, %v1375, 0.0
      %v1465 = vsel %vm1453, %v1393, 0.0
      %v1466 = vsel %vm1452, %v1376, 0.0
      %v1467 = vsel %vm1453, %v1394, 0.0
      %v1468 = vsel %vm1452, %v1377, 0.0
      %v1469 = vsel %vm1453, %v1395, 0.0
      %v1470 = vsel %vm1452, %v1378, 0.0
      %v1471 = vsel %vm1453, %v1396, 0.0
      %v1472 = vsel %vm1452, %v1379, 0.0
      %v1473 = vsel %vm1453, %v1397, 0.0
      %v1474 = vsel %vm1452, %v1380, 0.0
      %v1475 = vsel %vm1453, %v1398, 0.0
      %v1476 = vsel %vm1452, %v1381, 0.0
      %v1477 = vsel %vm1453, %v1399, 0.0
      %v1478 = vsel %vm1452, %v1382, 0.0
      %v1479 = vsel %vm1453, %v1400, 0.0
      %v1480 = vsel %vm1452, %v1383, 0.0
      %v1481 = vsel %vm1453, %v1401, 0.0
      %v1482 = vsel %vm1452, %v1384, 0.0
      %v1483 = vsel %vm1453, %v1402, 0.0
      %v1484 = vsel %vm1452, %v1385, 0.0
      %v1485 = vsel %vm1453, %v1403, 0.0
      %v1486 = vsel %vm1452, %v1386, 0.0
      %v1487 = vsel %vm1453, %v1404, 0.0
      %v1488 = vsel %vm1452, %v1387, 0.0
      %v1489 = vsel %vm1453, %v1405, 0.0
      %v1490 = vpack.c.bf16 %v1413, %v1412
      %v1491 = vpack.c.bf16 %v1415, %v1414
      %v1492 = vpack.c.bf16 %v1417, %v1416
      %v1493 = vpack.c.bf16 %v1419, %v1418
      %v1494 = vpack.c.bf16 %v1421, %v1420
      %v1495 = vpack.c.bf16 %v1423, %v1422
      %v1496 = vpack.c.bf16 %v1425, %v1424
      %v1497 = vpack.c.bf16 %v1427, %v1426
      %v1498 = vpack.c.bf16 %v1429, %v1428
      %v1499 = vpack.c.bf16 %v1431, %v1430
      %v1500 = vpack.c.bf16 %v1433, %v1432
      %v1501 = vpack.c.bf16 %v1435, %v1434
      %v1502 = vpack.c.bf16 %v1437, %v1436
      %v1503 = vpack.c.bf16 %v1439, %v1438
      %v1504 = vpack.c.bf16 %v1441, %v1440
      %v1505 = vpack.c.bf16 %v1443, %v1442
      %v1506 = vpack.c.bf16 %v1445, %v1444
      %v1507 = vpack.c.bf16 %v1447, %v1446
      %v1508 = vpack.c.bf16 %v1225, %v1224
      %v1509 = vpack.c.bf16 %v1227, %v1226
      %v1510 = vpack.c.bf16 %v1229, %v1228
      %v1511 = vpack.c.bf16 %v1231, %v1230
      %v1512 = vpack.c.bf16 %v1233, %v1232
      %v1513 = vpack.c.bf16 %v1235, %v1234
      %v1514 = vpack.c.bf16 %v1237, %v1236
      %v1515 = vpack.c.bf16 %v1239, %v1238
      %v1516 = vpack.c.bf16 %v1241, %v1240
      %v1517 = vpack.c.bf16 %v1243, %v1242
      %v1518 = vpack.c.bf16 %v1245, %v1244
      %v1519 = vpack.c.bf16 %v1247, %v1246
      %v1520 = vpack.c.bf16 %v1249, %v1248
      %v1521 = vpack.c.bf16 %v1251, %v1250
      %v1522 = vpack.c.bf16 %v1253, %v1252
      %v1523 = vpack.c.bf16 %v1255, %v1254
      %v1524 = vpack.c.bf16 %v1257, %v1256
      %v1525 = vpack.c.bf16 %v1259, %v1258
      %v1526 = vpack.c.bf16 %v1455, %v1454
      %v1527 = vpack.c.bf16 %v1457, %v1456
      %v1528 = vpack.c.bf16 %v1459, %v1458
      %v1529 = vpack.c.bf16 %v1461, %v1460
      %v1530 = vpack.c.bf16 %v1463, %v1462
      %v1531 = vpack.c.bf16 %v1465, %v1464
      %v1532 = vpack.c.bf16 %v1467, %v1466
      %v1533 = vpack.c.bf16 %v1469, %v1468
      %v1534 = vpack.c.bf16 %v1471, %v1470
      %v1535 = vpack.c.bf16 %v1473, %v1472
      %v1536 = vpack.c.bf16 %v1475, %v1474
      %v1537 = vpack.c.bf16 %v1477, %v1476
      %v1538 = vpack.c.bf16 %v1479, %v1478
      %v1539 = vpack.c.bf16 %v1481, %v1480
      %v1540 = vpack.c.bf16 %v1483, %v1482
      %v1541 = vpack.c.bf16 %v1485, %v1484
      %v1542 = vpack.c.bf16 %v1487, %v1486
      %v1543 = vpack.c.bf16 %v1489, %v1488
      %v1544 = vld [vmem:[%s5] sm:$0xf]
      %v1545 = vld [vmem:[%s5 + $0x4] sm:$0xf]
      %v1546 = vld [vmem:[%s5 + $0x8] sm:$0xf]
      %v1547 = vld [vmem:[%s5 + $0xc] sm:$0xf]
      %v1548 = vld [vmem:[%s5 + $0x10] sm:$0xf]
      %v1549 = vld [vmem:[%s5 + $0x14] sm:$0xf]
      %v1550 = vld [vmem:[%s5 + $0x18] sm:$0xf]
      %v1551 = vld [vmem:[%s5 + $0x1c] sm:$0xf]
      %v1552 = vld [vmem:[%s5 + $0x20] sm:$0xf]
      %v1553 = vld [vmem:[%s5 + $0x24] sm:$0xf]
      %v1554 = vld [vmem:[%s5 + $0x28] sm:$0xf]
      %v1555 = vld [vmem:[%s5 + $0x2c] sm:$0xf]
      %v1556 = vld [vmem:[%s5 + $0x30] sm:$0xf]
      %v1557 = vld [vmem:[%s5 + $0x34] sm:$0xf]
      %v1558 = vld [vmem:[%s5 + $0x38] sm:$0xf]
      %v1559 = vld [vmem:[%s5 + $0x3c] sm:$0xf]
      %v1560 = vld [vmem:[%s5 + $0x40] sm:$0xf]
      %v1561 = vld [vmem:[%s5 + $0x44] sm:$0xf]
      %v1562 = vld [vmem:[%s5 + $0x48] sm:$0xf]
      %v1563 = vld [vmem:[%s5 + $0x4c] sm:$0xf]
      %v1564 = vld [vmem:[%s5 + $0x50] sm:$0xf]
      %v1565 = vld [vmem:[%s5 + $0x54] sm:$0xf]
      %v1566 = vld [vmem:[%s5 + $0x58] sm:$0xf]
      %v1567 = vld [vmem:[%s5 + $0x5c] sm:$0xf]
      %v1568 = vld [vmem:[%s5 + $0x60] sm:$0xf]
      %v1569 = vld [vmem:[%s5 + $0x64] sm:$0xf]
      %v1570 = vld [vmem:[%s5 + $0x68] sm:$0xf]
      %v1571 = vld [vmem:[%s5 + $0x6c] sm:$0xf]
      %v1572 = vld [vmem:[%s5 + $0x70] sm:$0xf]
      %v1573 = vld [vmem:[%s5 + $0x74] sm:$0xf]
      %v1574 = vld [vmem:[%s5 + $0x78] sm:$0xf]
      %v1575 = vld [vmem:[%s5 + $0x7c] sm:$0xf]
      %v1576 = vld [vmem:[%s5 + $0x80] sm:$0xf]
      %v1577 = vld [vmem:[%s5 + $0x84] sm:$0xf]
      %v1578 = vld [vmem:[%s5 + $0x88] sm:$0xf]
      %v1579 = vld [vmem:[%s5 + $0x8c] sm:$0xf]
      %v1580 = vld [vmem:[%s5 + $0x90] sm:$0xf]
      %v1581 = vld [vmem:[%s5 + $0x94] sm:$0xf]
      %v1582 = vld [vmem:[%s5 + $0x98] sm:$0xf]
      %v1583 = vld [vmem:[%s5 + $0x9c] sm:$0xf]
      %v1584 = vld [vmem:[%s5 + $0xa0] sm:$0xf]
      %v1585 = vld [vmem:[%s5 + $0xa4] sm:$0xf]
      %v1586 = vld [vmem:[%s5 + $0xa8] sm:$0xf]
      %v1587 = vld [vmem:[%s5 + $0xac] sm:$0xf]
      %v1588 = vld [vmem:[%s5 + $0xb0] sm:$0xf]
      %v1589 = vld [vmem:[%s5 + $0xb4] sm:$0xf]
      %v1590 = vld [vmem:[%s5 + $0xb8] sm:$0xf]
      %v1591 = vld [vmem:[%s5 + $0xbc] sm:$0xf]
      %s1592 = scalar_lea.vmem %s5, 192
      %v1593 = vld [vmem:[%s1592] sm:$0xf]
      %v1594 = vld [vmem:[%s1592 + $0x4] sm:$0xf]
      %v1595 = vld [vmem:[%s1592 + $0x8] sm:$0xf]
      %v1596 = vld [vmem:[%s1592 + $0xc] sm:$0xf]
      %v1597 = vld [vmem:[%s1592 + $0x10] sm:$0xf]
      %v1598 = vld [vmem:[%s1592 + $0x14] sm:$0xf]
      %v1599 = vld [vmem:[%s1592 + $0x18] sm:$0xf]
      %v1600 = vld [vmem:[%s1592 + $0x1c] sm:$0xf]
      %v1601 = vld [vmem:[%s1592 + $0x20] sm:$0xf]
      %v1602 = vld [vmem:[%s1592 + $0x24] sm:$0xf]
      %v1603 = vld [vmem:[%s1592 + $0x28] sm:$0xf]
      %v1604 = vld [vmem:[%s1592 + $0x2c] sm:$0xf]
      %v1605 = vld [vmem:[%s1592 + $0x30] sm:$0xf]
      %v1606 = vld [vmem:[%s1592 + $0x34] sm:$0xf]
      %v1607 = vld [vmem:[%s1592 + $0x38] sm:$0xf]
      %v1608 = vld [vmem:[%s1592 + $0x3c] sm:$0xf]
      %v1609 = vld [vmem:[%s1592 + $0x40] sm:$0xf]
      %v1610 = vld [vmem:[%s1592 + $0x44] sm:$0xf]
      %v1611 = vld [vmem:[%s1592 + $0x48] sm:$0xf]
      %v1612 = vld [vmem:[%s1592 + $0x4c] sm:$0xf]
      %v1613 = vld [vmem:[%s1592 + $0x50] sm:$0xf]
      %v1614 = vld [vmem:[%s1592 + $0x54] sm:$0xf]
      %v1615 = vld [vmem:[%s1592 + $0x58] sm:$0xf]
      %v1616 = vld [vmem:[%s1592 + $0x5c] sm:$0xf]
      %v1617 = vld [vmem:[%s1592 + $0x60] sm:$0xf]
      %v1618 = vld [vmem:[%s1592 + $0x64] sm:$0xf]
      %v1619 = vld [vmem:[%s1592 + $0x68] sm:$0xf]
      %v1620 = vld [vmem:[%s1592 + $0x6c] sm:$0xf]
      %v1621 = vld [vmem:[%s1592 + $0x70] sm:$0xf]
      %v1622 = vld [vmem:[%s1592 + $0x74] sm:$0xf]
      %v1623 = vld [vmem:[%s1592 + $0x78] sm:$0xf]
      %v1624 = vld [vmem:[%s1592 + $0x7c] sm:$0xf]
      %v1625 = vld [vmem:[%s1592 + $0x80] sm:$0xf]
      %v1626 = vld [vmem:[%s1592 + $0x84] sm:$0xf]
      %v1627 = vld [vmem:[%s1592 + $0x88] sm:$0xf]
      %v1628 = vld [vmem:[%s1592 + $0x8c] sm:$0xf]
      %v1629 = vld [vmem:[%s1592 + $0x90] sm:$0xf]
      %v1630 = vld [vmem:[%s1592 + $0x94] sm:$0xf]
      %v1631 = vld [vmem:[%s1592 + $0x98] sm:$0xf]
      %v1632 = vld [vmem:[%s1592 + $0x9c] sm:$0xf]
      %v1633 = vld [vmem:[%s1592 + $0xa0] sm:$0xf]
      %v1634 = vld [vmem:[%s1592 + $0xa4] sm:$0xf]
      %v1635 = vld [vmem:[%s1592 + $0xa8] sm:$0xf]
      %v1636 = vld [vmem:[%s1592 + $0xac] sm:$0xf]
      %v1637 = vld [vmem:[%s1592 + $0xb0] sm:$0xf]
      %v1638 = vld [vmem:[%s1592 + $0xb4] sm:$0xf]
      %v1639 = vld [vmem:[%s1592 + $0xb8] sm:$0xf]
      %v1640 = vld [vmem:[%s1592 + $0xbc] sm:$0xf]
      %v1689 = vunpack.c.l.b16 %v1593
      %v1690 = vunpack.c.l.b16 %v1594
      %v1691 = vunpack.c.l.b16 %v1595
      %v1692 = vunpack.c.l.b16 %v1596
      %v1693 = vunpack.c.l.b16 %v1597
      %v1694 = vunpack.c.l.b16 %v1598
      %v1695 = vunpack.c.l.b16 %v1599
      %v1696 = vunpack.c.l.b16 %v1600
      %v1697 = vunpack.c.l.b16 %v1601
      %v1698 = vunpack.c.l.b16 %v1602
      %v1699 = vunpack.c.l.b16 %v1603
      %v1700 = vunpack.c.l.b16 %v1604
      %v1701 = vunpack.c.l.b16 %v1605
      %v1702 = vunpack.c.l.b16 %v1606
      %v1703 = vunpack.c.l.b16 %v1607
      %v1704 = vunpack.c.l.b16 %v1608
      %v1705 = vunpack.c.l.b16 %v1609
      %v1706 = vunpack.c.l.b16 %v1610
      %v1707 = vunpack.c.l.b16 %v1611
      %v1708 = vunpack.c.l.b16 %v1612
      %v1709 = vunpack.c.l.b16 %v1613
      %v1710 = vunpack.c.l.b16 %v1614
      %v1711 = vunpack.c.l.b16 %v1615
      %v1712 = vunpack.c.l.b16 %v1616
      %v1713 = vunpack.c.l.b16 %v1617
      %v1714 = vunpack.c.l.b16 %v1618
      %v1715 = vunpack.c.l.b16 %v1619
      %v1716 = vunpack.c.l.b16 %v1620
      %v1717 = vunpack.c.l.b16 %v1621
      %v1718 = vunpack.c.l.b16 %v1622
      %v1719 = vunpack.c.l.b16 %v1623
      %v1720 = vunpack.c.l.b16 %v1624
      %v1721 = vunpack.c.l.b16 %v1625
      %v1722 = vunpack.c.l.b16 %v1626
      %v1723 = vunpack.c.l.b16 %v1627
      %v1724 = vunpack.c.l.b16 %v1628
      %v1725 = vunpack.c.l.b16 %v1629
      %v1726 = vunpack.c.l.b16 %v1630
      %v1727 = vunpack.c.l.b16 %v1631
      %v1728 = vunpack.c.l.b16 %v1632
      %v1729 = vunpack.c.l.b16 %v1633
      %v1730 = vunpack.c.l.b16 %v1634
      %v1731 = vunpack.c.l.b16 %v1635
      %v1732 = vunpack.c.l.b16 %v1636
      %v1733 = vunpack.c.l.b16 %v1637
      %v1734 = vunpack.c.l.b16 %v1638
      %v1735 = vunpack.c.l.b16 %v1639
      %v1736 = vunpack.c.l.b16 %v1640
      %v1737 = vpack.c.b16 %v1690, %v1689
      %v1738 = vpack.c.b16 %v1692, %v1691
      %v1739 = vpack.c.b16 %v1694, %v1693
      %v1740 = vpack.c.b16 %v1696, %v1695
      %v1741 = vpack.c.b16 %v1698, %v1697
      %v1742 = vpack.c.b16 %v1700, %v1699
      %v1743 = vpack.c.b16 %v1702, %v1701
      %v1744 = vpack.c.b16 %v1704, %v1703
      %v1745 = vpack.c.b16 %v1706, %v1705
      %v1746 = vpack.c.b16 %v1708, %v1707
      %v1747 = vpack.c.b16 %v1710, %v1709
      %v1748 = vpack.c.b16 %v1712, %v1711
      %v1749 = vpack.c.b16 %v1714, %v1713
      %v1750 = vpack.c.b16 %v1716, %v1715
      %v1751 = vpack.c.b16 %v1718, %v1717
      %v1752 = vpack.c.b16 %v1720, %v1719
      %v1753 = vpack.c.b16 %v1722, %v1721
      %v1754 = vpack.c.b16 %v1724, %v1723
      %v1755 = vpack.c.b16 %v1726, %v1725
      %v1756 = vpack.c.b16 %v1728, %v1727
      %v1757 = vpack.c.b16 %v1730, %v1729
      %v1758 = vpack.c.b16 %v1732, %v1731
      %v1759 = vpack.c.b16 %v1734, %v1733
      %v1760 = vpack.c.b16 %v1736, %v1735
      %1785 = vmatprep.subr.bf16.mxu0 0
      %1786 = vmatpush1.bf16.msra.mxu0 %v1737
      %1787 = vmatprep.subr.bf16.mxu0 0
      %1788 = vmatpush1.bf16.msra.mxu0 %v1738
      %1789 = vmatprep.subr.bf16.mxu0 0
      %1790 = vmatpush1.bf16.msra.mxu0 %v1739
      %1791 = vmatprep.subr.bf16.mxu0 0
      %1792 = vmatpush1.bf16.msra.mxu0 %v1740
      %1793 = vmatprep.subr.bf16.mxu0 0
      %1794 = vmatpush1.bf16.msra.mxu0 %v1741
      %1795 = vmatprep.subr.bf16.mxu0 0
      %1796 = vmatpush1.bf16.msra.mxu0 %v1742
      %1797 = vmatprep.subr.bf16.mxu0 0
      %1798 = vmatpush1.bf16.msra.mxu0 %v1743
      %1799 = vmatprep.subr.bf16.mxu0 0
      %1800 = vmatpush1.bf16.msra.mxu0 %v1744
      %1801 = vmatprep.subr.bf16.mxu0 0
      %1802 = vmatpush1.bf16.msra.mxu0 %v1745
      %1803 = vmatprep.subr.bf16.mxu0 0
      %1804 = vmatpush1.bf16.msra.mxu0 %v1746
      %1805 = vmatprep.subr.bf16.mxu0 0
      %1806 = vmatpush1.bf16.msra.mxu0 %v1747
      %1807 = vmatprep.subr.bf16.mxu0 0
      %1808 = vmatpush1.bf16.msra.mxu0 %v1748
      %1809 = vmatprep.subr.bf16.mxu0 0
      %1810 = vmatpush1.bf16.msra.mxu0 %v1749
      %1811 = vmatprep.subr.bf16.mxu0 0
      %1812 = vmatpush1.bf16.msra.mxu0 %v1750
      %1813 = vmatprep.subr.bf16.mxu0 0
      %1814 = vmatpush1.bf16.msra.mxu0 %v1751
      %1815 = vmatprep.subr.bf16.mxu0 0
      %1816 = vmatpush1.bf16.msra.mxu0 %v1752
      %1817 = vmatprep.mubr.bf16.mxu0 %v1509
      %1818 = vmatmul.mubr.bf16.gmra.mrb[0].mxu0 %v1491
      %v1819 = vpop.f32.mrb[0].mxu0
      %v1820 = vadd.f32 0.0, %v1819
      %v1821 = vpop.f32.mrb[0].mxu0
      %v1822 = vpop.f32.mrb[0].mxu0
      %v1823 = vadd.f32 0.0, %v1822
      %v1824 = vpop.f32.mrb[0].mxu0
      %1825 = vmatprep.mubr.bf16.mxu0 %v1510
      %1826 = vmatmul.mubr.bf16.gmra.mrb[0].mxu0 %v1492
      %v1827 = vpop.f32.mrb[0].mxu0
      %v1828 = vadd.f32 0.0, %v1827
      %v1829 = vpop.f32.mrb[0].mxu0
      %v1830 = vpop.f32.mrb[0].mxu0
      %v1831 = vadd.f32 0.0, %v1830
      %v1832 = vpop.f32.mrb[0].mxu0
      %1833 = vmatprep.mubr.bf16.mxu0 %v1511
      %1834 = vmatmul.mubr.bf16.gmra.mrb[0].mxu0 %v1493
      %v1835 = vpop.f32.mrb[0].mxu0
      %v1836 = vadd.f32 0.0, %v1835
      %v1837 = vpop.f32.mrb[0].mxu0
      %v1838 = vpop.f32.mrb[0].mxu0
      %v1839 = vadd.f32 0.0, %v1838
      %v1840 = vpop.f32.mrb[0].mxu0
      %1841 = vmatprep.mubr.bf16.mxu0 %v1512
      %1842 = vmatmul.mubr.bf16.gmra.mrb[0].mxu0 %v1494
      %v1843 = vpop.f32.mrb[0].mxu0
      %v1844 = vadd.f32 0.0, %v1843
      %v1845 = vpop.f32.mrb[0].mxu0
      %v1846 = vpop.f32.mrb[0].mxu0
      %v1847 = vadd.f32 0.0, %v1846
      %v1848 = vpop.f32.mrb[0].mxu0
      %1849 = vmatprep.mubr.bf16.mxu0 %v1513
      %1850 = vmatmul.mubr.bf16.gmra.mrb[0].mxu0 %v1495
      %v1851 = vpop.f32.mrb[0].mxu0
      %v1852 = vadd.f32 0.0, %v1851
      %v1853 = vpop.f32.mrb[0].mxu0
      %v1854 = vpop.f32.mrb[0].mxu0
      %v1855 = vadd.f32 0.0, %v1854
      %v1856 = vpop.f32.mrb[0].mxu0
      %1857 = vmatprep.mubr.bf16.mxu0 %v1514
      %1858 = vmatmul.mubr.bf16.gmra.mrb[0].mxu0 %v1496
      %v1859 = vpop.f32.mrb[0].mxu0
      %v1860 = vadd.f32 0.0, %v1859
      %v1861 = vpop.f32.mrb[0].mxu0
      %v1862 = vpop.f32.mrb[0].mxu0
      %v1863 = vadd.f32 0.0, %v1862
      %v1864 = vpop.f32.mrb[0].mxu0
      %1865 = vmatprep.mubr.bf16.mxu0 %v1515
      %1866 = vmatmul.mubr.bf16.gmra.mrb[0].mxu0 %v1497
      %v1867 = vpop.f32.mrb[0].mxu0
      %v1868 = vadd.f32 0.0, %v1867
      %v1869 = vpop.f32.mrb[0].mxu0
      %v1870 = vpop.f32.mrb[0].mxu0
      %v1871 = vadd.f32 0.0, %v1870
      %v1872 = vpop.f32.mrb[0].mxu0
      %1873 = vmatprep.mubr.bf16.mxu0 %v1516
      %1874 = vmatmul.mubr.bf16.gmra.mrb[0].mxu0 %v1498
      %v1875 = vpop.f32.mrb[0].mxu0
      %v1876 = vadd.f32 0.0, %v1875
      %v1877 = vpop.f32.mrb[0].mxu0
      %v1878 = vpop.f32.mrb[0].mxu0
      %v1879 = vadd.f32 0.0, %v1878
      %v1880 = vpop.f32.mrb[0].mxu0
      %1881 = vmatprep.mubr.bf16.mxu0 %v1517
      %1882 = vmatmul.mubr.bf16.gmra.mrb[0].mxu0 %v1499
      %v1883 = vpop.f32.mrb[0].mxu0
      %v1884 = vadd.f32 0.0, %v1883
      %v1885 = vpop.f32.mrb[0].mxu0
      %v1886 = vpop.f32.mrb[0].mxu0
      %v1887 = vadd.f32 0.0, %v1886
      %v1888 = vpop.f32.mrb[0].mxu0
      %1889 = vmatprep.mubr.bf16.mxu0 %v1518
      %1890 = vmatmul.mubr.bf16.gmra.mrb[0].mxu0 %v1500
      %v1891 = vpop.f32.mrb[0].mxu0
      %v1892 = vadd.f32 0.0, %v1891
      %v1893 = vpop.f32.mrb[0].mxu0
      %v1894 = vpop.f32.mrb[0].mxu0
      %v1895 = vadd.f32 0.0, %v1894
      %v1896 = vpop.f32.mrb[0].mxu0
      %1897 = vmatprep.mubr.bf16.mxu0 %v1519
      %1898 = vmatmul.mubr.bf16.gmra.mrb[0].mxu0 %v1501
      %v1899 = vpop.f32.mrb[0].mxu0
      %v1900 = vadd.f32 0.0, %v1899
      %v1901 = vpop.f32.mrb[0].mxu0
      %v1902 = vpop.f32.mrb[0].mxu0
      %v1903 = vadd.f32 0.0, %v1902
      %v1904 = vpop.f32.mrb[0].mxu0
      %1905 = vmatprep.mubr.bf16.mxu0 %v1520
      %1906 = vmatmul.mubr.bf16.gmra.mrb[0].mxu0 %v1502
      %v1907 = vpop.f32.mrb[0].mxu0
      %v1908 = vadd.f32 0.0, %v1907
      %v1909 = vpop.f32.mrb[0].mxu0
      %v1910 = vpop.f32.mrb[0].mxu0
      %v1911 = vadd.f32 0.0, %v1910
      %v1912 = vpop.f32.mrb[0].mxu0
      %1913 = vmatprep.mubr.bf16.mxu0 %v1521
      %1914 = vmatmul.mubr.bf16.gmra.mrb[0].mxu0 %v1503
      %v1915 = vpop.f32.mrb[0].mxu0
      %v1916 = vadd.f32 0.0, %v1915
      %v1917 = vpop.f32.mrb[0].mxu0
      %v1918 = vpop.f32.mrb[0].mxu0
      %v1919 = vadd.f32 0.0, %v1918
      %v1920 = vpop.f32.mrb[0].mxu0
      %1921 = vmatprep.mubr.bf16.mxu0 %v1522
      %1922 = vmatmul.mubr.bf16.gmra.mrb[0].mxu0 %v1504
      %v1923 = vpop.f32.mrb[0].mxu0
      %v1924 = vadd.f32 0.0, %v1923
      %v1925 = vpop.f32.mrb[0].mxu0
      %v1926 = vpop.f32.mrb[0].mxu0
      %v1927 = vadd.f32 0.0, %v1926
      %v1928 = vpop.f32.mrb[0].mxu0
      %1929 = vmatprep.mubr.bf16.mxu0 %v1523
      %1930 = vmatmul.mubr.bf16.gmra.mrb[0].mxu0 %v1505
      %v1931 = vpop.f32.mrb[0].mxu0
      %v1932 = vadd.f32 0.0, %v1931
      %v1933 = vpop.f32.mrb[0].mxu0
      %v1934 = vpop.f32.mrb[0].mxu0
      %v1935 = vadd.f32 0.0, %v1934
      %v1936 = vpop.f32.mrb[0].mxu0
      %1937 = vmatprep.mubr.bf16.mxu0 %v1524
      %1938 = vmatmul.mubr.bf16.gmra.mrb[0].mxu0 %v1506
      %v1939 = vpop.f32.mrb[0].mxu0
      %v1940 = vadd.f32 0.0, %v1939
      %v1941 = vpop.f32.mrb[0].mxu0
      %v1942 = vpop.f32.mrb[0].mxu0
      %v1943 = vadd.f32 0.0, %v1942
      %v1944 = vpop.f32.mrb[0].mxu0
      %1945 = vdwg.mxu0
      %1946 = vmatprep.subr.bf16.mxu0 0
      %1947 = vmatpush1.bf16.msra.mxu0 %v1753
      %1948 = vmatprep.subr.bf16.mxu0 0
      %1949 = vmatpush1.bf16.msra.mxu0 %v1754
      %1950 = vmatprep.subr.bf16.mxu0 0
      %1951 = vmatpush1.bf16.msra.mxu0 %v1755
      %1952 = vmatprep.subr.bf16.mxu0 0
      %1953 = vmatpush1.bf16.msra.mxu0 %v1756
      %1954 = vmatprep.subr.bf16.mxu0 0
      %1955 = vmatpush1.bf16.msra.mxu0 %v1757
      %1956 = vmatprep.subr.bf16.mxu0 0
      %1957 = vmatpush1.bf16.msra.mxu0 %v1758
      %1958 = vmatprep.subr.bf16.mxu0 0
      %1959 = vmatpush1.bf16.msra.mxu0 %v1759
      %1960 = vmatprep.subr.bf16.mxu0 0
      %1961 = vmatpush1.bf16.msra.mxu0 %v1760
      %1962 = vmatprep.subr.bf16.mxu0 0
      %1963 = vmatpush1.bf16.msra.mxu0 0
      %1964 = vmatprep.subr.bf16.mxu0 0
      %1965 = vmatpush1.bf16.msra.mxu0 0
      %1966 = vmatprep.subr.bf16.mxu0 0
      %1967 = vmatpush1.bf16.msra.mxu0 0
      %1968 = vmatprep.subr.bf16.mxu0 0
      %1969 = vmatpush1.bf16.msra.mxu0 0
      %1970 = vmatprep.subr.bf16.mxu0 0
      %1971 = vmatpush1.bf16.msra.mxu0 0
      %1972 = vmatprep.subr.bf16.mxu0 0
      %1973 = vmatpush1.bf16.msra.mxu0 0
      %1974 = vmatprep.subr.bf16.mxu0 0
      %1975 = vmatpush1.bf16.msra.mxu0 0
      %1976 = vmatprep.subr.bf16.mxu0 0
      %1977 = vmatpush1.bf16.msra.mxu0 0
      %1978 = vmatprep.mubr.bf16.mxu0 0
      %1979 = vmatmul.mubr.bf16.gmra.mrb[0].mxu0 %v1527
      %v1980 = vpop.f32.mrb[0].mxu0
      %v1981 = vadd.f32 %v1820, %v1980
      %v1982 = vpop.f32.mrb[0].mxu0
      %v1983 = vpop.f32.mrb[0].mxu0
      %v1984 = vadd.f32 %v1823, %v1983
      %v1985 = vpop.f32.mrb[0].mxu0
      %1986 = vmatprep.mubr.bf16.mxu0 0
      %1987 = vmatmul.mubr.bf16.gmra.mrb[0].mxu0 %v1528
      %v1988 = vpop.f32.mrb[0].mxu0
      %v1989 = vadd.f32 %v1828, %v1988
      %v1990 = vpop.f32.mrb[0].mxu0
      %v1991 = vpop.f32.mrb[0].mxu0
      %v1992 = vadd.f32 %v1831, %v1991
      %v1993 = vpop.f32.mrb[0].mxu0
      %1994 = vmatprep.mubr.bf16.mxu0 0
      %1995 = vmatmul.mubr.bf16.gmra.mrb[0].mxu0 %v1529
      %v1996 = vpop.f32.mrb[0].mxu0
      %v1997 = vadd.f32 %v1836, %v1996
      %v1998 = vpop.f32.mrb[0].mxu0
      %v1999 = vpop.f32.mrb[0].mxu0
      %v2000 = vadd.f32 %v1839, %v1999
      %v2001 = vpop.f32.mrb[0].mxu0
      %2002 = vmatprep.mubr.bf16.mxu0 0
      %2003 = vmatmul.mubr.bf16.gmra.mrb[0].mxu0 %v1530
      %v2004 = vpop.f32.mrb[0].mxu0
      %v2005 = vadd.f32 %v1844, %v2004
      %v2006 = vpop.f32.mrb[0].mxu0
      %v2007 = vpop.f32.mrb[0].mxu0
      %v2008 = vadd.f32 %v1847, %v2007
      %v2009 = vpop.f32.mrb[0].mxu0
      %2010 = vmatprep.mubr.bf16.mxu0 0
      %2011 = vmatmul.mubr.bf16.gmra.mrb[0].mxu0 %v1531
      %v2012 = vpop.f32.mrb[0].mxu0
      %v2013 = vadd.f32 %v1852, %v2012
      %v2014 = vpop.f32.mrb[0].mxu0
      %v2015 = vpop.f32.mrb[0].mxu0
      %v2016 = vadd.f32 %v1855, %v2015
      %v2017 = vpop.f32.mrb[0].mxu0
      %2018 = vmatprep.mubr.bf16.mxu0 0
      %2019 = vmatmul.mubr.bf16.gmra.mrb[0].mxu0 %v1532
      %v2020 = vpop.f32.mrb[0].mxu0
      %v2021 = vadd.f32 %v1860, %v2020
      %v2022 = vpop.f32.mrb[0].mxu0
      %v2023 = vpop.f32.mrb[0].mxu0
      %v2024 = vadd.f32 %v1863, %v2023
      %v2025 = vpop.f32.mrb[0].mxu0
      %2026 = vmatprep.mubr.bf16.mxu0 0
      %2027 = vmatmul.mubr.bf16.gmra.mrb[0].mxu0 %v1533
      %v2028 = vpop.f32.mrb[0].mxu0
      %v2029 = vadd.f32 %v1868, %v2028
      %v2030 = vpop.f32.mrb[0].mxu0
      %v2031 = vpop.f32.mrb[0].mxu0
      %v2032 = vadd.f32 %v1871, %v2031
      %v2033 = vpop.f32.mrb[0].mxu0
      %2034 = vmatprep.mubr.bf16.mxu0 0
      %2035 = vmatmul.mubr.bf16.gmra.mrb[0].mxu0 %v1534
      %v2036 = vpop.f32.mrb[0].mxu0
      %v2037 = vadd.f32 %v1876, %v2036
      %v2038 = vpop.f32.mrb[0].mxu0
      %v2039 = vpop.f32.mrb[0].mxu0
      %v2040 = vadd.f32 %v1879, %v2039
      %v2041 = vpop.f32.mrb[0].mxu0
      %2042 = vmatprep.mubr.bf16.mxu0 0
      %2043 = vmatmul.mubr.bf16.gmra.mrb[0].mxu0 %v1535
      %v2044 = vpop.f32.mrb[0].mxu0
      %v2045 = vadd.f32 %v1884, %v2044
      %v2046 = vpop.f32.mrb[0].mxu0
      %v2047 = vpop.f32.mrb[0].mxu0
      %v2048 = vadd.f32 %v1887, %v2047
      %v2049 = vpop.f32.mrb[0].mxu0
      %2050 = vmatprep.mubr.bf16.mxu0 0
      %2051 = vmatmul.mubr.bf16.gmra.mrb[0].mxu0 %v1536
      %v2052 = vpop.f32.mrb[0].mxu0
      %v2053 = vadd.f32 %v1892, %v2052
      %v2054 = vpop.f32.mrb[0].mxu0
      %v2055 = vpop.f32.mrb[0].mxu0
      %v2056 = vadd.f32 %v1895, %v2055
      %v2057 = vpop.f32.mrb[0].mxu0
      %2058 = vmatprep.mubr.bf16.mxu0 0
      %2059 = vmatmul.mubr.bf16.gmra.mrb[0].mxu0 %v1537
      %v2060 = vpop.f32.mrb[0].mxu0
      %v2061 = vadd.f32 %v1900, %v2060
      %v2062 = vpop.f32.mrb[0].mxu0
      %v2063 = vpop.f32.mrb[0].mxu0
      %v2064 = vadd.f32 %v1903, %v2063
      %v2065 = vpop.f32.mrb[0].mxu0
      %2066 = vmatprep.mubr.bf16.mxu0 0
      %2067 = vmatmul.mubr.bf16.gmra.mrb[0].mxu0 %v1538
      %v2068 = vpop.f32.mrb[0].mxu0
      %v2069 = vadd.f32 %v1908, %v2068
      %v2070 = vpop.f32.mrb[0].mxu0
      %v2071 = vpop.f32.mrb[0].mxu0
      %v2072 = vadd.f32 %v1911, %v2071
      %v2073 = vpop.f32.mrb[0].mxu0
      %2074 = vmatprep.mubr.bf16.mxu0 0
      %2075 = vmatmul.mubr.bf16.gmra.mrb[0].mxu0 %v1539
      %v2076 = vpop.f32.mrb[0].mxu0
      %v2077 = vadd.f32 %v1916, %v2076
      %v2078 = vpop.f32.mrb[0].mxu0
      %v2079 = vpop.f32.mrb[0].mxu0
      %v2080 = vadd.f32 %v1919, %v2079
      %v2081 = vpop.f32.mrb[0].mxu0
      %2082 = vmatprep.mubr.bf16.mxu0 0
      %2083 = vmatmul.mubr.bf16.gmra.mrb[0].mxu0 %v1540
      %v2084 = vpop.f32.mrb[0].mxu0
      %v2085 = vadd.f32 %v1924, %v2084
      %v2086 = vpop.f32.mrb[0].mxu0
      %v2087 = vpop.f32.mrb[0].mxu0
      %v2088 = vadd.f32 %v1927, %v2087
      %v2089 = vpop.f32.mrb[0].mxu0
      %2090 = vmatprep.mubr.bf16.mxu0 0
      %2091 = vmatmul.mubr.bf16.gmra.mrb[0].mxu0 %v1541
      %v2092 = vpop.f32.mrb[0].mxu0
      %v2093 = vadd.f32 %v1932, %v2092
      %v2094 = vpop.f32.mrb[0].mxu0
      %v2095 = vpop.f32.mrb[0].mxu0
      %v2096 = vadd.f32 %v1935, %v2095
      %v2097 = vpop.f32.mrb[0].mxu0
      %2098 = vmatprep.mubr.bf16.mxu0 0
      %2099 = vmatmul.mubr.bf16.gmra.mrb[0].mxu0 %v1542
      %v2100 = vpop.f32.mrb[0].mxu0
      %v2101 = vadd.f32 %v1940, %v2100
      %v2102 = vpop.f32.mrb[0].mxu0
      %v2103 = vpop.f32.mrb[0].mxu0
      %v2104 = vadd.f32 %v1943, %v2103
      %v2105 = vpop.f32.mrb[0].mxu0
      %2106 = vdwg.mxu0
      %v2155 = vunpack.c.l.b16 %v1544
      %v2156 = vunpack.c.l.b16 %v1545
      %v2157 = vunpack.c.l.b16 %v1546
      %v2158 = vunpack.c.l.b16 %v1547
      %v2159 = vunpack.c.l.b16 %v1548
      %v2160 = vunpack.c.l.b16 %v1549
      %v2161 = vunpack.c.l.b16 %v1550
      %v2162 = vunpack.c.l.b16 %v1551
      %v2163 = vunpack.c.l.b16 %v1552
      %v2164 = vunpack.c.l.b16 %v1553
      %v2165 = vunpack.c.l.b16 %v1554
      %v2166 = vunpack.c.l.b16 %v1555
      %v2167 = vunpack.c.l.b16 %v1556
      %v2168 = vunpack.c.l.b16 %v1557
      %v2169 = vunpack.c.l.b16 %v1558
      %v2170 = vunpack.c.l.b16 %v1559
      %v2171 = vunpack.c.l.b16 %v1560
      %v2172 = vunpack.c.l.b16 %v1561
      %v2173 = vunpack.c.l.b16 %v1562
      %v2174 = vunpack.c.l.b16 %v1563
      %v2175 = vunpack.c.l.b16 %v1564
      %v2176 = vunpack.c.l.b16 %v1565
      %v2177 = vunpack.c.l.b16 %v1566
      %v2178 = vunpack.c.l.b16 %v1567
      %v2179 = vunpack.c.l.b16 %v1568
      %v2180 = vunpack.c.l.b16 %v1569
      %v2181 = vunpack.c.l.b16 %v1570
      %v2182 = vunpack.c.l.b16 %v1571
      %v2183 = vunpack.c.l.b16 %v1572
      %v2184 = vunpack.c.l.b16 %v1573
      %v2185 = vunpack.c.l.b16 %v1574
      %v2186 = vunpack.c.l.b16 %v1575
      %v2187 = vunpack.c.l.b16 %v1576
      %v2188 = vunpack.c.l.b16 %v1577
      %v2189 = vunpack.c.l.b16 %v1578
      %v2190 = vunpack.c.l.b16 %v1579
      %v2191 = vunpack.c.l.b16 %v1580
      %v2192 = vunpack.c.l.b16 %v1581
      %v2193 = vunpack.c.l.b16 %v1582
      %v2194 = vunpack.c.l.b16 %v1583
      %v2195 = vunpack.c.l.b16 %v1584
      %v2196 = vunpack.c.l.b16 %v1585
      %v2197 = vunpack.c.l.b16 %v1586
      %v2198 = vunpack.c.l.b16 %v1587
      %v2199 = vunpack.c.l.b16 %v1588
      %v2200 = vunpack.c.l.b16 %v1589
      %v2201 = vunpack.c.l.b16 %v1590
      %v2202 = vunpack.c.l.b16 %v1591
      %v2203 = vpack.c.b16 %v2156, %v2155
      %v2204 = vpack.c.b16 %v2158, %v2157
      %v2205 = vpack.c.b16 %v2160, %v2159
      %v2206 = vpack.c.b16 %v2162, %v2161
      %v2207 = vpack.c.b16 %v2164, %v2163
      %v2208 = vpack.c.b16 %v2166, %v2165
      %v2209 = vpack.c.b16 %v2168, %v2167
      %v2210 = vpack.c.b16 %v2170, %v2169
      %v2211 = vpack.c.b16 %v2172, %v2171
      %v2212 = vpack.c.b16 %v2174, %v2173
      %v2213 = vpack.c.b16 %v2176, %v2175
      %v2214 = vpack.c.b16 %v2178, %v2177
      %v2215 = vpack.c.b16 %v2180, %v2179
      %v2216 = vpack.c.b16 %v2182, %v2181
      %v2217 = vpack.c.b16 %v2184, %v2183
      %v2218 = vpack.c.b16 %v2186, %v2185
      %v2219 = vpack.c.b16 %v2188, %v2187
      %v2220 = vpack.c.b16 %v2190, %v2189
      %v2221 = vpack.c.b16 %v2192, %v2191
      %v2222 = vpack.c.b16 %v2194, %v2193
      %v2223 = vpack.c.b16 %v2196, %v2195
      %v2224 = vpack.c.b16 %v2198, %v2197
      %v2225 = vpack.c.b16 %v2200, %v2199
      %v2226 = vpack.c.b16 %v2202, %v2201
      %2251 = vmatprep.subr.bf16.mxu0 0
      %2252 = vmatpush1.bf16.msra.mxu0 %v2203
      %2253 = vmatprep.subr.bf16.mxu0 0
      %2254 = vmatpush1.bf16.msra.mxu0 %v2204
      %2255 = vmatprep.subr.bf16.mxu0 0
      %2256 = vmatpush1.bf16.msra.mxu0 %v2205
      %2257 = vmatprep.subr.bf16.mxu0 0
      %2258 = vmatpush1.bf16.msra.mxu0 %v2206
      %2259 = vmatprep.subr.bf16.mxu0 0
      %2260 = vmatpush1.bf16.msra.mxu0 %v2207
      %2261 = vmatprep.subr.bf16.mxu0 0
      %2262 = vmatpush1.bf16.msra.mxu0 %v2208
      %2263 = vmatprep.subr.bf16.mxu0 0
      %2264 = vmatpush1.bf16.msra.mxu0 %v2209
      %2265 = vmatprep.subr.bf16.mxu0 0
      %2266 = vmatpush1.bf16.msra.mxu0 %v2210
      %2267 = vmatprep.subr.bf16.mxu0 0
      %2268 = vmatpush1.bf16.msra.mxu0 %v2211
      %2269 = vmatprep.subr.bf16.mxu0 0
      %2270 = vmatpush1.bf16.msra.mxu0 %v2212
      %2271 = vmatprep.subr.bf16.mxu0 0
      %2272 = vmatpush1.bf16.msra.mxu0 %v2213
      %2273 = vmatprep.subr.bf16.mxu0 0
      %2274 = vmatpush1.bf16.msra.mxu0 %v2214
      %2275 = vmatprep.subr.bf16.mxu0 0
      %2276 = vmatpush1.bf16.msra.mxu0 %v2215
      %2277 = vmatprep.subr.bf16.mxu0 0
      %2278 = vmatpush1.bf16.msra.mxu0 %v2216
      %2279 = vmatprep.subr.bf16.mxu0 0
      %2280 = vmatpush1.bf16.msra.mxu0 %v2217
      %2281 = vmatprep.subr.bf16.mxu0 0
      %2282 = vmatpush1.bf16.msra.mxu0 %v2218
      %2283 = vmatprep.mubr.bf16.mxu0 %v1508
      %2284 = vmatmul.mubr.bf16.gmra.mrb[0].mxu0 %v1490
      %v2285 = vpop.f32.mrb[0].mxu0
      %v2286 = vadd.f32 %v1981, %v2285
      %v2287 = vpop.f32.mrb[0].mxu0
      %v2288 = vpop.f32.mrb[0].mxu0
      %v2289 = vadd.f32 %v1984, %v2288
      %v2290 = vpop.f32.mrb[0].mxu0
      %2291 = vmatprep.mubr.bf16.mxu0 %v1509
      %2292 = vmatmul.mubr.bf16.gmra.mrb[0].mxu0 %v1491
      %v2293 = vpop.f32.mrb[0].mxu0
      %v2294 = vadd.f32 %v1989, %v2293
      %v2295 = vpop.f32.mrb[0].mxu0
      %v2296 = vpop.f32.mrb[0].mxu0
      %v2297 = vadd.f32 %v1992, %v2296
      %v2298 = vpop.f32.mrb[0].mxu0
      %2299 = vmatprep.mubr.bf16.mxu0 %v1510
      %2300 = vmatmul.mubr.bf16.gmra.mrb[0].mxu0 %v1492
      %v2301 = vpop.f32.mrb[0].mxu0
      %v2302 = vadd.f32 %v1997, %v2301
      %v2303 = vpop.f32.mrb[0].mxu0
      %v2304 = vpop.f32.mrb[0].mxu0
      %v2305 = vadd.f32 %v2000, %v2304
      %v2306 = vpop.f32.mrb[0].mxu0
      %2307 = vmatprep.mubr.bf16.mxu0 %v1511
      %2308 = vmatmul.mubr.bf16.gmra.mrb[0].mxu0 %v1493
      %v2309 = vpop.f32.mrb[0].mxu0
      %v2310 = vadd.f32 %v2005, %v2309
      %v2311 = vpop.f32.mrb[0].mxu0
      %v2312 = vpop.f32.mrb[0].mxu0
      %v2313 = vadd.f32 %v2008, %v2312
      %v2314 = vpop.f32.mrb[0].mxu0
      %2315 = vmatprep.mubr.bf16.mxu0 %v1512
      %2316 = vmatmul.mubr.bf16.gmra.mrb[0].mxu0 %v1494
      %v2317 = vpop.f32.mrb[0].mxu0
      %v2318 = vadd.f32 %v2013, %v2317
      %v2319 = vpop.f32.mrb[0].mxu0
      %v2320 = vpop.f32.mrb[0].mxu0
      %v2321 = vadd.f32 %v2016, %v2320
      %v2322 = vpop.f32.mrb[0].mxu0
      %2323 = vmatprep.mubr.bf16.mxu0 %v1513
      %2324 = vmatmul.mubr.bf16.gmra.mrb[0].mxu0 %v1495
      %v2325 = vpop.f32.mrb[0].mxu0
      %v2326 = vadd.f32 %v2021, %v2325
      %v2327 = vpop.f32.mrb[0].mxu0
      %v2328 = vpop.f32.mrb[0].mxu0
      %v2329 = vadd.f32 %v2024, %v2328
      %v2330 = vpop.f32.mrb[0].mxu0
      %2331 = vmatprep.mubr.bf16.mxu0 %v1514
      %2332 = vmatmul.mubr.bf16.gmra.mrb[0].mxu0 %v1496
      %v2333 = vpop.f32.mrb[0].mxu0
      %v2334 = vadd.f32 %v2029, %v2333
      %v2335 = vpop.f32.mrb[0].mxu0
      %v2336 = vpop.f32.mrb[0].mxu0
      %v2337 = vadd.f32 %v2032, %v2336
      %v2338 = vpop.f32.mrb[0].mxu0
      %2339 = vmatprep.mubr.bf16.mxu0 %v1515
      %2340 = vmatmul.mubr.bf16.gmra.mrb[0].mxu0 %v1497
      %v2341 = vpop.f32.mrb[0].mxu0
      %v2342 = vadd.f32 %v2037, %v2341
      %v2343 = vpop.f32.mrb[0].mxu0
      %v2344 = vpop.f32.mrb[0].mxu0
      %v2345 = vadd.f32 %v2040, %v2344
      %v2346 = vpop.f32.mrb[0].mxu0
      %2347 = vmatprep.mubr.bf16.mxu0 %v1516
      %2348 = vmatmul.mubr.bf16.gmra.mrb[0].mxu0 %v1498
      %v2349 = vpop.f32.mrb[0].mxu0
      %v2350 = vadd.f32 %v2045, %v2349
      %v2351 = vpop.f32.mrb[0].mxu0
      %v2352 = vpop.f32.mrb[0].mxu0
      %v2353 = vadd.f32 %v2048, %v2352
      %v2354 = vpop.f32.mrb[0].mxu0
      %2355 = vmatprep.mubr.bf16.mxu0 %v1517
      %2356 = vmatmul.mubr.bf16.gmra.mrb[0].mxu0 %v1499
      %v2357 = vpop.f32.mrb[0].mxu0
      %v2358 = vadd.f32 %v2053, %v2357
      %v2359 = vpop.f32.mrb[0].mxu0
      %v2360 = vpop.f32.mrb[0].mxu0
      %v2361 = vadd.f32 %v2056, %v2360
      %v2362 = vpop.f32.mrb[0].mxu0
      %2363 = vmatprep.mubr.bf16.mxu0 %v1518
      %2364 = vmatmul.mubr.bf16.gmra.mrb[0].mxu0 %v1500
      %v2365 = vpop.f32.mrb[0].mxu0
      %v2366 = vadd.f32 %v2061, %v2365
      %v2367 = vpop.f32.mrb[0].mxu0
      %v2368 = vpop.f32.mrb[0].mxu0
      %v2369 = vadd.f32 %v2064, %v2368
      %v2370 = vpop.f32.mrb[0].mxu0
      %2371 = vmatprep.mubr.bf16.mxu0 %v1519
      %2372 = vmatmul.mubr.bf16.gmra.mrb[0].mxu0 %v1501
      %v2373 = vpop.f32.mrb[0].mxu0
      %v2374 = vadd.f32 %v2069, %v2373
      %v2375 = vpop.f32.mrb[0].mxu0
      %v2376 = vpop.f32.mrb[0].mxu0
      %v2377 = vadd.f32 %v2072, %v2376
      %v2378 = vpop.f32.mrb[0].mxu0
      %2379 = vmatprep.mubr.bf16.mxu0 %v1520
      %2380 = vmatmul.mubr.bf16.gmra.mrb[0].mxu0 %v1502
      %v2381 = vpop.f32.mrb[0].mxu0
      %v2382 = vadd.f32 %v2077, %v2381
      %v2383 = vpop.f32.mrb[0].mxu0
      %v2384 = vpop.f32.mrb[0].mxu0
      %v2385 = vadd.f32 %v2080, %v2384
      %v2386 = vpop.f32.mrb[0].mxu0
      %2387 = vmatprep.mubr.bf16.mxu0 %v1521
      %2388 = vmatmul.mubr.bf16.gmra.mrb[0].mxu0 %v1503
      %v2389 = vpop.f32.mrb[0].mxu0
      %v2390 = vadd.f32 %v2085, %v2389
      %v2391 = vpop.f32.mrb[0].mxu0
      %v2392 = vpop.f32.mrb[0].mxu0
      %v2393 = vadd.f32 %v2088, %v2392
      %v2394 = vpop.f32.mrb[0].mxu0
      %2395 = vmatprep.mubr.bf16.mxu0 %v1522
      %2396 = vmatmul.mubr.bf16.gmra.mrb[0].mxu0 %v1504
      %v2397 = vpop.f32.mrb[0].mxu0
      %v2398 = vadd.f32 %v2093, %v2397
      %v2399 = vpop.f32.mrb[0].mxu0
      %v2400 = vpop.f32.mrb[0].mxu0
      %v2401 = vadd.f32 %v2096, %v2400
      %v2402 = vpop.f32.mrb[0].mxu0
      %2403 = vmatprep.mubr.bf16.mxu0 %v1523
      %2404 = vmatmul.mubr.bf16.gmra.mrb[0].mxu0 %v1505
      %v2405 = vpop.f32.mrb[0].mxu0
      %v2406 = vadd.f32 %v2101, %v2405
      %v2407 = vpop.f32.mrb[0].mxu0
      %v2408 = vpop.f32.mrb[0].mxu0
      %v2409 = vadd.f32 %v2104, %v2408
      %v2410 = vpop.f32.mrb[0].mxu0
      %2411 = vdwg.mxu0
      %2412 = vmatprep.subr.bf16.mxu0 0
      %2413 = vmatpush1.bf16.msra.mxu0 %v2219
      %2414 = vmatprep.subr.bf16.mxu0 0
      %2415 = vmatpush1.bf16.msra.mxu0 %v2220
      %2416 = vmatprep.subr.bf16.mxu0 0
      %2417 = vmatpush1.bf16.msra.mxu0 %v2221
      %2418 = vmatprep.subr.bf16.mxu0 0
      %2419 = vmatpush1.bf16.msra.mxu0 %v2222
      %2420 = vmatprep.subr.bf16.mxu0 0
      %2421 = vmatpush1.bf16.msra.mxu0 %v2223
      %2422 = vmatprep.subr.bf16.mxu0 0
      %2423 = vmatpush1.bf16.msra.mxu0 %v2224
      %2424 = vmatprep.subr.bf16.mxu0 0
      %2425 = vmatpush1.bf16.msra.mxu0 %v2225
      %2426 = vmatprep.subr.bf16.mxu0 0
      %2427 = vmatpush1.bf16.msra.mxu0 %v2226
      %2428 = vmatprep.subr.bf16.mxu0 0
      %2429 = vmatpush1.bf16.msra.mxu0 0
      %2430 = vmatprep.subr.bf16.mxu0 0
      %2431 = vmatpush1.bf16.msra.mxu0 0
      %2432 = vmatprep.subr.bf16.mxu0 0
      %2433 = vmatpush1.bf16.msra.mxu0 0
      %2434 = vmatprep.subr.bf16.mxu0 0
      %2435 = vmatpush1.bf16.msra.mxu0 0
      %2436 = vmatprep.subr.bf16.mxu0 0
      %2437 = vmatpush1.bf16.msra.mxu0 0
      %2438 = vmatprep.subr.bf16.mxu0 0
      %2439 = vmatpush1.bf16.msra.mxu0 0
      %2440 = vmatprep.subr.bf16.mxu0 0
      %2441 = vmatpush1.bf16.msra.mxu0 0
      %2442 = vmatprep.subr.bf16.mxu0 0
      %2443 = vmatpush1.bf16.msra.mxu0 0
      %2444 = vmatprep.mubr.bf16.mxu0 0
      %2445 = vmatmul.mubr.bf16.gmra.mrb[0].mxu0 %v1526
      %v2446 = vpop.f32.mrb[0].mxu0
      %v2447 = vadd.f32 %v2286, %v2446
      %v2448 = vpop.f32.mrb[0].mxu0
      %v2449 = vpop.f32.mrb[0].mxu0
      %v2450 = vadd.f32 %v2289, %v2449
      %v2451 = vpop.f32.mrb[0].mxu0
      %2452 = vmatprep.mubr.bf16.mxu0 0
      %2453 = vmatmul.mubr.bf16.gmra.mrb[0].mxu0 %v1527
      %v2454 = vpop.f32.mrb[0].mxu0
      %v2455 = vadd.f32 %v2294, %v2454
      %v2456 = vpop.f32.mrb[0].mxu0
      %v2457 = vpop.f32.mrb[0].mxu0
      %v2458 = vadd.f32 %v2297, %v2457
      %v2459 = vpop.f32.mrb[0].mxu0
      %2460 = vmatprep.mubr.bf16.mxu0 0
      %2461 = vmatmul.mubr.bf16.gmra.mrb[0].mxu0 %v1528
      %v2462 = vpop.f32.mrb[0].mxu0
      %v2463 = vadd.f32 %v2302, %v2462
      %v2464 = vpop.f32.mrb[0].mxu0
      %v2465 = vpop.f32.mrb[0].mxu0
      %v2466 = vadd.f32 %v2305, %v2465
      %v2467 = vpop.f32.mrb[0].mxu0
      %2468 = vmatprep.mubr.bf16.mxu0 0
      %2469 = vmatmul.mubr.bf16.gmra.mrb[0].mxu0 %v1529
      %v2470 = vpop.f32.mrb[0].mxu0
      %v2471 = vadd.f32 %v2310, %v2470
      %v2472 = vpop.f32.mrb[0].mxu0
      %v2473 = vpop.f32.mrb[0].mxu0
      %v2474 = vadd.f32 %v2313, %v2473
      %v2475 = vpop.f32.mrb[0].mxu0
      %2476 = vmatprep.mubr.bf16.mxu0 0
      %2477 = vmatmul.mubr.bf16.gmra.mrb[0].mxu0 %v1530
      %v2478 = vpop.f32.mrb[0].mxu0
      %v2479 = vadd.f32 %v2318, %v2478
      %v2480 = vpop.f32.mrb[0].mxu0
      %v2481 = vpop.f32.mrb[0].mxu0
      %v2482 = vadd.f32 %v2321, %v2481
      %v2483 = vpop.f32.mrb[0].mxu0
      %2484 = vmatprep.mubr.bf16.mxu0 0
      %2485 = vmatmul.mubr.bf16.gmra.mrb[0].mxu0 %v1531
      %v2486 = vpop.f32.mrb[0].mxu0
      %v2487 = vadd.f32 %v2326, %v2486
      %v2488 = vpop.f32.mrb[0].mxu0
      %v2489 = vpop.f32.mrb[0].mxu0
      %v2490 = vadd.f32 %v2329, %v2489
      %v2491 = vpop.f32.mrb[0].mxu0
      %2492 = vmatprep.mubr.bf16.mxu0 0
      %2493 = vmatmul.mubr.bf16.gmra.mrb[0].mxu0 %v1532
      %v2494 = vpop.f32.mrb[0].mxu0
      %v2495 = vadd.f32 %v2334, %v2494
      %v2496 = vpop.f32.mrb[0].mxu0
      %v2497 = vpop.f32.mrb[0].mxu0
      %v2498 = vadd.f32 %v2337, %v2497
      %v2499 = vpop.f32.mrb[0].mxu0
      %2500 = vmatprep.mubr.bf16.mxu0 0
      %2501 = vmatmul.mubr.bf16.gmra.mrb[0].mxu0 %v1533
      %v2502 = vpop.f32.mrb[0].mxu0
      %v2503 = vadd.f32 %v2342, %v2502
      %v2504 = vpop.f32.mrb[0].mxu0
      %v2505 = vpop.f32.mrb[0].mxu0
      %v2506 = vadd.f32 %v2345, %v2505
      %v2507 = vpop.f32.mrb[0].mxu0
      %2508 = vmatprep.mubr.bf16.mxu0 0
      %2509 = vmatmul.mubr.bf16.gmra.mrb[0].mxu0 %v1534
      %v2510 = vpop.f32.mrb[0].mxu0
      %v2511 = vadd.f32 %v2350, %v2510
      %v2512 = vpop.f32.mrb[0].mxu0
      %v2513 = vpop.f32.mrb[0].mxu0
      %v2514 = vadd.f32 %v2353, %v2513
      %v2515 = vpop.f32.mrb[0].mxu0
      %2516 = vmatprep.mubr.bf16.mxu0 0
      %2517 = vmatmul.mubr.bf16.gmra.mrb[0].mxu0 %v1535
      %v2518 = vpop.f32.mrb[0].mxu0
      %v2519 = vadd.f32 %v2358, %v2518
      %v2520 = vpop.f32.mrb[0].mxu0
      %v2521 = vpop.f32.mrb[0].mxu0
      %v2522 = vadd.f32 %v2361, %v2521
      %v2523 = vpop.f32.mrb[0].mxu0
      %2524 = vmatprep.mubr.bf16.mxu0 0
      %2525 = vmatmul.mubr.bf16.gmra.mrb[0].mxu0 %v1536
      %v2526 = vpop.f32.mrb[0].mxu0
      %v2527 = vadd.f32 %v2366, %v2526
      %v2528 = vpop.f32.mrb[0].mxu0
      %v2529 = vpop.f32.mrb[0].mxu0
      %v2530 = vadd.f32 %v2369, %v2529
      %v2531 = vpop.f32.mrb[0].mxu0
      %2532 = vmatprep.mubr.bf16.mxu0 0
      %2533 = vmatmul.mubr.bf16.gmra.mrb[0].mxu0 %v1537
      %v2534 = vpop.f32.mrb[0].mxu0
      %v2535 = vadd.f32 %v2374, %v2534
      %v2536 = vpop.f32.mrb[0].mxu0
      %v2537 = vpop.f32.mrb[0].mxu0
      %v2538 = vadd.f32 %v2377, %v2537
      %v2539 = vpop.f32.mrb[0].mxu0
      %2540 = vmatprep.mubr.bf16.mxu0 0
      %2541 = vmatmul.mubr.bf16.gmra.mrb[0].mxu0 %v1538
      %v2542 = vpop.f32.mrb[0].mxu0
      %v2543 = vadd.f32 %v2382, %v2542
      %v2544 = vpop.f32.mrb[0].mxu0
      %v2545 = vpop.f32.mrb[0].mxu0
      %v2546 = vadd.f32 %v2385, %v2545
      %v2547 = vpop.f32.mrb[0].mxu0
      %2548 = vmatprep.mubr.bf16.mxu0 0
      %2549 = vmatmul.mubr.bf16.gmra.mrb[0].mxu0 %v1539
      %v2550 = vpop.f32.mrb[0].mxu0
      %v2551 = vadd.f32 %v2390, %v2550
      %v2552 = vpop.f32.mrb[0].mxu0
      %v2553 = vpop.f32.mrb[0].mxu0
      %v2554 = vadd.f32 %v2393, %v2553
      %v2555 = vpop.f32.mrb[0].mxu0
      %2556 = vmatprep.mubr.bf16.mxu0 0
      %2557 = vmatmul.mubr.bf16.gmra.mrb[0].mxu0 %v1540
      %v2558 = vpop.f32.mrb[0].mxu0
      %v2559 = vadd.f32 %v2398, %v2558
      %v2560 = vpop.f32.mrb[0].mxu0
      %v2561 = vpop.f32.mrb[0].mxu0
      %v2562 = vadd.f32 %v2401, %v2561
      %v2563 = vpop.f32.mrb[0].mxu0
      %2564 = vmatprep.mubr.bf16.mxu0 0
      %2565 = vmatmul.mubr.bf16.gmra.mrb[0].mxu0 %v1541
      %v2566 = vpop.f32.mrb[0].mxu0
      %v2567 = vadd.f32 %v2406, %v2566
      %v2568 = vpop.f32.mrb[0].mxu0
      %v2569 = vpop.f32.mrb[0].mxu0
      %v2570 = vadd.f32 %v2409, %v2569
      %v2571 = vpop.f32.mrb[0].mxu0
      %2572 = vdwg.mxu0
      %s2573 = scalar_lea.vmem %s5, 384
      %v2574 = vld [vmem:[%s2573] sm:$0xf]
      %v2575 = vld [vmem:[%s2573 + $0x4] sm:$0xf]
      %v2576 = vld [vmem:[%s2573 + $0x8] sm:$0xf]
      %v2577 = vld [vmem:[%s2573 + $0xc] sm:$0xf]
      %v2578 = vld [vmem:[%s2573 + $0x10] sm:$0xf]
      %v2579 = vld [vmem:[%s2573 + $0x14] sm:$0xf]
      %v2580 = vld [vmem:[%s2573 + $0x18] sm:$0xf]
      %v2581 = vld [vmem:[%s2573 + $0x1c] sm:$0xf]
      %v2582 = vld [vmem:[%s2573 + $0x20] sm:$0xf]
      %v2583 = vld [vmem:[%s2573 + $0x24] sm:$0xf]
      %v2584 = vld [vmem:[%s2573 + $0x28] sm:$0xf]
      %v2585 = vld [vmem:[%s2573 + $0x2c] sm:$0xf]
      %v2586 = vld [vmem:[%s2573 + $0x30] sm:$0xf]
      %v2587 = vld [vmem:[%s2573 + $0x34] sm:$0xf]
      %v2588 = vld [vmem:[%s2573 + $0x38] sm:$0xf]
      %v2589 = vld [vmem:[%s2573 + $0x3c] sm:$0xf]
      %v2590 = vld [vmem:[%s2573 + $0x40] sm:$0xf]
      %v2591 = vld [vmem:[%s2573 + $0x44] sm:$0xf]
      %v2592 = vld [vmem:[%s2573 + $0x48] sm:$0xf]
      %v2593 = vld [vmem:[%s2573 + $0x4c] sm:$0xf]
      %v2594 = vld [vmem:[%s2573 + $0x50] sm:$0xf]
      %v2595 = vld [vmem:[%s2573 + $0x54] sm:$0xf]
      %v2596 = vld [vmem:[%s2573 + $0x58] sm:$0xf]
      %v2597 = vld [vmem:[%s2573 + $0x5c] sm:$0xf]
      %v2598 = vld [vmem:[%s2573 + $0x60] sm:$0xf]
      %v2599 = vld [vmem:[%s2573 + $0x64] sm:$0xf]
      %v2600 = vld [vmem:[%s2573 + $0x68] sm:$0xf]
      %v2601 = vld [vmem:[%s2573 + $0x6c] sm:$0xf]
      %v2602 = vld [vmem:[%s2573 + $0x70] sm:$0xf]
      %v2603 = vld [vmem:[%s2573 + $0x74] sm:$0xf]
      %v2604 = vld [vmem:[%s2573 + $0x78] sm:$0xf]
      %v2605 = vld [vmem:[%s2573 + $0x7c] sm:$0xf]
      %v2606 = vld [vmem:[%s2573 + $0x80] sm:$0xf]
      %v2607 = vld [vmem:[%s2573 + $0x84] sm:$0xf]
      %v2608 = vld [vmem:[%s2573 + $0x88] sm:$0xf]
      %v2609 = vld [vmem:[%s2573 + $0x8c] sm:$0xf]
      %v2610 = vld [vmem:[%s2573 + $0x90] sm:$0xf]
      %v2611 = vld [vmem:[%s2573 + $0x94] sm:$0xf]
      %v2612 = vld [vmem:[%s2573 + $0x98] sm:$0xf]
      %v2613 = vld [vmem:[%s2573 + $0x9c] sm:$0xf]
      %v2614 = vld [vmem:[%s2573 + $0xa0] sm:$0xf]
      %v2615 = vld [vmem:[%s2573 + $0xa4] sm:$0xf]
      %v2616 = vld [vmem:[%s2573 + $0xa8] sm:$0xf]
      %v2617 = vld [vmem:[%s2573 + $0xac] sm:$0xf]
      %v2618 = vld [vmem:[%s2573 + $0xb0] sm:$0xf]
      %v2619 = vld [vmem:[%s2573 + $0xb4] sm:$0xf]
      %v2620 = vld [vmem:[%s2573 + $0xb8] sm:$0xf]
      %v2621 = vld [vmem:[%s2573 + $0xbc] sm:$0xf]
      %v2670 = vunpack.c.l.b16 %v2574
      %v2671 = vunpack.c.l.b16 %v2575
      %v2672 = vunpack.c.l.b16 %v2576
      %v2673 = vunpack.c.l.b16 %v2577
      %v2674 = vunpack.c.l.b16 %v2578
      %v2675 = vunpack.c.l.b16 %v2579
      %v2676 = vunpack.c.l.b16 %v2580
      %v2677 = vunpack.c.l.b16 %v2581
      %v2678 = vunpack.c.l.b16 %v2582
      %v2679 = vunpack.c.l.b16 %v2583
      %v2680 = vunpack.c.l.b16 %v2584
      %v2681 = vunpack.c.l.b16 %v2585
      %v2682 = vunpack.c.l.b16 %v2586
      %v2683 = vunpack.c.l.b16 %v2587
      %v2684 = vunpack.c.l.b16 %v2588
      %v2685 = vunpack.c.l.b16 %v2589
      %v2686 = vunpack.c.l.b16 %v2590
      %v2687 = vunpack.c.l.b16 %v2591
      %v2688 = vunpack.c.l.b16 %v2592
      %v2689 = vunpack.c.l.b16 %v2593
      %v2690 = vunpack.c.l.b16 %v2594
      %v2691 = vunpack.c.l.b16 %v2595
      %v2692 = vunpack.c.l.b16 %v2596
      %v2693 = vunpack.c.l.b16 %v2597
      %v2694 = vunpack.c.l.b16 %v2598
      %v2695 = vunpack.c.l.b16 %v2599
      %v2696 = vunpack.c.l.b16 %v2600
      %v2697 = vunpack.c.l.b16 %v2601
      %v2698 = vunpack.c.l.b16 %v2602
      %v2699 = vunpack.c.l.b16 %v2603
      %v2700 = vunpack.c.l.b16 %v2604
      %v2701 = vunpack.c.l.b16 %v2605
      %v2702 = vunpack.c.l.b16 %v2606
      %v2703 = vunpack.c.l.b16 %v2607
      %v2704 = vunpack.c.l.b16 %v2608
      %v2705 = vunpack.c.l.b16 %v2609
      %v2706 = vunpack.c.l.b16 %v2610
      %v2707 = vunpack.c.l.b16 %v2611
      %v2708 = vunpack.c.l.b16 %v2612
      %v2709 = vunpack.c.l.b16 %v2613
      %v2710 = vunpack.c.l.b16 %v2614
      %v2711 = vunpack.c.l.b16 %v2615
      %v2712 = vunpack.c.l.b16 %v2616
      %v2713 = vunpack.c.l.b16 %v2617
      %v2714 = vunpack.c.l.b16 %v2618
      %v2715 = vunpack.c.l.b16 %v2619
      %v2716 = vunpack.c.l.b16 %v2620
      %v2717 = vunpack.c.l.b16 %v2621
      %v2718 = vpack.c.b16 %v2671, %v2670
      %v2719 = vpack.c.b16 %v2673, %v2672
      %v2720 = vpack.c.b16 %v2675, %v2674
      %v2721 = vpack.c.b16 %v2677, %v2676
      %v2722 = vpack.c.b16 %v2679, %v2678
      %v2723 = vpack.c.b16 %v2681, %v2680
      %v2724 = vpack.c.b16 %v2683, %v2682
      %v2725 = vpack.c.b16 %v2685, %v2684
      %v2726 = vpack.c.b16 %v2687, %v2686
      %v2727 = vpack.c.b16 %v2689, %v2688
      %v2728 = vpack.c.b16 %v2691, %v2690
      %v2729 = vpack.c.b16 %v2693, %v2692
      %v2730 = vpack.c.b16 %v2695, %v2694
      %v2731 = vpack.c.b16 %v2697, %v2696
      %v2732 = vpack.c.b16 %v2699, %v2698
      %v2733 = vpack.c.b16 %v2701, %v2700
      %v2734 = vpack.c.b16 %v2703, %v2702
      %v2735 = vpack.c.b16 %v2705, %v2704
      %v2736 = vpack.c.b16 %v2707, %v2706
      %v2737 = vpack.c.b16 %v2709, %v2708
      %v2738 = vpack.c.b16 %v2711, %v2710
      %v2739 = vpack.c.b16 %v2713, %v2712
      %v2740 = vpack.c.b16 %v2715, %v2714
      %v2741 = vpack.c.b16 %v2717, %v2716
      %2766 = vmatprep.subr.bf16.mxu0 0
      %2767 = vmatpush1.bf16.msra.mxu0 %v2718
      %2768 = vmatprep.subr.bf16.mxu0 0
      %2769 = vmatpush1.bf16.msra.mxu0 %v2719
      %2770 = vmatprep.subr.bf16.mxu0 0
      %2771 = vmatpush1.bf16.msra.mxu0 %v2720
      %2772 = vmatprep.subr.bf16.mxu0 0
      %2773 = vmatpush1.bf16.msra.mxu0 %v2721
      %2774 = vmatprep.subr.bf16.mxu0 0
      %2775 = vmatpush1.bf16.msra.mxu0 %v2722
      %2776 = vmatprep.subr.bf16.mxu0 0
      %2777 = vmatpush1.bf16.msra.mxu0 %v2723
      %2778 = vmatprep.subr.bf16.mxu0 0
      %2779 = vmatpush1.bf16.msra.mxu0 %v2724
      %2780 = vmatprep.subr.bf16.mxu0 0
      %2781 = vmatpush1.bf16.msra.mxu0 %v2725
      %2782 = vmatprep.subr.bf16.mxu0 0
      %2783 = vmatpush1.bf16.msra.mxu0 %v2726
      %2784 = vmatprep.subr.bf16.mxu0 0
      %2785 = vmatpush1.bf16.msra.mxu0 %v2727
      %2786 = vmatprep.subr.bf16.mxu0 0
      %2787 = vmatpush1.bf16.msra.mxu0 %v2728
      %2788 = vmatprep.subr.bf16.mxu0 0
      %2789 = vmatpush1.bf16.msra.mxu0 %v2729
      %2790 = vmatprep.subr.bf16.mxu0 0
      %2791 = vmatpush1.bf16.msra.mxu0 %v2730
      %2792 = vmatprep.subr.bf16.mxu0 0
      %2793 = vmatpush1.bf16.msra.mxu0 %v2731
      %2794 = vmatprep.subr.bf16.mxu0 0
      %2795 = vmatpush1.bf16.msra.mxu0 %v2732
      %2796 = vmatprep.subr.bf16.mxu0 0
      %2797 = vmatpush1.bf16.msra.mxu0 %v2733
      %2798 = vmatprep.mubr.bf16.mxu0 %v1510
      %2799 = vmatmul.mubr.bf16.gmra.mrb[0].mxu0 %v1492
      %v2800 = vpop.f32.mrb[0].mxu0
      %v2801 = vadd.f32 0.0, %v2800
      %v2802 = vpop.f32.mrb[0].mxu0
      %v2803 = vpop.f32.mrb[0].mxu0
      %v2804 = vadd.f32 0.0, %v2803
      %v2805 = vpop.f32.mrb[0].mxu0
      %2806 = vmatprep.mubr.bf16.mxu0 %v1511
      %2807 = vmatmul.mubr.bf16.gmra.mrb[0].mxu0 %v1493
      %v2808 = vpop.f32.mrb[0].mxu0
      %v2809 = vadd.f32 0.0, %v2808
      %v2810 = vpop.f32.mrb[0].mxu0
      %v2811 = vpop.f32.mrb[0].mxu0
      %v2812 = vadd.f32 0.0, %v2811
      %v2813 = vpop.f32.mrb[0].mxu0
      %2814 = vmatprep.mubr.bf16.mxu0 %v1512
      %2815 = vmatmul.mubr.bf16.gmra.mrb[0].mxu0 %v1494
      %v2816 = vpop.f32.mrb[0].mxu0
      %v2817 = vadd.f32 0.0, %v2816
      %v2818 = vpop.f32.mrb[0].mxu0
      %v2819 = vpop.f32.mrb[0].mxu0
      %v2820 = vadd.f32 0.0, %v2819
      %v2821 = vpop.f32.mrb[0].mxu0
      %2822 = vmatprep.mubr.bf16.mxu0 %v1513
      %2823 = vmatmul.mubr.bf16.gmra.mrb[0].mxu0 %v1495
      %v2824 = vpop.f32.mrb[0].mxu0
      %v2825 = vadd.f32 0.0, %v2824
      %v2826 = vpop.f32.mrb[0].mxu0
      %v2827 = vpop.f32.mrb[0].mxu0
      %v2828 = vadd.f32 0.0, %v2827
      %v2829 = vpop.f32.mrb[0].mxu0
      %2830 = vmatprep.mubr.bf16.mxu0 %v1514
      %2831 = vmatmul.mubr.bf16.gmra.mrb[0].mxu0 %v1496
      %v2832 = vpop.f32.mrb[0].mxu0
      %v2833 = vadd.f32 0.0, %v2832
      %v2834 = vpop.f32.mrb[0].mxu0
      %v2835 = vpop.f32.mrb[0].mxu0
      %v2836 = vadd.f32 0.0, %v2835
      %v2837 = vpop.f32.mrb[0].mxu0
      %2838 = vmatprep.mubr.bf16.mxu0 %v1515
      %2839 = vmatmul.mubr.bf16.gmra.mrb[0].mxu0 %v1497
      %v2840 = vpop.f32.mrb[0].mxu0
      %v2841 = vadd.f32 0.0, %v2840
      %v2842 = vpop.f32.mrb[0].mxu0
      %v2843 = vpop.f32.mrb[0].mxu0
      %v2844 = vadd.f32 0.0, %v2843
      %v2845 = vpop.f32.mrb[0].mxu0
      %2846 = vmatprep.mubr.bf16.mxu0 %v1516
      %2847 = vmatmul.mubr.bf16.gmra.mrb[0].mxu0 %v1498
      %v2848 = vpop.f32.mrb[0].mxu0
      %v2849 = vadd.f32 0.0, %v2848
      %v2850 = vpop.f32.mrb[0].mxu0
      %v2851 = vpop.f32.mrb[0].mxu0
      %v2852 = vadd.f32 0.0, %v2851
      %v2853 = vpop.f32.mrb[0].mxu0
      %2854 = vmatprep.mubr.bf16.mxu0 %v1517
      %2855 = vmatmul.mubr.bf16.gmra.mrb[0].mxu0 %v1499
      %v2856 = vpop.f32.mrb[0].mxu0
      %v2857 = vadd.f32 0.0, %v2856
      %v2858 = vpop.f32.mrb[0].mxu0
      %v2859 = vpop.f32.mrb[0].mxu0
      %v2860 = vadd.f32 0.0, %v2859
      %v2861 = vpop.f32.mrb[0].mxu0
      %2862 = vmatprep.mubr.bf16.mxu0 %v1518
      %2863 = vmatmul.mubr.bf16.gmra.mrb[0].mxu0 %v1500
      %v2864 = vpop.f32.mrb[0].mxu0
      %v2865 = vadd.f32 0.0, %v2864
      %v2866 = vpop.f32.mrb[0].mxu0
      %v2867 = vpop.f32.mrb[0].mxu0
      %v2868 = vadd.f32 0.0, %v2867
      %v2869 = vpop.f32.mrb[0].mxu0
      %2870 = vmatprep.mubr.bf16.mxu0 %v1519
      %2871 = vmatmul.mubr.bf16.gmra.mrb[0].mxu0 %v1501
      %v2872 = vpop.f32.mrb[0].mxu0
      %v2873 = vadd.f32 0.0, %v2872
      %v2874 = vpop.f32.mrb[0].mxu0
      %v2875 = vpop.f32.mrb[0].mxu0
      %v2876 = vadd.f32 0.0, %v2875
      %v2877 = vpop.f32.mrb[0].mxu0
      %2878 = vmatprep.mubr.bf16.mxu0 %v1520
      %2879 = vmatmul.mubr.bf16.gmra.mrb[0].mxu0 %v1502
      %v2880 = vpop.f32.mrb[0].mxu0
      %v2881 = vadd.f32 0.0, %v2880
      %v2882 = vpop.f32.mrb[0].mxu0
      %v2883 = vpop.f32.mrb[0].mxu0
      %v2884 = vadd.f32 0.0, %v2883
      %v2885 = vpop.f32.mrb[0].mxu0
      %2886 = vmatprep.mubr.bf16.mxu0 %v1521
      %2887 = vmatmul.mubr.bf16.gmra.mrb[0].mxu0 %v1503
      %v2888 = vpop.f32.mrb[0].mxu0
      %v2889 = vadd.f32 0.0, %v2888
      %v2890 = vpop.f32.mrb[0].mxu0
      %v2891 = vpop.f32.mrb[0].mxu0
      %v2892 = vadd.f32 0.0, %v2891
      %v2893 = vpop.f32.mrb[0].mxu0
      %2894 = vmatprep.mubr.bf16.mxu0 %v1522
      %2895 = vmatmul.mubr.bf16.gmra.mrb[0].mxu0 %v1504
      %v2896 = vpop.f32.mrb[0].mxu0
      %v2897 = vadd.f32 0.0, %v2896
      %v2898 = vpop.f32.mrb[0].mxu0
      %v2899 = vpop.f32.mrb[0].mxu0
      %v2900 = vadd.f32 0.0, %v2899
      %v2901 = vpop.f32.mrb[0].mxu0
      %2902 = vmatprep.mubr.bf16.mxu0 %v1523
      %2903 = vmatmul.mubr.bf16.gmra.mrb[0].mxu0 %v1505
      %v2904 = vpop.f32.mrb[0].mxu0
      %v2905 = vadd.f32 0.0, %v2904
      %v2906 = vpop.f32.mrb[0].mxu0
      %v2907 = vpop.f32.mrb[0].mxu0
      %v2908 = vadd.f32 0.0, %v2907
      %v2909 = vpop.f32.mrb[0].mxu0
      %2910 = vmatprep.mubr.bf16.mxu0 %v1524
      %2911 = vmatmul.mubr.bf16.gmra.mrb[0].mxu0 %v1506
      %v2912 = vpop.f32.mrb[0].mxu0
      %v2913 = vadd.f32 0.0, %v2912
      %v2914 = vpop.f32.mrb[0].mxu0
      %v2915 = vpop.f32.mrb[0].mxu0
      %v2916 = vadd.f32 0.0, %v2915
      %v2917 = vpop.f32.mrb[0].mxu0
      %2918 = vmatprep.mubr.bf16.mxu0 %v1525
      %2919 = vmatmul.mubr.bf16.gmra.mrb[0].mxu0 %v1507
      %v2920 = vpop.f32.mrb[0].mxu0
      %v2921 = vadd.f32 0.0, %v2920
      %v2922 = vpop.f32.mrb[0].mxu0
      %v2923 = vpop.f32.mrb[0].mxu0
      %v2924 = vadd.f32 0.0, %v2923
      %v2925 = vpop.f32.mrb[0].mxu0
      %2926 = vdwg.mxu0
      %2927 = vmatprep.subr.bf16.mxu0 0
      %2928 = vmatpush1.bf16.msra.mxu0 %v2734
      %2929 = vmatprep.subr.bf16.mxu0 0
      %2930 = vmatpush1.bf16.msra.mxu0 %v2735
      %2931 = vmatprep.subr.bf16.mxu0 0
      %2932 = vmatpush1.bf16.msra.mxu0 %v2736
      %2933 = vmatprep.subr.bf16.mxu0 0
      %2934 = vmatpush1.bf16.msra.mxu0 %v2737
      %2935 = vmatprep.subr.bf16.mxu0 0
      %2936 = vmatpush1.bf16.msra.mxu0 %v2738
      %2937 = vmatprep.subr.bf16.mxu0 0
      %2938 = vmatpush1.bf16.msra.mxu0 %v2739
      %2939 = vmatprep.subr.bf16.mxu0 0
      %2940 = vmatpush1.bf16.msra.mxu0 %v2740
      %2941 = vmatprep.subr.bf16.mxu0 0
      %2942 = vmatpush1.bf16.msra.mxu0 %v2741
      %2943 = vmatprep.subr.bf16.mxu0 0
      %2944 = vmatpush1.bf16.msra.mxu0 0
      %2945 = vmatprep.subr.bf16.mxu0 0
      %2946 = vmatpush1.bf16.msra.mxu0 0
      %2947 = vmatprep.subr.bf16.mxu0 0
      %2948 = vmatpush1.bf16.msra.mxu0 0
      %2949 = vmatprep.subr.bf16.mxu0 0
      %2950 = vmatpush1.bf16.msra.mxu0 0
      %2951 = vmatprep.subr.bf16.mxu0 0
      %2952 = vmatpush1.bf16.msra.mxu0 0
      %2953 = vmatprep.subr.bf16.mxu0 0
      %2954 = vmatpush1.bf16.msra.mxu0 0
      %2955 = vmatprep.subr.bf16.mxu0 0
      %2956 = vmatpush1.bf16.msra.mxu0 0
      %2957 = vmatprep.subr.bf16.mxu0 0
      %2958 = vmatpush1.bf16.msra.mxu0 0
      %2959 = vmatprep.mubr.bf16.mxu0 0
      %2960 = vmatmul.mubr.bf16.gmra.mrb[0].mxu0 %v1528
      %v2961 = vpop.f32.mrb[0].mxu0
      %v2962 = vadd.f32 %v2801, %v2961
      %v2963 = vpop.f32.mrb[0].mxu0
      %v2964 = vpop.f32.mrb[0].mxu0
      %v2965 = vadd.f32 %v2804, %v2964
      %v2966 = vpop.f32.mrb[0].mxu0
      %2967 = vmatprep.mubr.bf16.mxu0 0
      %2968 = vmatmul.mubr.bf16.gmra.mrb[0].mxu0 %v1529
      %v2969 = vpop.f32.mrb[0].mxu0
      %v2970 = vadd.f32 %v2809, %v2969
      %v2971 = vpop.f32.mrb[0].mxu0
      %v2972 = vpop.f32.mrb[0].mxu0
      %v2973 = vadd.f32 %v2812, %v2972
      %v2974 = vpop.f32.mrb[0].mxu0
      %2975 = vmatprep.mubr.bf16.mxu0 0
      %2976 = vmatmul.mubr.bf16.gmra.mrb[0].mxu0 %v1530
      %v2977 = vpop.f32.mrb[0].mxu0
      %v2978 = vadd.f32 %v2817, %v2977
      %v2979 = vpop.f32.mrb[0].mxu0
      %v2980 = vpop.f32.mrb[0].mxu0
      %v2981 = vadd.f32 %v2820, %v2980
      %v2982 = vpop.f32.mrb[0].mxu0
      %2983 = vmatprep.mubr.bf16.mxu0 0
      %2984 = vmatmul.mubr.bf16.gmra.mrb[0].mxu0 %v1531
      %v2985 = vpop.f32.mrb[0].mxu0
      %v2986 = vadd.f32 %v2825, %v2985
      %v2987 = vpop.f32.mrb[0].mxu0
      %v2988 = vpop.f32.mrb[0].mxu0
      %v2989 = vadd.f32 %v2828, %v2988
      %v2990 = vpop.f32.mrb[0].mxu0
      %2991 = vmatprep.mubr.bf16.mxu0 0
      %2992 = vmatmul.mubr.bf16.gmra.mrb[0].mxu0 %v1532
      %v2993 = vpop.f32.mrb[0].mxu0
      %v2994 = vadd.f32 %v2833, %v2993
      %v2995 = vpop.f32.mrb[0].mxu0
      %v2996 = vpop.f32.mrb[0].mxu0
      %v2997 = vadd.f32 %v2836, %v2996
      %v2998 = vpop.f32.mrb[0].mxu0
      %2999 = vmatprep.mubr.bf16.mxu0 0
      %3000 = vmatmul.mubr.bf16.gmra.mrb[0].mxu0 %v1533
      %v3001 = vpop.f32.mrb[0].mxu0
      %v3002 = vadd.f32 %v2841, %v3001
      %v3003 = vpop.f32.mrb[0].mxu0
      %v3004 = vpop.f32.mrb[0].mxu0
      %v3005 = vadd.f32 %v2844, %v3004
      %v3006 = vpop.f32.mrb[0].mxu0
      %3007 = vmatprep.mubr.bf16.mxu0 0
      %3008 = vmatmul.mubr.bf16.gmra.mrb[0].mxu0 %v1534
      %v3009 = vpop.f32.mrb[0].mxu0
      %v3010 = vadd.f32 %v2849, %v3009
      %v3011 = vpop.f32.mrb[0].mxu0
      %v3012 = vpop.f32.mrb[0].mxu0
      %v3013 = vadd.f32 %v2852, %v3012
      %v3014 = vpop.f32.mrb[0].mxu0
      %3015 = vmatprep.mubr.bf16.mxu0 0
      %3016 = vmatmul.mubr.bf16.gmra.mrb[0].mxu0 %v1535
      %v3017 = vpop.f32.mrb[0].mxu0
      %v3018 = vadd.f32 %v2857, %v3017
      %v3019 = vpop.f32.mrb[0].mxu0
      %v3020 = vpop.f32.mrb[0].mxu0
      %v3021 = vadd.f32 %v2860, %v3020
      %v3022 = vpop.f32.mrb[0].mxu0
      %3023 = vmatprep.mubr.bf16.mxu0 0
      %3024 = vmatmul.mubr.bf16.gmra.mrb[0].mxu0 %v1536
      %v3025 = vpop.f32.mrb[0].mxu0
      %v3026 = vadd.f32 %v2865, %v3025
      %v3027 = vpop.f32.mrb[0].mxu0
      %v3028 = vpop.f32.mrb[0].mxu0
      %v3029 = vadd.f32 %v2868, %v3028
      %v3030 = vpop.f32.mrb[0].mxu0
      %3031 = vmatprep.mubr.bf16.mxu0 0
      %3032 = vmatmul.mubr.bf16.gmra.mrb[0].mxu0 %v1537
      %v3033 = vpop.f32.mrb[0].mxu0
      %v3034 = vadd.f32 %v2873, %v3033
      %v3035 = vpop.f32.mrb[0].mxu0
      %v3036 = vpop.f32.mrb[0].mxu0
      %v3037 = vadd.f32 %v2876, %v3036
      %v3038 = vpop.f32.mrb[0].mxu0
      %3039 = vmatprep.mubr.bf16.mxu0 0
      %3040 = vmatmul.mubr.bf16.gmra.mrb[0].mxu0 %v1538
      %v3041 = vpop.f32.mrb[0].mxu0
      %v3042 = vadd.f32 %v2881, %v3041
      %v3043 = vpop.f32.mrb[0].mxu0
      %v3044 = vpop.f32.mrb[0].mxu0
      %v3045 = vadd.f32 %v2884, %v3044
      %v3046 = vpop.f32.mrb[0].mxu0
      %3047 = vmatprep.mubr.bf16.mxu0 0
      %3048 = vmatmul.mubr.bf16.gmra.mrb[0].mxu0 %v1539
      %v3049 = vpop.f32.mrb[0].mxu0
      %v3050 = vadd.f32 %v2889, %v3049
      %v3051 = vpop.f32.mrb[0].mxu0
      %v3052 = vpop.f32.mrb[0].mxu0
      %v3053 = vadd.f32 %v2892, %v3052
      %v3054 = vpop.f32.mrb[0].mxu0
      %3055 = vmatprep.mubr.bf16.mxu0 0
      %3056 = vmatmul.mubr.bf16.gmra.mrb[0].mxu0 %v1540
      %v3057 = vpop.f32.mrb[0].mxu0
      %v3058 = vadd.f32 %v2897, %v3057
      %v3059 = vpop.f32.mrb[0].mxu0
      %v3060 = vpop.f32.mrb[0].mxu0
      %v3061 = vadd.f32 %v2900, %v3060
      %v3062 = vpop.f32.mrb[0].mxu0
      %3063 = vmatprep.mubr.bf16.mxu0 0
      %3064 = vmatmul.mubr.bf16.gmra.mrb[0].mxu0 %v1541
      %v3065 = vpop.f32.mrb[0].mxu0
      %v3066 = vadd.f32 %v2905, %v3065
      %v3067 = vpop.f32.mrb[0].mxu0
      %v3068 = vpop.f32.mrb[0].mxu0
      %v3069 = vadd.f32 %v2908, %v3068
      %v3070 = vpop.f32.mrb[0].mxu0
      %3071 = vmatprep.mubr.bf16.mxu0 0
      %3072 = vmatmul.mubr.bf16.gmra.mrb[0].mxu0 %v1542
      %v3073 = vpop.f32.mrb[0].mxu0
      %v3074 = vadd.f32 %v2913, %v3073
      %v3075 = vpop.f32.mrb[0].mxu0
      %v3076 = vpop.f32.mrb[0].mxu0
      %v3077 = vadd.f32 %v2916, %v3076
      %v3078 = vpop.f32.mrb[0].mxu0
      %3079 = vmatprep.mubr.bf16.mxu0 0
      %3080 = vmatmul.mubr.bf16.gmra.mrb[0].mxu0 %v1543
      %v3081 = vpop.f32.mrb[0].mxu0
      %v3082 = vadd.f32 %v2921, %v3081
      %v3083 = vpop.f32.mrb[0].mxu0
      %v3084 = vpop.f32.mrb[0].mxu0
      %v3085 = vadd.f32 %v2924, %v3084
      %v3086 = vpop.f32.mrb[0].mxu0
      %3087 = vdwg.mxu0
      %v3088 = vadd.f32 %v2447, %v2962
      %v3089 = vadd.f32 %v2450, %v2965
      %v3090 = vadd.f32 %v2455, %v2970
      %v3091 = vadd.f32 %v2458, %v2973
      %v3092 = vadd.f32 %v2463, %v2978
      %v3093 = vadd.f32 %v2466, %v2981
      %v3094 = vadd.f32 %v2471, %v2986
      %v3095 = vadd.f32 %v2474, %v2989
      %v3096 = vadd.f32 %v2479, %v2994
      %v3097 = vadd.f32 %v2482, %v2997
      %v3098 = vadd.f32 %v2487, %v3002
      %v3099 = vadd.f32 %v2490, %v3005
      %v3100 = vadd.f32 %v2495, %v3010
      %v3101 = vadd.f32 %v2498, %v3013
      %v3102 = vadd.f32 %v2503, %v3018
      %v3103 = vadd.f32 %v2506, %v3021
      %v3104 = vadd.f32 %v2511, %v3026
      %v3105 = vadd.f32 %v2514, %v3029
      %v3106 = vadd.f32 %v2519, %v3034
      %v3107 = vadd.f32 %v2522, %v3037
      %v3108 = vadd.f32 %v2527, %v3042
      %v3109 = vadd.f32 %v2530, %v3045
      %v3110 = vadd.f32 %v2535, %v3050
      %v3111 = vadd.f32 %v2538, %v3053
      %v3112 = vadd.f32 %v2543, %v3058
      %v3113 = vadd.f32 %v2546, %v3061
      %v3114 = vadd.f32 %v2551, %v3066
      %v3115 = vadd.f32 %v2554, %v3069
      %v3116 = vadd.f32 %v2559, %v3074
      %v3117 = vadd.f32 %v2562, %v3077
      %v3118 = vadd.f32 %v2567, %v3082
      %v3119 = vadd.f32 %v2570, %v3085
      %v3120 = vld [vmem:[%s6] sm:$0x1]
      %v3122 = vlaneseq
      %v3123 = vshrl.u32 %v3122, 7
      %v3124 = vsub.s32 0, %v3123
      %v3125 = vrot.slane %v3120, %v3124
      %v3127 = vadd.f32 %v3088, %v3125
      %v3128 = vadd.f32 %v3089, %v3125
      %v3129 = vadd.f32 %v3090, %v3125
      %v3130 = vadd.f32 %v3091, %v3125
      %v3131 = vadd.f32 %v3092, %v3125
      %v3132 = vadd.f32 %v3093, %v3125
      %v3133 = vadd.f32 %v3094, %v3125
      %v3134 = vadd.f32 %v3095, %v3125
      %v3135 = vadd.f32 %v3096, %v3125
      %v3136 = vadd.f32 %v3097, %v3125
      %v3137 = vadd.f32 %v3098, %v3125
      %v3138 = vadd.f32 %v3099, %v3125
      %v3139 = vadd.f32 %v3100, %v3125
      %v3140 = vadd.f32 %v3101, %v3125
      %v3141 = vadd.f32 %v3102, %v3125
      %v3142 = vadd.f32 %v3103, %v3125
      %v3143 = vadd.f32 %v3104, %v3125
      %v3144 = vadd.f32 %v3105, %v3125
      %v3145 = vadd.f32 %v3106, %v3125
      %v3146 = vadd.f32 %v3107, %v3125
      %v3147 = vadd.f32 %v3108, %v3125
      %v3148 = vadd.f32 %v3109, %v3125
      %v3149 = vadd.f32 %v3110, %v3125
      %v3150 = vadd.f32 %v3111, %v3125
      %v3151 = vadd.f32 %v3112, %v3125
      %v3152 = vadd.f32 %v3113, %v3125
      %v3153 = vadd.f32 %v3114, %v3125
      %v3154 = vadd.f32 %v3115, %v3125
      %v3155 = vadd.f32 %v3116, %v3125
      %v3156 = vadd.f32 %v3117, %v3125
      %v3157 = vadd.f32 %v3118, %v3125
      %v3158 = vadd.f32 %v3119, %v3125
      %vm3159 = vcmask 64512
      %3160 = vst.msk [vmem:[%s309] sm:$0xff] %vm3159, %v3127
      %3161 = vst.msk [vmem:[%s309 + $0x8] sm:$0xff] %vm3159, %v3128
      %3162 = vst.msk [vmem:[%s309 + $0x10] sm:$0xff] %vm3159, %v3129
      %3163 = vst.msk [vmem:[%s309 + $0x18] sm:$0xff] %vm3159, %v3130
      %3164 = vst.msk [vmem:[%s309 + $0x20] sm:$0xff] %vm3159, %v3131
      %3165 = vst.msk [vmem:[%s309 + $0x28] sm:$0xff] %vm3159, %v3132
      %3166 = vst.msk [vmem:[%s309 + $0x30] sm:$0xff] %vm3159, %v3133
      %3167 = vst.msk [vmem:[%s309 + $0x38] sm:$0xff] %vm3159, %v3134
      %3168 = vst.msk [vmem:[%s309 + $0x40] sm:$0xff] %vm3159, %v3135
      %3169 = vst.msk [vmem:[%s309 + $0x48] sm:$0xff] %vm3159, %v3136
      %3170 = vst.msk [vmem:[%s309 + $0x50] sm:$0xff] %vm3159, %v3137
      %3171 = vst.msk [vmem:[%s309 + $0x58] sm:$0xff] %vm3159, %v3138
      %3172 = vst.msk [vmem:[%s309 + $0x60] sm:$0xff] %vm3159, %v3139
      %3173 = vst.msk [vmem:[%s309 + $0x68] sm:$0xff] %vm3159, %v3140
      %3174 = vst.msk [vmem:[%s309 + $0x70] sm:$0xff] %vm3159, %v3141
      %3175 = vst.msk [vmem:[%s309 + $0x78] sm:$0xff] %vm3159, %v3142
      %3176 = vst.msk [vmem:[%s309 + $0x80] sm:$0xff] %vm3159, %v3143
      %3177 = vst.msk [vmem:[%s309 + $0x88] sm:$0xff] %vm3159, %v3144
      %3178 = vst.msk [vmem:[%s309 + $0x90] sm:$0xff] %vm3159, %v3145
      %3179 = vst.msk [vmem:[%s309 + $0x98] sm:$0xff] %vm3159, %v3146
      %3180 = vst.msk [vmem:[%s309 + $0xa0] sm:$0xff] %vm3159, %v3147
      %3181 = vst.msk [vmem:[%s309 + $0xa8] sm:$0xff] %vm3159, %v3148
      %3182 = vst.msk [vmem:[%s309 + $0xb0] sm:$0xff] %vm3159, %v3149
      %3183 = vst.msk [vmem:[%s309 + $0xb8] sm:$0xff] %vm3159, %v3150
      %3184 = vst.msk [vmem:[%s309 + $0xc0] sm:$0xff] %vm3159, %v3151
      %3185 = vst.msk [vmem:[%s309 + $0xc8] sm:$0xff] %vm3159, %v3152
      %3186 = vst.msk [vmem:[%s309 + $0xd0] sm:$0xff] %vm3159, %v3153
      %3187 = vst.msk [vmem:[%s309 + $0xd8] sm:$0xff] %vm3159, %v3154
      %3188 = vst.msk [vmem:[%s309 + $0xe0] sm:$0xff] %vm3159, %v3155
      %3189 = vst.msk [vmem:[%s309 + $0xe8] sm:$0xff] %vm3159, %v3156
      %3190 = vst.msk [vmem:[%s309 + $0xf0] sm:$0xff] %vm3159, %v3157
      %3191 = vst.msk [vmem:[%s309 + $0xf8] sm:$0xff] %vm3159, %v3158
      %s3192 = smul.u32 16, %s23
      %p3193 = scmp.lt.s32.totalorder %s22, 1
      %s3194 = scalar_select %p3193, %s22, 1
      %p3195 = scmp.lt.s32.totalorder %s3192, 15
      %s3196 = scalar_select %p3195, %s3192, 15
      %s3197 = smul.addr %s3196, 2
      %s3198 = smul.addr %s3194, 32
      %s3199 = sadd.s32 %s3197, %s3198
      %s3200 = smul.addr %s3199, 8
      %s3201 = scalar_lea.vmem %s7, %s3200
      // Predicated region
      $region49: #{tpu_custom_call.1} parent=47 // pred_check
        %p3202 = pneg %p204
      $region50: #{tpu_custom_call.1} parent=47 // pred_check_branch
        %3204 = sbr.rel (%p3202) target = $region52
      $region51: #{tpu_custom_call.1} parent=47 // pred_region
        %s3205 = smul.u32 16, %s23
      $region52: #{tpu_custom_call.1} parent=47 // pred_fallthru
        _
    $region48: #{tpu_custom_call.1} parent=5 // pred_fallthru
      _
    %p3206 = scmp.le.s32.totalorder 2, %s13
    // Predicated region
    $region53: #{tpu_custom_call.1} parent=5 // pred_check
      %p3207 = pneg %p3206
    $region54: #{tpu_custom_call.1} parent=5 // pred_check_branch
      %3209 = sbr.rel (%p3207) target = $region56
    $region55: #{tpu_custom_call.1} parent=5 // pred_region
      %s3210 = ssub.s32 %s13, 2
      // Predicated region
      $region57: #{tpu_custom_call.1} parent=55 // pred_check
        %p3211 = pneg %p210
      $region58: #{tpu_custom_call.1} parent=55 // pred_check_branch
        %3213 = sbr.rel (%p3211) target = $region60
      $region59: #{tpu_custom_call.1} parent=55 // pred_region
        %s3214 = smul.u32 16, %s25
        %p3215 = scmp.lt.s32.totalorder %s24, 1
        %s3216 = scalar_select %p3215, %s24, 1
        %p3217 = scmp.lt.s32.totalorder %s3214, 15
        %s3218 = scalar_select %p3217, %s3214, 15
        %s3219 = smul.addr %s3218, 2
        %s3220 = smul.addr %s3216, 32
        %s3221 = sadd.s32 %s3219, %s3220
        %s3222 = smul.addr %s3221, 8
        %s3223 = scalar_lea.vmem %s7, %s3222
      $region60: #{tpu_custom_call.1} parent=55 // pred_fallthru
        _
    $region56: #{tpu_custom_call.1} parent=5 // pred_fallthru
      _
  $region6: #{tpu_custom_call.1} parent=0 // loop_footer
    %s17 = sadd.s32 1, %s13
  $region7: #{tpu_custom_call.1} parent=0 // loop_footer_branch
    %12 = sbr.rel target = $region3
  $region8: #{tpu_custom_call.1} parent=0 // loop_exit
    _

</llo_original>
